<compile_context>
chip_gen: v5e
topology: v5e:2x2
jax: 0.10.0
libtpu: 0.0.40
codegen_flags: <defaults>
</compile_context>

<pallas_src>
import functools

import jax
import jax.numpy as jnp
from jax.experimental import pallas as pl
from jax.experimental.pallas import tpu as pltpu


def _layernorm(v, g, b, eps):
    # Single-pass statistics: var = E[x^2] - mean^2 (one XLU reduce pair).
    mu = jnp.mean(v, axis=-1, keepdims=True)
    ms = jnp.mean(v * v, axis=-1, keepdims=True)
    var = jnp.maximum(ms - mu * mu, 0.0)
    return (v - mu) * jax.lax.rsqrt(var + eps) * g + b


def vit_layer_kernel(patches_ref, patch_w_ref, evecs_ref, lvecs_ref,
                     wqkv_ref, bqkv_ref, wo_ref, w1_ref, b1_ref, w2_ref,
                     o_ref, x_ref, *, batch, seq, seq_pad, num_heads, eps):
    """One grid step == one encoder layer.  x_ref is the persistent activation.

    patches : (B*Sp, Kp)  bf16   zero rows at cls / pad positions
    patch_w : (Kp, H)     bf16
    evecs   : (Sp+8, H)   f32    rows [0:Sp] = additive slab (cls+pos0,
                                 patch_bias+pos, 0-pad), row Sp = final LN gamma,
                                 row Sp+1 = final LN beta
    lvecs   : (1, 8, H)   f32    [ln1_g, ln1_b, ln2_g, ln2_b, attn_out_b, mlp_out_b, 0, 0]
    wqkv    : (1, H, 3H)  bf16   columns = [Wq | Wk | Wv], head-major inside each
    bqkv    : (1, 1, 3H)  f32
    wo      : (1, H, H)   bf16   unsplit output projection
    w1/b1   : (1, H, I) bf16 / (1, 1, I) f32
    w2      : (1, I, H)   bf16
    out     : (B, H)      f32    final-LN CLS embedding
    x_ref   : (B*Sp, H)   f32    VMEM scratch, persists across layers
    """
    l = pl.program_id(0)
    num_layers = pl.num_programs(0)
    BSp, H = x_ref.shape
    Sp = seq_pad
    hd = H // num_heads
    scale = 1.0 / (hd ** 0.5)
    inv_sqrt2 = 0.7071067811865476

    # ---- layer-0 setup: patch embedding + cls/pos, all batches at once ----
    @pl.when(l == 0)
    def _setup():
        emb = jnp.dot(patches_ref[...], patch_w_ref[...],
                      preferred_element_type=jnp.float32)            # (B*Sp, H)
        add = evecs_ref[0:Sp, :]                                     # (Sp, H)
        x_ref[...] = (emb.reshape(batch, Sp, H) + add[None]).reshape(BSp, H)

    ln1_g = lvecs_ref[0, 0:1, :]
    ln1_b = lvecs_ref[0, 1:2, :]
    ln2_g = lvecs_ref[0, 2:3, :]
    ln2_b = lvecs_ref[0, 3:4, :]
    bo = lvecs_ref[0, 4:5, :]
    b2 = lvecs_ref[0, 5:6, :]

    x = x_ref[...]                                                   # (B*Sp, H) f32

    # ---- MHSA (pre-LN), full-width QKV matmul over all B*Sp rows ----
    wqkv = wqkv_ref[0]                                               # (H, 3H) bf16
    h1 = _layernorm(x, ln1_g, ln1_b, eps)
    qkv = jnp.dot(h1.astype(wqkv.dtype), wqkv,
                  preferred_element_type=jnp.float32) + bqkv_ref[0]  # (B*Sp, 3H)
    q3 = qkv[:, 0 * H:1 * H].reshape(batch, Sp, H)
    k3 = qkv[:, 1 * H:2 * H].reshape(batch, Sp, H)
    v3 = qkv[:, 2 * H:3 * H].reshape(batch, Sp, H)

    # mask the padded key positions (rows seq..Sp-1)
    kmask = jax.lax.broadcasted_iota(jnp.int32, (1, 1, Sp), 2) < seq

    ctx_heads = []
    for h in range(num_heads):                    # per-head scores, batched over B
        cs = slice(h * hd, (h + 1) * hd)
        qh, kh, vh = q3[:, :, cs], k3[:, :, cs], v3[:, :, cs]
        s = jnp.einsum("bqd,bkd->bqk", qh, kh,
                       preferred_element_type=jnp.float32) * scale   # (B, Sp, Sp)
        s = jnp.where(kmask, s, -1e30)
        s = s - jnp.max(s, axis=-1, keepdims=True)
        pr = jnp.exp(s)
        pr = pr * pl.reciprocal(jnp.sum(pr, axis=-1, keepdims=True), approx=True)
        ctx_heads.append(jnp.einsum("bqk,bkd->bqd", pr, vh,
                                    preferred_element_type=jnp.float32))
    # head-major concat -> (B*Sp, H); ONE output-projection matmul with K=256
    ctx = jnp.concatenate(ctx_heads, axis=-1).reshape(BSp, H)
    wo = wo_ref[0]                                                   # (H, H) bf16
    attn = jnp.dot(ctx.astype(wo.dtype), wo,
                   preferred_element_type=jnp.float32) + bo
    x = x + attn                                                     # residual

    # ---- MLP (pre-LN, exact erf-GELU) ----
    w1 = w1_ref[0]
    w2 = w2_ref[0]
    h2 = _layernorm(x, ln2_g, ln2_b, eps)
    m = jnp.dot(h2.astype(w1.dtype), w1,
                preferred_element_type=jnp.float32) + b1_ref[0]      # (B*Sp, I)
    m = 0.5 * m * (1.0 + jax.lax.erf(m * inv_sqrt2))
    m = jnp.dot(m.astype(w2.dtype), w2,
                preferred_element_type=jnp.float32) + b2
    x = x + m                                                        # residual

    x_ref[...] = x

    # ---- final ViTModel layernorm, CLS rows only ----
    @pl.when(l == num_layers - 1)
    def _final():
        g = evecs_ref[Sp:Sp + 1, :]
        bb = evecs_ref[Sp + 1:Sp + 2, :]
        cls = jnp.concatenate([x[b * Sp:b * Sp + 1, :] for b in range(batch)],
                              axis=0)                                # (B, H)
        o_ref[...] = _layernorm(cls, g, bb, eps).astype(o_ref.dtype)


# ----------------------------------------------------------------------------
# Wrapper
# ----------------------------------------------------------------------------
def build_patch_rows(x, p, seq_pad, k_pad):
    """Conv2d(kernel=p, stride=p) unfolding, laid out into (B*Sp, Kp) with the
    cls row (index 0 of each batch block) and pad rows/columns set to zero."""
    B, C, Hh, Ww = x.shape
    gh, gw = Hh // p, Ww // p
    N = gh * gw
    k_raw = C * p * p
    pt = x.reshape(B, C, gh, p, gw, p).transpose(0, 2, 4, 1, 3, 5)
    pt = pt.reshape(B, N, k_raw)
    rows = jnp.zeros((B, seq_pad, k_pad), jnp.float32)
    rows = rows.at[:, 1:1 + N, :k_raw].set(pt)
    return rows.reshape(B * seq_pad, k_pad).astype(jnp.bfloat16)


def heatmap_vit_forward(x, params, cfg):
    B = x.shape[0]
    H, I, L = cfg["hidden"], cfg["inter"], cfg["layers"]
    heads = cfg["heads"]
    p = cfg["patch_size"]
    N = (cfg["image_size"] // p) ** 2
    S = N + 1
    Sp = max(8, -(-S // 8) * 8)
    k_raw = cfg["channels"] * p * p
    Kp = max(128, -(-k_raw // 128) * 128)

    patches = build_patch_rows(x, p, Sp, Kp)          # (B*Sp, Kp) bf16
    ev_rows = params["evecs"].shape[0]

    kern = functools.partial(vit_layer_kernel, batch=B, seq=S, seq_pad=Sp,
                             num_heads=heads, eps=cfg["eps"])

    def nbytes(a):
        return int(a.size) * a.dtype.itemsize

    flops = (2 * B * Sp * Kp * H
             + L * (2 * B * Sp * (3 * H * H)          # QKV
                    + 2 * B * heads * Sp * Sp * 2 * (H // heads)  # scores+ctx
                    + 2 * B * Sp * H * H              # out proj
                    + 2 * B * Sp * 2 * H * I))        # MLP
    transcendentals = L * (B * Sp * I + B * heads * Sp * Sp)
    bytes_accessed = (sum(nbytes(v) for v in params.values())
                      + nbytes(patches) + B * H * 4)

    grid_spec = pltpu.PrefetchScalarGridSpec(
        num_scalar_prefetch=0,
        grid=(L,),
        in_specs=[
            pl.BlockSpec((B * Sp, Kp), lambda l: (0, 0)),        # patches (fetched once)
            pl.BlockSpec((Kp, H), lambda l: (0, 0)),             # patch_w
            pl.BlockSpec((ev_rows, H), lambda l: (0, 0)),        # evecs
            pl.BlockSpec((1, 8, H), lambda l: (l, 0, 0)),        # lvecs
            pl.BlockSpec((1, H, 3 * H), lambda l: (l, 0, 0)),    # wqkv
            pl.BlockSpec((1, 1, 3 * H), lambda l: (l, 0, 0)),    # bqkv
            pl.BlockSpec((1, H, H), lambda l: (l, 0, 0)),        # wo
            pl.BlockSpec((1, H, I), lambda l: (l, 0, 0)),        # w1
            pl.BlockSpec((1, 1, I), lambda l: (l, 0, 0)),        # b1
            pl.BlockSpec((1, I, H), lambda l: (l, 0, 0)),        # w2
        ],
        out_specs=pl.BlockSpec((B, H), lambda l: (0, 0)),
        scratch_shapes=[pltpu.VMEM((B * Sp, H), jnp.float32)],   # resident activations
    )

    return pl.pallas_call(
        kern,
        out_shape=jax.ShapeDtypeStruct((B, H), jnp.float32),
        grid_spec=grid_spec,
        compiler_params=pltpu.CompilerParams(
            dimension_semantics=("arbitrary",),
            vmem_limit_bytes=32 * 1024 * 1024),
        cost_estimate=pl.CostEstimate(flops=int(flops),
                                      transcendentals=int(transcendentals),
                                      bytes_accessed=int(bytes_accessed)),
    )(patches, params["patch_w"], params["evecs"], params["lvecs"],
      params["wqkv"], params["bqkv"], params["wo"],
      params["w1"], params["b1"], params["w2"])


# ----------------------------------------------------------------------------
# Deterministic synthetic parameters in the packed layout the kernel consumes.
# Real PyTorch checkpoints store nn.Linear as (out,in); transpose when importing.
# ----------------------------------------------------------------------------
def init_params(key, cfg):
    H, I, C, p = cfg["hidden"], cfg["inter"], cfg["channels"], cfg["patch_size"]
    heads, L = cfg["heads"], cfg["layers"]
    N = (cfg["image_size"] // p) ** 2
    S = N + 1
    Sp = max(8, -(-S // 8) * 8)
    k_raw = C * p * p
    Kp = max(128, -(-k_raw // 128) * 128)

    keys = iter(jax.random.split(key, 4 + 12 * L))

    def nrm(shape, scale=0.02):
        return (scale * jax.random.normal(next(keys), shape)).astype(jnp.float32)

    patch_w = jnp.zeros((Kp, H), jnp.float32).at[:k_raw].set(nrm((k_raw, H)))
    patch_b = nrm((1, H))
    cls = nrm((1, H))
    pos = nrm((S, H))

    # additive slab: row0 = cls + pos0, rows 1..N = patch_bias + pos, pad rows 0
    add = jnp.zeros((Sp, H), jnp.float32)
    add = add.at[0].set((cls + pos[0:1])[0])
    add = add.at[1:1 + N].set(patch_b + pos[1:1 + N])
    evecs = jnp.zeros((Sp + 8, H), jnp.float32)
    evecs = evecs.at[0:Sp].set(add)
    evecs = evecs.at[Sp].set(jnp.ones((H,), jnp.float32))    # final LN gamma
    evecs = evecs.at[Sp + 1].set(jnp.zeros((H,), jnp.float32))  # final LN beta

    ones, zeros = jnp.ones((1, H), jnp.float32), jnp.zeros((1, H), jnp.float32)
    lvecs, wqkv, bqkv, wo, w1, b1, w2 = [], [], [], [], [], [], []
    for _ in range(L):
        wq, wk, wv = nrm((H, H)), nrm((H, H)), nrm((H, H))
        bq, bk, bv = nrm((1, H)), nrm((1, H)), nrm((1, H))
        wo_l, bo = nrm((H, H)), nrm((1, H))
        w1_l, b1_l = nrm((H, I)), nrm((1, I))
        w2_l, b2_l = nrm((I, H)), nrm((1, H))

        wqkv.append(jnp.concatenate([wq, wk, wv], axis=1).astype(jnp.bfloat16))
        bqkv.append(jnp.concatenate([bq, bk, bv], axis=1)[None])   # (1,1,3H) f32
        wo.append(wo_l.astype(jnp.bfloat16))
        w1.append(w1_l.astype(jnp.bfloat16))
        b1.append(b1_l[None])                                      # (1,1,I) f32
        w2.append(w2_l.astype(jnp.bfloat16))
        lvecs.append(jnp.concatenate(
            [ones, zeros, ones, zeros, bo, b2_l, jnp.zeros((2, H), jnp.float32)],
            axis=0))                                                # (8,H) f32

    return {
        "patch_w": patch_w.astype(jnp.bfloat16),
        "evecs": evecs,
        "lvecs": jnp.stack(lvecs),
        "wqkv": jnp.stack(wqkv),
        "bqkv": jnp.concatenate(bqkv, axis=0),
        "wo": jnp.stack(wo),
        "w1": jnp.stack(w1),
        "b1": jnp.concatenate(b1, axis=0),
        "w2": jnp.stack(w2),
    }


if __name__ == "__main__":
    cfg = dict(image_size=16, patch_size=8, channels=3, hidden=256, heads=8,
               inter=1024, layers=2, eps=1e-12, num_classes=10)

    key = jax.random.PRNGKey(0)
    kx, kp = jax.random.split(key)
    x = jax.random.normal(kx, (2, cfg["channels"], cfg["image_size"],
                               cfg["image_size"]), dtype=jnp.float32)
    params = init_params(kp, cfg)

    out = heatmap_vit_forward(x, params, cfg)
    out = jax.block_until_ready(out)
    assert out.shape == (2, cfg["hidden"]), out.shape
    assert bool(jnp.all(jnp.isfinite(out)))
    print("KERNEL_OK")
</pallas_src>

<mosaic_0001>
module attributes {stable_mosaic.version = 11 : i64} {
  func.func @vit_layer_kernel(%arg0: i32, %arg1: memref<16x256xbf16, #tpu.memory_space<vmem>>, %arg2: memref<256x256xbf16, #tpu.memory_space<vmem>>, %arg3: memref<16x256xf32, #tpu.memory_space<vmem>>, %arg4: memref<1x8x256xf32, #tpu.memory_space<vmem>>, %arg5: memref<1x256x768xbf16, #tpu.memory_space<vmem>>, %arg6: memref<1x1x768xf32, #tpu.memory_space<vmem>>, %arg7: memref<1x256x256xbf16, #tpu.memory_space<vmem>>, %arg8: memref<1x256x1024xbf16, #tpu.memory_space<vmem>>, %arg9: memref<1x1x1024xf32, #tpu.memory_space<vmem>>, %arg10: memref<1x1024x256xbf16, #tpu.memory_space<vmem>>, %arg11: memref<2x256xf32, #tpu.memory_space<vmem>>, %arg12: memref<16x256xf32, #tpu.memory_space<vmem>>) attributes {dimension_semantics = [#tpu.dimension_semantics<arbitrary>], iteration_bounds = array<i64: 2>, scalar_prefetch = 0 : i64, scratch_operands = 1 : i64, tpu.core_type = #tpu.core_type<tc>, window_params = [{pipeline_mode = #tpu.pipeline_mode<synchronous>, transform_indices = @transform_0, window_bounds = array<i64: 16, 256>}, {pipeline_mode = #tpu.pipeline_mode<synchronous>, transform_indices = @transform_1, window_bounds = array<i64: 256, 256>}, {pipeline_mode = #tpu.pipeline_mode<synchronous>, transform_indices = @transform_2, window_bounds = array<i64: 16, 256>}, {transform_indices = @transform_3, window_bounds = array<i64: 1, 8, 256>}, {transform_indices = @transform_4, window_bounds = array<i64: 1, 256, 768>}, {transform_indices = @transform_5, window_bounds = array<i64: 1, 1, 768>}, {transform_indices = @transform_6, window_bounds = array<i64: 1, 256, 256>}, {transform_indices = @transform_7, window_bounds = array<i64: 1, 256, 1024>}, {transform_indices = @transform_8, window_bounds = array<i64: 1, 1, 1024>}, {transform_indices = @transform_9, window_bounds = array<i64: 1, 1024, 256>}, {pipeline_mode = #tpu.pipeline_mode<synchronous>, transform_indices = @transform_10, window_bounds = array<i64: 2, 256>}]} {
    %c0_i32 = arith.constant 0 : i32
    %0 = arith.cmpi eq, %arg0, %c0_i32 : i32
    %1 = arith.extui %0 : i1 to i32
    %c0_i32_0 = arith.constant 0 : i32
    %2 = arith.cmpi ne, %1, %c0_i32_0 : i32
    scf.if %2 {
      %c0_102 = arith.constant 0 : index
      %c0_103 = arith.constant 0 : index
      %285 = vector.load %arg1[%c0_102, %c0_103] : memref<16x256xbf16, #tpu.memory_space<vmem>>, vector<16x256xbf16>
      %c0_104 = arith.constant 0 : index
      %c0_105 = arith.constant 0 : index
      %286 = vector.load %arg2[%c0_104, %c0_105] : memref<256x256xbf16, #tpu.memory_space<vmem>>, vector<256x256xbf16>
      %cst_106 = arith.constant dense<0.000000e+00> : vector<16x256xf32>
      %287 = tpu.matmul %285, %286, %cst_106 {dimension_numbers = #tpu.dot_dimension_numbers<[1], [0], [0], [1], [0, 0, 1, 1], [], []>} : vector<16x256xbf16>, vector<256x256xbf16>, vector<16x256xf32> -> vector<16x256xf32>
      %c0_107 = arith.constant 0 : index
      %c0_108 = arith.constant 0 : index
      %288 = vector.load %arg3[%c0_107, %c0_108] : memref<16x256xf32, #tpu.memory_space<vmem>>, vector<8x256xf32>
      %289 = vector.shape_cast %287 : vector<16x256xf32> to vector<2x8x256xf32>
      %290 = vector.shape_cast %288 : vector<8x256xf32> to vector<1x8x256xf32>
      %291 = vector.broadcast %290 : vector<1x8x256xf32> to vector<2x8x256xf32>
      %292 = arith.addf %289, %291 : vector<2x8x256xf32>
      %293 = vector.shape_cast %292 : vector<2x8x256xf32> to vector<16x256xf32>
      %c0_109 = arith.constant 0 : index
      %c0_110 = arith.constant 0 : index
      %294 = vector.load %arg12[%c0_109, %c0_110] : memref<16x256xf32, #tpu.memory_space<vmem>>, vector<16x256xf32>
      tpu.vector_store %arg12[%c0_109, %c0_110], %293 {strides = array<i32>} : memref<16x256xf32, #tpu.memory_space<vmem>>, vector<16x256xf32>,
    } else {
    }
    %c0 = arith.constant 0 : index
    %c0_1 = arith.constant 0 : index
    %c0_2 = arith.constant 0 : index
    %3 = vector.load %arg4[%c0, %c0_1, %c0_2] : memref<1x8x256xf32, #tpu.memory_space<vmem>>, vector<1x1x256xf32>
    %4 = vector.shape_cast %3 : vector<1x1x256xf32> to vector<1x256xf32>
    %c0_3 = arith.constant 0 : index
    %c1 = arith.constant 1 : index
    %c0_4 = arith.constant 0 : index
    %5 = vector.load %arg4[%c0_3, %c1, %c0_4] : memref<1x8x256xf32, #tpu.memory_space<vmem>>, vector<1x1x256xf32>
    %6 = vector.shape_cast %5 : vector<1x1x256xf32> to vector<1x256xf32>
    %c0_5 = arith.constant 0 : index
    %c2 = arith.constant 2 : index
    %c0_6 = arith.constant 0 : index
    %7 = vector.load %arg4[%c0_5, %c2, %c0_6] : memref<1x8x256xf32, #tpu.memory_space<vmem>>, vector<1x1x256xf32>
    %8 = vector.shape_cast %7 : vector<1x1x256xf32> to vector<1x256xf32>
    %c0_7 = arith.constant 0 : index
    %c3 = arith.constant 3 : index
    %c0_8 = arith.constant 0 : index
    %9 = vector.load %arg4[%c0_7, %c3, %c0_8] : memref<1x8x256xf32, #tpu.memory_space<vmem>>, vector<1x1x256xf32>
    %10 = vector.shape_cast %9 : vector<1x1x256xf32> to vector<1x256xf32>
    %c0_9 = arith.constant 0 : index
    %c4 = arith.constant 4 : index
    %c0_10 = arith.constant 0 : index
    %11 = vector.load %arg4[%c0_9, %c4, %c0_10] : memref<1x8x256xf32, #tpu.memory_space<vmem>>, vector<1x1x256xf32>
    %12 = vector.shape_cast %11 : vector<1x1x256xf32> to vector<1x256xf32>
    %c0_11 = arith.constant 0 : index
    %c5 = arith.constant 5 : index
    %c0_12 = arith.constant 0 : index
    %13 = vector.load %arg4[%c0_11, %c5, %c0_12] : memref<1x8x256xf32, #tpu.memory_space<vmem>>, vector<1x1x256xf32>
    %14 = vector.shape_cast %13 : vector<1x1x256xf32> to vector<1x256xf32>
    %c0_13 = arith.constant 0 : index
    %c0_14 = arith.constant 0 : index
    %15 = vector.load %arg12[%c0_13, %c0_14] : memref<16x256xf32, #tpu.memory_space<vmem>>, vector<16x256xf32>
    %c0_15 = arith.constant 0 : index
    %c0_16 = arith.constant 0 : index
    %c0_17 = arith.constant 0 : index
    %16 = vector.load %arg5[%c0_15, %c0_16, %c0_17] : memref<1x256x768xbf16, #tpu.memory_space<vmem>>, vector<1x256x768xbf16>
    %17 = vector.shape_cast %16 : vector<1x256x768xbf16> to vector<256x768xbf16>
    %cst = arith.constant dense<0.000000e+00> : vector<16xf32>
    %18 = vector.multi_reduction <add>, %15, %cst [1] : vector<16x256xf32> to vector<16xf32>
    %19 = vector.shape_cast %18 : vector<16xf32> to vector<16x1xf32>
    %cst_18 = arith.constant 2.560000e+02 : f32
    %20 = vector.broadcast %cst_18 : f32 to vector<16x1xf32>
    %21 = arith.divf %19, %20 : vector<16x1xf32>
    %22 = arith.mulf %15, %15 : vector<16x256xf32>
    %cst_19 = arith.constant dense<0.000000e+00> : vector<16xf32>
    %23 = vector.multi_reduction <add>, %22, %cst_19 [1] : vector<16x256xf32> to vector<16xf32>
    %24 = vector.shape_cast %23 : vector<16xf32> to vector<16x1xf32>
    %cst_20 = arith.constant 2.560000e+02 : f32
    %25 = vector.broadcast %cst_20 : f32 to vector<16x1xf32>
    %26 = arith.divf %24, %25 : vector<16x1xf32>
    %27 = arith.mulf %21, %21 : vector<16x1xf32>
    %28 = arith.subf %26, %27 : vector<16x1xf32>
    %cst_21 = arith.constant 0.000000e+00 : f32
    %29 = vector.broadcast %cst_21 : f32 to vector<16x1xf32>
    %30 = arith.maximumf %28, %29 : vector<16x1xf32>
    %31 = vector.broadcast %21 : vector<16x1xf32> to vector<16x256xf32>
    %32 = arith.subf %15, %31 : vector<16x256xf32>
    %cst_22 = arith.constant 9.99999996E-13 : f32
    %33 = vector.broadcast %cst_22 : f32 to vector<16x1xf32>
    %34 = arith.addf %30, %33 : vector<16x1xf32>
    %35 = math.rsqrt %34 : vector<16x1xf32>
    %36 = vector.broadcast %35 : vector<16x1xf32> to vector<16x256xf32>
    %37 = arith.mulf %32, %36 : vector<16x256xf32>
    %38 = vector.broadcast %4 : vector<1x256xf32> to vector<16x256xf32>
    %39 = arith.mulf %37, %38 : vector<16x256xf32>
    %40 = vector.broadcast %6 : vector<1x256xf32> to vector<16x256xf32>
    %41 = arith.addf %39, %40 : vector<16x256xf32>
    %42 = arith.truncf %41 : vector<16x256xf32> to vector<16x256xbf16>
    %cst_23 = arith.constant dense<0.000000e+00> : vector<16x768xf32>
    %43 = tpu.matmul %42, %17, %cst_23 {dimension_numbers = #tpu.dot_dimension_numbers<[1], [0], [0], [1], [0, 0, 1, 1], [], []>} : vector<16x256xbf16>, vector<256x768xbf16>, vector<16x768xf32> -> vector<16x768xf32>
    %c0_24 = arith.constant 0 : index
    %c0_25 = arith.constant 0 : index
    %c0_26 = arith.constant 0 : index
    %44 = vector.load %arg6[%c0_24, %c0_25, %c0_26] : memref<1x1x768xf32, #tpu.memory_space<vmem>>, vector<1x1x768xf32>
    %45 = vector.shape_cast %44 : vector<1x1x768xf32> to vector<1x768xf32>
    %46 = vector.broadcast %45 : vector<1x768xf32> to vector<16x768xf32>
    %47 = arith.addf %43, %46 : vector<16x768xf32>
    %48 = vector.extract_strided_slice %47 {offsets = [0, 0], sizes = [16, 256], strides = [1, 1]} : vector<16x768xf32> to vector<16x256xf32>
    %49 = vector.shape_cast %48 : vector<16x256xf32> to vector<2x8x256xf32>
    %50 = vector.extract_strided_slice %47 {offsets = [0, 256], sizes = [16, 256], strides = [1, 1]} : vector<16x768xf32> to vector<16x256xf32>
    %51 = vector.shape_cast %50 : vector<16x256xf32> to vector<2x8x256xf32>
    %52 = vector.extract_strided_slice %47 {offsets = [0, 512], sizes = [16, 256], strides = [1, 1]} : vector<16x768xf32> to vector<16x256xf32>
    %53 = vector.shape_cast %52 : vector<16x256xf32> to vector<2x8x256xf32>
    %54 = tpu.iota {dimensions = array<i32: 2>} : vector<1x1x8xi32>
    %c5_i32 = arith.constant 5 : i32
    %55 = vector.broadcast %c5_i32 : i32 to vector<1x1x8xi32>
    %56 = arith.cmpi slt, %54, %55 : vector<1x1x8xi32>
    %57 = vector.extract_strided_slice %49 {offsets = [0, 0, 0], sizes = [2, 8, 32], strides = [1, 1, 1]} : vector<2x8x256xf32> to vector<2x8x32xf32>
    %58 = vector.extract_strided_slice %51 {offsets = [0, 0, 0], sizes = [2, 8, 32], strides = [1, 1, 1]} : vector<2x8x256xf32> to vector<2x8x32xf32>
    %59 = vector.extract_strided_slice %53 {offsets = [0, 0, 0], sizes = [2, 8, 32], strides = [1, 1, 1]} : vector<2x8x256xf32> to vector<2x8x32xf32>
    "tpu.trace_start"() <{level = 10 : i32, message = "bqd,bkd->bqk"}> : () -> ()
    %cst_27 = arith.constant dense<0.000000e+00> : vector<2x8x8xf32>
    %60 = tpu.matmul %57, %58, %cst_27 {dimension_numbers = #tpu.dot_dimension_numbers<[2], [2], [1], [1], [0, 0, 0, 1, 1, 1], [0], [0]>} : vector<2x8x32xf32>, vector<2x8x32xf32>, vector<2x8x8xf32> -> vector<2x8x8xf32>
    "tpu.trace_stop"() : () -> ()
    %cst_28 = arith.constant 0.176776692 : f32
    %61 = vector.broadcast %cst_28 : f32 to vector<2x8x8xf32>
    %62 = arith.mulf %60, %61 : vector<2x8x8xf32>
    %cst_29 = arith.constant -1.000000e+30 : f32
    %63 = vector.shape_cast %56 : vector<1x1x8xi1> to vector<1x1x8xi1>
    %64 = vector.broadcast %63 : vector<1x1x8xi1> to vector<2x8x8xi1>
    %65 = vector.broadcast %cst_29 : f32 to vector<2x8x8xf32>
    %66 = arith.select %64, %62, %65 : vector<2x8x8xi1>, vector<2x8x8xf32>
    %cst_30 = arith.constant dense<0xFF800000> : vector<2x8xf32>
    %67 = vector.multi_reduction <maximumf>, %66, %cst_30 [2] : vector<2x8x8xf32> to vector<2x8xf32>
    %68 = vector.shape_cast %67 : vector<2x8xf32> to vector<2x8x1xf32>
    %69 = vector.broadcast %68 : vector<2x8x1xf32> to vector<2x8x8xf32>
    %70 = arith.subf %66, %69 : vector<2x8x8xf32>
    %71 = math.exp %70 : vector<2x8x8xf32>
    %cst_31 = arith.constant dense<0.000000e+00> : vector<2x8xf32>
    %72 = vector.multi_reduction <add>, %71, %cst_31 [2] : vector<2x8x8xf32> to vector<2x8xf32>
    %73 = vector.shape_cast %72 : vector<2x8xf32> to vector<2x8x1xf32>
    %74 = tpu.reciprocal %73 {approx = true} : vector<2x8x1xf32> -> vector<2x8x1xf32>
    %75 = vector.broadcast %74 : vector<2x8x1xf32> to vector<2x8x8xf32>
    %76 = arith.mulf %71, %75 : vector<2x8x8xf32>
    "tpu.trace_start"() <{level = 10 : i32, message = "bqk,bkd->bqd"}> : () -> ()
    %cst_32 = arith.constant dense<0.000000e+00> : vector<2x8x32xf32>
    %77 = tpu.matmul %76, %59, %cst_32 {dimension_numbers = #tpu.dot_dimension_numbers<[2], [1], [1], [2], [0, 0, 0, 1, 1, 2], [0], [0]>} : vector<2x8x8xf32>, vector<2x8x32xf32>, vector<2x8x32xf32> -> vector<2x8x32xf32>
    "tpu.trace_stop"() : () -> ()
    %78 = vector.extract_strided_slice %49 {offsets = [0, 0, 32], sizes = [2, 8, 32], strides = [1, 1, 1]} : vector<2x8x256xf32> to vector<2x8x32xf32>
    %79 = vector.extract_strided_slice %51 {offsets = [0, 0, 32], sizes = [2, 8, 32], strides = [1, 1, 1]} : vector<2x8x256xf32> to vector<2x8x32xf32>
    %80 = vector.extract_strided_slice %53 {offsets = [0, 0, 32], sizes = [2, 8, 32], strides = [1, 1, 1]} : vector<2x8x256xf32> to vector<2x8x32xf32>
    "tpu.trace_start"() <{level = 10 : i32, message = "bqd,bkd->bqk"}> : () -> ()
    %cst_33 = arith.constant dense<0.000000e+00> : vector<2x8x8xf32>
    %81 = tpu.matmul %78, %79, %cst_33 {dimension_numbers = #tpu.dot_dimension_numbers<[2], [2], [1], [1], [0, 0, 0, 1, 1, 1], [0], [0]>} : vector<2x8x32xf32>, vector<2x8x32xf32>, vector<2x8x8xf32> -> vector<2x8x8xf32>
    "tpu.trace_stop"() : () -> ()
    %cst_34 = arith.constant 0.176776692 : f32
    %82 = vector.broadcast %cst_34 : f32 to vector<2x8x8xf32>
    %83 = arith.mulf %81, %82 : vector<2x8x8xf32>
    %cst_35 = arith.constant -1.000000e+30 : f32
    %84 = vector.shape_cast %56 : vector<1x1x8xi1> to vector<1x1x8xi1>
    %85 = vector.broadcast %84 : vector<1x1x8xi1> to vector<2x8x8xi1>
    %86 = vector.broadcast %cst_35 : f32 to vector<2x8x8xf32>
    %87 = arith.select %85, %83, %86 : vector<2x8x8xi1>, vector<2x8x8xf32>
    %cst_36 = arith.constant dense<0xFF800000> : vector<2x8xf32>
    %88 = vector.multi_reduction <maximumf>, %87, %cst_36 [2] : vector<2x8x8xf32> to vector<2x8xf32>
    %89 = vector.shape_cast %88 : vector<2x8xf32> to vector<2x8x1xf32>
    %90 = vector.broadcast %89 : vector<2x8x1xf32> to vector<2x8x8xf32>
    %91 = arith.subf %87, %90 : vector<2x8x8xf32>
    %92 = math.exp %91 : vector<2x8x8xf32>
    %cst_37 = arith.constant dense<0.000000e+00> : vector<2x8xf32>
    %93 = vector.multi_reduction <add>, %92, %cst_37 [2] : vector<2x8x8xf32> to vector<2x8xf32>
    %94 = vector.shape_cast %93 : vector<2x8xf32> to vector<2x8x1xf32>
    %95 = tpu.reciprocal %94 {approx = true} : vector<2x8x1xf32> -> vector<2x8x1xf32>
    %96 = vector.broadcast %95 : vector<2x8x1xf32> to vector<2x8x8xf32>
    %97 = arith.mulf %92, %96 : vector<2x8x8xf32>
    "tpu.trace_start"() <{level = 10 : i32, message = "bqk,bkd->bqd"}> : () -> ()
    %cst_38 = arith.constant dense<0.000000e+00> : vector<2x8x32xf32>
    %98 = tpu.matmul %97, %80, %cst_38 {dimension_numbers = #tpu.dot_dimension_numbers<[2], [1], [1], [2], [0, 0, 0, 1, 1, 2], [0], [0]>} : vector<2x8x8xf32>, vector<2x8x32xf32>, vector<2x8x32xf32> -> vector<2x8x32xf32>
    "tpu.trace_stop"() : () -> ()
    %99 = vector.extract_strided_slice %49 {offsets = [0, 0, 64], sizes = [2, 8, 32], strides = [1, 1, 1]} : vector<2x8x256xf32> to vector<2x8x32xf32>
    %100 = vector.extract_strided_slice %51 {offsets = [0, 0, 64], sizes = [2, 8, 32], strides = [1, 1, 1]} : vector<2x8x256xf32> to vector<2x8x32xf32>
    %101 = vector.extract_strided_slice %53 {offsets = [0, 0, 64], sizes = [2, 8, 32], strides = [1, 1, 1]} : vector<2x8x256xf32> to vector<2x8x32xf32>
    "tpu.trace_start"() <{level = 10 : i32, message = "bqd,bkd->bqk"}> : () -> ()
    %cst_39 = arith.constant dense<0.000000e+00> : vector<2x8x8xf32>
    %102 = tpu.matmul %99, %100, %cst_39 {dimension_numbers = #tpu.dot_dimension_numbers<[2], [2], [1], [1], [0, 0, 0, 1, 1, 1], [0], [0]>} : vector<2x8x32xf32>, vector<2x8x32xf32>, vector<2x8x8xf32> -> vector<2x8x8xf32>
    "tpu.trace_stop"() : () -> ()
    %cst_40 = arith.constant 0.176776692 : f32
    %103 = vector.broadcast %cst_40 : f32 to vector<2x8x8xf32>
    %104 = arith.mulf %102, %103 : vector<2x8x8xf32>
    %cst_41 = arith.constant -1.000000e+30 : f32
    %105 = vector.shape_cast %56 : vector<1x1x8xi1> to vector<1x1x8xi1>
    %106 = vector.broadcast %105 : vector<1x1x8xi1> to vector<2x8x8xi1>
    %107 = vector.broadcast %cst_41 : f32 to vector<2x8x8xf32>
    %108 = arith.select %106, %104, %107 : vector<2x8x8xi1>, vector<2x8x8xf32>
    %cst_42 = arith.constant dense<0xFF800000> : vector<2x8xf32>
    %109 = vector.multi_reduction <maximumf>, %108, %cst_42 [2] : vector<2x8x8xf32> to vector<2x8xf32>
    %110 = vector.shape_cast %109 : vector<2x8xf32> to vector<2x8x1xf32>
    %111 = vector.broadcast %110 : vector<2x8x1xf32> to vector<2x8x8xf32>
    %112 = arith.subf %108, %111 : vector<2x8x8xf32>
    %113 = math.exp %112 : vector<2x8x8xf32>
    %cst_43 = arith.constant dense<0.000000e+00> : vector<2x8xf32>
    %114 = vector.multi_reduction <add>, %113, %cst_43 [2] : vector<2x8x8xf32> to vector<2x8xf32>
    %115 = vector.shape_cast %114 : vector<2x8xf32> to vector<2x8x1xf32>
    %116 = tpu.reciprocal %115 {approx = true} : vector<2x8x1xf32> -> vector<2x8x1xf32>
    %117 = vector.broadcast %116 : vector<2x8x1xf32> to vector<2x8x8xf32>
    %118 = arith.mulf %113, %117 : vector<2x8x8xf32>
    "tpu.trace_start"() <{level = 10 : i32, message = "bqk,bkd->bqd"}> : () -> ()
    %cst_44 = arith.constant dense<0.000000e+00> : vector<2x8x32xf32>
    %119 = tpu.matmul %118, %101, %cst_44 {dimension_numbers = #tpu.dot_dimension_numbers<[2], [1], [1], [2], [0, 0, 0, 1, 1, 2], [0], [0]>} : vector<2x8x8xf32>, vector<2x8x32xf32>, vector<2x8x32xf32> -> vector<2x8x32xf32>
    "tpu.trace_stop"() : () -> ()
    %120 = vector.extract_strided_slice %49 {offsets = [0, 0, 96], sizes = [2, 8, 32], strides = [1, 1, 1]} : vector<2x8x256xf32> to vector<2x8x32xf32>
    %121 = vector.extract_strided_slice %51 {offsets = [0, 0, 96], sizes = [2, 8, 32], strides = [1, 1, 1]} : vector<2x8x256xf32> to vector<2x8x32xf32>
    %122 = vector.extract_strided_slice %53 {offsets = [0, 0, 96], sizes = [2, 8, 32], strides = [1, 1, 1]} : vector<2x8x256xf32> to vector<2x8x32xf32>
    "tpu.trace_start"() <{level = 10 : i32, message = "bqd,bkd->bqk"}> : () -> ()
    %cst_45 = arith.constant dense<0.000000e+00> : vector<2x8x8xf32>
    %123 = tpu.matmul %120, %121, %cst_45 {dimension_numbers = #tpu.dot_dimension_numbers<[2], [2], [1], [1], [0, 0, 0, 1, 1, 1], [0], [0]>} : vector<2x8x32xf32>, vector<2x8x32xf32>, vector<2x8x8xf32> -> vector<2x8x8xf32>
    "tpu.trace_stop"() : () -> ()
    %cst_46 = arith.constant 0.176776692 : f32
    %124 = vector.broadcast %cst_46 : f32 to vector<2x8x8xf32>
    %125 = arith.mulf %123, %124 : vector<2x8x8xf32>
    %cst_47 = arith.constant -1.000000e+30 : f32
    %126 = vector.shape_cast %56 : vector<1x1x8xi1> to vector<1x1x8xi1>
    %127 = vector.broadcast %126 : vector<1x1x8xi1> to vector<2x8x8xi1>
    %128 = vector.broadcast %cst_47 : f32 to vector<2x8x8xf32>
    %129 = arith.select %127, %125, %128 : vector<2x8x8xi1>, vector<2x8x8xf32>
    %cst_48 = arith.constant dense<0xFF800000> : vector<2x8xf32>
    %130 = vector.multi_reduction <maximumf>, %129, %cst_48 [2] : vector<2x8x8xf32> to vector<2x8xf32>
    %131 = vector.shape_cast %130 : vector<2x8xf32> to vector<2x8x1xf32>
    %132 = vector.broadcast %131 : vector<2x8x1xf32> to vector<2x8x8xf32>
    %133 = arith.subf %129, %132 : vector<2x8x8xf32>
    %134 = math.exp %133 : vector<2x8x8xf32>
    %cst_49 = arith.constant dense<0.000000e+00> : vector<2x8xf32>
    %135 = vector.multi_reduction <add>, %134, %cst_49 [2] : vector<2x8x8xf32> to vector<2x8xf32>
    %136 = vector.shape_cast %135 : vector<2x8xf32> to vector<2x8x1xf32>
    %137 = tpu.reciprocal %136 {approx = true} : vector<2x8x1xf32> -> vector<2x8x1xf32>
    %138 = vector.broadcast %137 : vector<2x8x1xf32> to vector<2x8x8xf32>
    %139 = arith.mulf %134, %138 : vector<2x8x8xf32>
    "tpu.trace_start"() <{level = 10 : i32, message = "bqk,bkd->bqd"}> : () -> ()
    %cst_50 = arith.constant dense<0.000000e+00> : vector<2x8x32xf32>
    %140 = tpu.matmul %139, %122, %cst_50 {dimension_numbers = #tpu.dot_dimension_numbers<[2], [1], [1], [2], [0, 0, 0, 1, 1, 2], [0], [0]>} : vector<2x8x8xf32>, vector<2x8x32xf32>, vector<2x8x32xf32> -> vector<2x8x32xf32>
    "tpu.trace_stop"() : () -> ()
    %141 = vector.extract_strided_slice %49 {offsets = [0, 0, 128], sizes = [2, 8, 32], strides = [1, 1, 1]} : vector<2x8x256xf32> to vector<2x8x32xf32>
    %142 = vector.extract_strided_slice %51 {offsets = [0, 0, 128], sizes = [2, 8, 32], strides = [1, 1, 1]} : vector<2x8x256xf32> to vector<2x8x32xf32>
    %143 = vector.extract_strided_slice %53 {offsets = [0, 0, 128], sizes = [2, 8, 32], strides = [1, 1, 1]} : vector<2x8x256xf32> to vector<2x8x32xf32>
    "tpu.trace_start"() <{level = 10 : i32, message = "bqd,bkd->bqk"}> : () -> ()
    %cst_51 = arith.constant dense<0.000000e+00> : vector<2x8x8xf32>
    %144 = tpu.matmul %141, %142, %cst_51 {dimension_numbers = #tpu.dot_dimension_numbers<[2], [2], [1], [1], [0, 0, 0, 1, 1, 1], [0], [0]>} : vector<2x8x32xf32>, vector<2x8x32xf32>, vector<2x8x8xf32> -> vector<2x8x8xf32>
    "tpu.trace_stop"() : () -> ()
    %cst_52 = arith.constant 0.176776692 : f32
    %145 = vector.broadcast %cst_52 : f32 to vector<2x8x8xf32>
    %146 = arith.mulf %144, %145 : vector<2x8x8xf32>
    %cst_53 = arith.constant -1.000000e+30 : f32
    %147 = vector.shape_cast %56 : vector<1x1x8xi1> to vector<1x1x8xi1>
    %148 = vector.broadcast %147 : vector<1x1x8xi1> to vector<2x8x8xi1>
    %149 = vector.broadcast %cst_53 : f32 to vector<2x8x8xf32>
    %150 = arith.select %148, %146, %149 : vector<2x8x8xi1>, vector<2x8x8xf32>
    %cst_54 = arith.constant dense<0xFF800000> : vector<2x8xf32>
    %151 = vector.multi_reduction <maximumf>, %150, %cst_54 [2] : vector<2x8x8xf32> to vector<2x8xf32>
    %152 = vector.shape_cast %151 : vector<2x8xf32> to vector<2x8x1xf32>
    %153 = vector.broadcast %152 : vector<2x8x1xf32> to vector<2x8x8xf32>
    %154 = arith.subf %150, %153 : vector<2x8x8xf32>
    %155 = math.exp %154 : vector<2x8x8xf32>
    %cst_55 = arith.constant dense<0.000000e+00> : vector<2x8xf32>
    %156 = vector.multi_reduction <add>, %155, %cst_55 [2] : vector<2x8x8xf32> to vector<2x8xf32>
    %157 = vector.shape_cast %156 : vector<2x8xf32> to vector<2x8x1xf32>
    %158 = tpu.reciprocal %157 {approx = true} : vector<2x8x1xf32> -> vector<2x8x1xf32>
    %159 = vector.broadcast %158 : vector<2x8x1xf32> to vector<2x8x8xf32>
    %160 = arith.mulf %155, %159 : vector<2x8x8xf32>
    "tpu.trace_start"() <{level = 10 : i32, message = "bqk,bkd->bqd"}> : () -> ()
    %cst_56 = arith.constant dense<0.000000e+00> : vector<2x8x32xf32>
    %161 = tpu.matmul %160, %143, %cst_56 {dimension_numbers = #tpu.dot_dimension_numbers<[2], [1], [1], [2], [0, 0, 0, 1, 1, 2], [0], [0]>} : vector<2x8x8xf32>, vector<2x8x32xf32>, vector<2x8x32xf32> -> vector<2x8x32xf32>
    "tpu.trace_stop"() : () -> ()
    %162 = vector.extract_strided_slice %49 {offsets = [0, 0, 160], sizes = [2, 8, 32], strides = [1, 1, 1]} : vector<2x8x256xf32> to vector<2x8x32xf32>
    %163 = vector.extract_strided_slice %51 {offsets = [0, 0, 160], sizes = [2, 8, 32], strides = [1, 1, 1]} : vector<2x8x256xf32> to vector<2x8x32xf32>
    %164 = vector.extract_strided_slice %53 {offsets = [0, 0, 160], sizes = [2, 8, 32], strides = [1, 1, 1]} : vector<2x8x256xf32> to vector<2x8x32xf32>
    "tpu.trace_start"() <{level = 10 : i32, message = "bqd,bkd->bqk"}> : () -> ()
    %cst_57 = arith.constant dense<0.000000e+00> : vector<2x8x8xf32>
    %165 = tpu.matmul %162, %163, %cst_57 {dimension_numbers = #tpu.dot_dimension_numbers<[2], [2], [1], [1], [0, 0, 0, 1, 1, 1], [0], [0]>} : vector<2x8x32xf32>, vector<2x8x32xf32>, vector<2x8x8xf32> -> vector<2x8x8xf32>
    "tpu.trace_stop"() : () -> ()
    %cst_58 = arith.constant 0.176776692 : f32
    %166 = vector.broadcast %cst_58 : f32 to vector<2x8x8xf32>
    %167 = arith.mulf %165, %166 : vector<2x8x8xf32>
    %cst_59 = arith.constant -1.000000e+30 : f32
    %168 = vector.shape_cast %56 : vector<1x1x8xi1> to vector<1x1x8xi1>
    %169 = vector.broadcast %168 : vector<1x1x8xi1> to vector<2x8x8xi1>
    %170 = vector.broadcast %cst_59 : f32 to vector<2x8x8xf32>
    %171 = arith.select %169, %167, %170 : vector<2x8x8xi1>, vector<2x8x8xf32>
    %cst_60 = arith.constant dense<0xFF800000> : vector<2x8xf32>
    %172 = vector.multi_reduction <maximumf>, %171, %cst_60 [2] : vector<2x8x8xf32> to vector<2x8xf32>
    %173 = vector.shape_cast %172 : vector<2x8xf32> to vector<2x8x1xf32>
    %174 = vector.broadcast %173 : vector<2x8x1xf32> to vector<2x8x8xf32>
    %175 = arith.subf %171, %174 : vector<2x8x8xf32>
    %176 = math.exp %175 : vector<2x8x8xf32>
    %cst_61 = arith.constant dense<0.000000e+00> : vector<2x8xf32>
    %177 = vector.multi_reduction <add>, %176, %cst_61 [2] : vector<2x8x8xf32> to vector<2x8xf32>
    %178 = vector.shape_cast %177 : vector<2x8xf32> to vector<2x8x1xf32>
    %179 = tpu.reciprocal %178 {approx = true} : vector<2x8x1xf32> -> vector<2x8x1xf32>
    %180 = vector.broadcast %179 : vector<2x8x1xf32> to vector<2x8x8xf32>
    %181 = arith.mulf %176, %180 : vector<2x8x8xf32>
    "tpu.trace_start"() <{level = 10 : i32, message = "bqk,bkd->bqd"}> : () -> ()
    %cst_62 = arith.constant dense<0.000000e+00> : vector<2x8x32xf32>
    %182 = tpu.matmul %181, %164, %cst_62 {dimension_numbers = #tpu.dot_dimension_numbers<[2], [1], [1], [2], [0, 0, 0, 1, 1, 2], [0], [0]>} : vector<2x8x8xf32>, vector<2x8x32xf32>, vector<2x8x32xf32> -> vector<2x8x32xf32>
    "tpu.trace_stop"() : () -> ()
    %183 = vector.extract_strided_slice %49 {offsets = [0, 0, 192], sizes = [2, 8, 32], strides = [1, 1, 1]} : vector<2x8x256xf32> to vector<2x8x32xf32>
    %184 = vector.extract_strided_slice %51 {offsets = [0, 0, 192], sizes = [2, 8, 32], strides = [1, 1, 1]} : vector<2x8x256xf32> to vector<2x8x32xf32>
    %185 = vector.extract_strided_slice %53 {offsets = [0, 0, 192], sizes = [2, 8, 32], strides = [1, 1, 1]} : vector<2x8x256xf32> to vector<2x8x32xf32>
    "tpu.trace_start"() <{level = 10 : i32, message = "bqd,bkd->bqk"}> : () -> ()
    %cst_63 = arith.constant dense<0.000000e+00> : vector<2x8x8xf32>
    %186 = tpu.matmul %183, %184, %cst_63 {dimension_numbers = #tpu.dot_dimension_numbers<[2], [2], [1], [1], [0, 0, 0, 1, 1, 1], [0], [0]>} : vector<2x8x32xf32>, vector<2x8x32xf32>, vector<2x8x8xf32> -> vector<2x8x8xf32>
    "tpu.trace_stop"() : () -> ()
    %cst_64 = arith.constant 0.176776692 : f32
    %187 = vector.broadcast %cst_64 : f32 to vector<2x8x8xf32>
    %188 = arith.mulf %186, %187 : vector<2x8x8xf32>
    %cst_65 = arith.constant -1.000000e+30 : f32
    %189 = vector.shape_cast %56 : vector<1x1x8xi1> to vector<1x1x8xi1>
    %190 = vector.broadcast %189 : vector<1x1x8xi1> to vector<2x8x8xi1>
    %191 = vector.broadcast %cst_65 : f32 to vector<2x8x8xf32>
    %192 = arith.select %190, %188, %191 : vector<2x8x8xi1>, vector<2x8x8xf32>
    %cst_66 = arith.constant dense<0xFF800000> : vector<2x8xf32>
    %193 = vector.multi_reduction <maximumf>, %192, %cst_66 [2] : vector<2x8x8xf32> to vector<2x8xf32>
    %194 = vector.shape_cast %193 : vector<2x8xf32> to vector<2x8x1xf32>
    %195 = vector.broadcast %194 : vector<2x8x1xf32> to vector<2x8x8xf32>
    %196 = arith.subf %192, %195 : vector<2x8x8xf32>
    %197 = math.exp %196 : vector<2x8x8xf32>
    %cst_67 = arith.constant dense<0.000000e+00> : vector<2x8xf32>
    %198 = vector.multi_reduction <add>, %197, %cst_67 [2] : vector<2x8x8xf32> to vector<2x8xf32>
    %199 = vector.shape_cast %198 : vector<2x8xf32> to vector<2x8x1xf32>
    %200 = tpu.reciprocal %199 {approx = true} : vector<2x8x1xf32> -> vector<2x8x1xf32>
    %201 = vector.broadcast %200 : vector<2x8x1xf32> to vector<2x8x8xf32>
    %202 = arith.mulf %197, %201 : vector<2x8x8xf32>
    "tpu.trace_start"() <{level = 10 : i32, message = "bqk,bkd->bqd"}> : () -> ()
    %cst_68 = arith.constant dense<0.000000e+00> : vector<2x8x32xf32>
    %203 = tpu.matmul %202, %185, %cst_68 {dimension_numbers = #tpu.dot_dimension_numbers<[2], [1], [1], [2], [0, 0, 0, 1, 1, 2], [0], [0]>} : vector<2x8x8xf32>, vector<2x8x32xf32>, vector<2x8x32xf32> -> vector<2x8x32xf32>
    "tpu.trace_stop"() : () -> ()
    %204 = vector.extract_strided_slice %49 {offsets = [0, 0, 224], sizes = [2, 8, 32], strides = [1, 1, 1]} : vector<2x8x256xf32> to vector<2x8x32xf32>
    %205 = vector.extract_strided_slice %51 {offsets = [0, 0, 224], sizes = [2, 8, 32], strides = [1, 1, 1]} : vector<2x8x256xf32> to vector<2x8x32xf32>
    %206 = vector.extract_strided_slice %53 {offsets = [0, 0, 224], sizes = [2, 8, 32], strides = [1, 1, 1]} : vector<2x8x256xf32> to vector<2x8x32xf32>
    "tpu.trace_start"() <{level = 10 : i32, message = "bqd,bkd->bqk"}> : () -> ()
    %cst_69 = arith.constant dense<0.000000e+00> : vector<2x8x8xf32>
    %207 = tpu.matmul %204, %205, %cst_69 {dimension_numbers = #tpu.dot_dimension_numbers<[2], [2], [1], [1], [0, 0, 0, 1, 1, 1], [0], [0]>} : vector<2x8x32xf32>, vector<2x8x32xf32>, vector<2x8x8xf32> -> vector<2x8x8xf32>
    "tpu.trace_stop"() : () -> ()
    %cst_70 = arith.constant 0.176776692 : f32
    %208 = vector.broadcast %cst_70 : f32 to vector<2x8x8xf32>
    %209 = arith.mulf %207, %208 : vector<2x8x8xf32>
    %cst_71 = arith.constant -1.000000e+30 : f32
    %210 = vector.shape_cast %56 : vector<1x1x8xi1> to vector<1x1x8xi1>
    %211 = vector.broadcast %210 : vector<1x1x8xi1> to vector<2x8x8xi1>
    %212 = vector.broadcast %cst_71 : f32 to vector<2x8x8xf32>
    %213 = arith.select %211, %209, %212 : vector<2x8x8xi1>, vector<2x8x8xf32>
    %cst_72 = arith.constant dense<0xFF800000> : vector<2x8xf32>
    %214 = vector.multi_reduction <maximumf>, %213, %cst_72 [2] : vector<2x8x8xf32> to vector<2x8xf32>
    %215 = vector.shape_cast %214 : vector<2x8xf32> to vector<2x8x1xf32>
    %216 = vector.broadcast %215 : vector<2x8x1xf32> to vector<2x8x8xf32>
    %217 = arith.subf %213, %216 : vector<2x8x8xf32>
    %218 = math.exp %217 : vector<2x8x8xf32>
    %cst_73 = arith.constant dense<0.000000e+00> : vector<2x8xf32>
    %219 = vector.multi_reduction <add>, %218, %cst_73 [2] : vector<2x8x8xf32> to vector<2x8xf32>
    %220 = vector.shape_cast %219 : vector<2x8xf32> to vector<2x8x1xf32>
    %221 = tpu.reciprocal %220 {approx = true} : vector<2x8x1xf32> -> vector<2x8x1xf32>
    %222 = vector.broadcast %221 : vector<2x8x1xf32> to vector<2x8x8xf32>
    %223 = arith.mulf %218, %222 : vector<2x8x8xf32>
    "tpu.trace_start"() <{level = 10 : i32, message = "bqk,bkd->bqd"}> : () -> ()
    %cst_74 = arith.constant dense<0.000000e+00> : vector<2x8x32xf32>
    %224 = tpu.matmul %223, %206, %cst_74 {dimension_numbers = #tpu.dot_dimension_numbers<[2], [1], [1], [2], [0, 0, 0, 1, 1, 2], [0], [0]>} : vector<2x8x8xf32>, vector<2x8x32xf32>, vector<2x8x32xf32> -> vector<2x8x32xf32>
    "tpu.trace_stop"() : () -> ()
    %225 = tpu.concatenate %77, %98, %119, %140, %161, %182, %203, %224 in 2 : vector<2x8x32xf32>, vector<2x8x32xf32>, vector<2x8x32xf32>, vector<2x8x32xf32>, vector<2x8x32xf32>, vector<2x8x32xf32>, vector<2x8x32xf32>, vector<2x8x32xf32> -> vector<2x8x256xf32>
    %226 = vector.shape_cast %225 : vector<2x8x256xf32> to vector<16x256xf32>
    %c0_75 = arith.constant 0 : index
    %c0_76 = arith.constant 0 : index
    %c0_77 = arith.constant 0 : index
    %227 = vector.load %arg7[%c0_75, %c0_76, %c0_77] : memref<1x256x256xbf16, #tpu.memory_space<vmem>>, vector<1x256x256xbf16>
    %228 = vector.shape_cast %227 : vector<1x256x256xbf16> to vector<256x256xbf16>
    %229 = arith.truncf %226 : vector<16x256xf32> to vector<16x256xbf16>
    %cst_78 = arith.constant dense<0.000000e+00> : vector<16x256xf32>
    %230 = tpu.matmul %229, %228, %cst_78 {dimension_numbers = #tpu.dot_dimension_numbers<[1], [0], [0], [1], [0, 0, 1, 1], [], []>} : vector<16x256xbf16>, vector<256x256xbf16>, vector<16x256xf32> -> vector<16x256xf32>
    %231 = vector.broadcast %12 : vector<1x256xf32> to vector<16x256xf32>
    %232 = arith.addf %230, %231 : vector<16x256xf32>
    %233 = arith.addf %15, %232 : vector<16x256xf32>
    %c0_79 = arith.constant 0 : index
    %c0_80 = arith.constant 0 : index
    %c0_81 = arith.constant 0 : index
    %234 = vector.load %arg8[%c0_79, %c0_80, %c0_81] : memref<1x256x1024xbf16, #tpu.memory_space<vmem>>, vector<1x256x1024xbf16>
    %235 = vector.shape_cast %234 : vector<1x256x1024xbf16> to vector<256x1024xbf16>
    %c0_82 = arith.constant 0 : index
    %c0_83 = arith.constant 0 : index
    %c0_84 = arith.constant 0 : index
    %236 = vector.load %arg10[%c0_82, %c0_83, %c0_84] : memref<1x1024x256xbf16, #tpu.memory_space<vmem>>, vector<1x1024x256xbf16>
    %237 = vector.shape_cast %236 : vector<1x1024x256xbf16> to vector<1024x256xbf16>
    %cst_85 = arith.constant dense<0.000000e+00> : vector<16xf32>
    %238 = vector.multi_reduction <add>, %233, %cst_85 [1] : vector<16x256xf32> to vector<16xf32>
    %239 = vector.shape_cast %238 : vector<16xf32> to vector<16x1xf32>
    %cst_86 = arith.constant 2.560000e+02 : f32
    %240 = vector.broadcast %cst_86 : f32 to vector<16x1xf32>
    %241 = arith.divf %239, %240 : vector<16x1xf32>
    %242 = arith.mulf %233, %233 : vector<16x256xf32>
    %cst_87 = arith.constant dense<0.000000e+00> : vector<16xf32>
    %243 = vector.multi_reduction <add>, %242, %cst_87 [1] : vector<16x256xf32> to vector<16xf32>
    %244 = vector.shape_cast %243 : vector<16xf32> to vector<16x1xf32>
    %cst_88 = arith.constant 2.560000e+02 : f32
    %245 = vector.broadcast %cst_88 : f32 to vector<16x1xf32>
    %246 = arith.divf %244, %245 : vector<16x1xf32>
    %247 = arith.mulf %241, %241 : vector<16x1xf32>
    %248 = arith.subf %246, %247 : vector<16x1xf32>
    %cst_89 = arith.constant 0.000000e+00 : f32
    %249 = vector.broadcast %cst_89 : f32 to vector<16x1xf32>
    %250 = arith.maximumf %248, %249 : vector<16x1xf32>
    %251 = vector.broadcast %241 : vector<16x1xf32> to vector<16x256xf32>
    %252 = arith.subf %233, %251 : vector<16x256xf32>
    %cst_90 = arith.constant 9.99999996E-13 : f32
    %253 = vector.broadcast %cst_90 : f32 to vector<16x1xf32>
    %254 = arith.addf %250, %253 : vector<16x1xf32>
    %255 = math.rsqrt %254 : vector<16x1xf32>
    %256 = vector.broadcast %255 : vector<16x1xf32> to vector<16x256xf32>
    %257 = arith.mulf %252, %256 : vector<16x256xf32>
    %258 = vector.broadcast %8 : vector<1x256xf32> to vector<16x256xf32>
    %259 = arith.mulf %257, %258 : vector<16x256xf32>
    %260 = vector.broadcast %10 : vector<1x256xf32> to vector<16x256xf32>
    %261 = arith.addf %259, %260 : vector<16x256xf32>
    %262 = arith.truncf %261 : vector<16x256xf32> to vector<16x256xbf16>
    %cst_91 = arith.constant dense<0.000000e+00> : vector<16x1024xf32>
    %263 = tpu.matmul %262, %235, %cst_91 {dimension_numbers = #tpu.dot_dimension_numbers<[1], [0], [0], [1], [0, 0, 1, 1], [], []>} : vector<16x256xbf16>, vector<256x1024xbf16>, vector<16x1024xf32> -> vector<16x1024xf32>
    %c0_92 = arith.constant 0 : index
    %c0_93 = arith.constant 0 : index
    %c0_94 = arith.constant 0 : index
    %264 = vector.load %arg9[%c0_92, %c0_93, %c0_94] : memref<1x1x1024xf32, #tpu.memory_space<vmem>>, vector<1x1x1024xf32>
    %265 = vector.shape_cast %264 : vector<1x1x1024xf32> to vector<1x1024xf32>
    %266 = vector.broadcast %265 : vector<1x1024xf32> to vector<16x1024xf32>
    %267 = arith.addf %263, %266 : vector<16x1024xf32>
    %cst_95 = arith.constant 5.000000e-01 : f32
    %268 = vector.broadcast %cst_95 : f32 to vector<16x1024xf32>
    %269 = arith.mulf %268, %267 : vector<16x1024xf32>
    %cst_96 = arith.constant 0.707106769 : f32
    %270 = vector.broadcast %cst_96 : f32 to vector<16x1024xf32>
    %271 = arith.mulf %267, %270 : vector<16x1024xf32>
    %272 = math.erf %271 : vector<16x1024xf32>
    %cst_97 = arith.constant 1.000000e+00 : f32
    %273 = vector.broadcast %cst_97 : f32 to vector<16x1024xf32>
    %274 = arith.addf %273, %272 : vector<16x1024xf32>
    %275 = arith.mulf %269, %274 : vector<16x1024xf32>
    %276 = arith.truncf %275 : vector<16x1024xf32> to vector<16x1024xbf16>
    %cst_98 = arith.constant dense<0.000000e+00> : vector<16x256xf32>
    %277 = tpu.matmul %276, %237, %cst_98 {dimension_numbers = #tpu.dot_dimension_numbers<[1], [0], [0], [1], [0, 0, 1, 1], [], []>} : vector<16x1024xbf16>, vector<1024x256xbf16>, vector<16x256xf32> -> vector<16x256xf32>
    %278 = vector.broadcast %14 : vector<1x256xf32> to vector<16x256xf32>
    %279 = arith.addf %277, %278 : vector<16x256xf32>
    %280 = arith.addf %233, %279 : vector<16x256xf32>
    %c0_99 = arith.constant 0 : index
    %c0_100 = arith.constant 0 : index
    %281 = vector.load %arg12[%c0_99, %c0_100] : memref<16x256xf32, #tpu.memory_space<vmem>>, vector<16x256xf32>
    tpu.vector_store %arg12[%c0_99, %c0_100], %280 {strides = array<i32>} : memref<16x256xf32, #tpu.memory_space<vmem>>, vector<16x256xf32>,
    %c1_i32 = arith.constant 1 : i32
    %282 = arith.cmpi eq, %arg0, %c1_i32 : i32
    %283 = arith.extui %282 : i1 to i32
    %c0_i32_101 = arith.constant 0 : i32
    %284 = arith.cmpi ne, %283, %c0_i32_101 : i32
    scf.if %284 {
      %c8 = arith.constant 8 : index
      %c0_102 = arith.constant 0 : index
      %285 = vector.load %arg3[%c8, %c0_102] : memref<16x256xf32, #tpu.memory_space<vmem>>, vector<1x256xf32>
      %c9 = arith.constant 9 : index
      %c0_103 = arith.constant 0 : index
      %286 = vector.load %arg3[%c9, %c0_103] : memref<16x256xf32, #tpu.memory_space<vmem>>, vector<1x256xf32>
      %287 = vector.extract_strided_slice %280 {offsets = [0, 0], sizes = [1, 256], strides = [1, 1]} : vector<16x256xf32> to vector<1x256xf32>
      %288 = vector.extract_strided_slice %280 {offsets = [8, 0], sizes = [1, 256], strides = [1, 1]} : vector<16x256xf32> to vector<1x256xf32>
      %289 = tpu.concatenate %287, %288 in 0 : vector<1x256xf32>, vector<1x256xf32> -> vector<2x256xf32>
      %cst_104 = arith.constant dense<0.000000e+00> : vector<2xf32>
      %290 = vector.multi_reduction <add>, %289, %cst_104 [1] : vector<2x256xf32> to vector<2xf32>
      %291 = vector.shape_cast %290 : vector<2xf32> to vector<2x1xf32>
      %cst_105 = arith.constant 2.560000e+02 : f32
      %292 = vector.broadcast %cst_105 : f32 to vector<2x1xf32>
      %293 = arith.divf %291, %292 : vector<2x1xf32>
      %294 = arith.mulf %289, %289 : vector<2x256xf32>
      %cst_106 = arith.constant dense<0.000000e+00> : vector<2xf32>
      %295 = vector.multi_reduction <add>, %294, %cst_106 [1] : vector<2x256xf32> to vector<2xf32>
      %296 = vector.shape_cast %295 : vector<2xf32> to vector<2x1xf32>
      %cst_107 = arith.constant 2.560000e+02 : f32
      %297 = vector.broadcast %cst_107 : f32 to vector<2x1xf32>
      %298 = arith.divf %296, %297 : vector<2x1xf32>
      %299 = arith.mulf %293, %293 : vector<2x1xf32>
      %300 = arith.subf %298, %299 : vector<2x1xf32>
      %cst_108 = arith.constant 0.000000e+00 : f32
      %301 = vector.broadcast %cst_108 : f32 to vector<2x1xf32>
      %302 = arith.maximumf %300, %301 : vector<2x1xf32>
      %303 = vector.broadcast %293 : vector<2x1xf32> to vector<2x256xf32>
      %304 = arith.subf %289, %303 : vector<2x256xf32>
      %cst_109 = arith.constant 9.99999996E-13 : f32
      %305 = vector.broadcast %cst_109 : f32 to vector<2x1xf32>
      %306 = arith.addf %302, %305 : vector<2x1xf32>
      %307 = math.rsqrt %306 : vector<2x1xf32>
      %308 = vector.broadcast %307 : vector<2x1xf32> to vector<2x256xf32>
      %309 = arith.mulf %304, %308 : vector<2x256xf32>
      %310 = vector.broadcast %285 : vector<1x256xf32> to vector<2x256xf32>
      %311 = arith.mulf %309, %310 : vector<2x256xf32>
      %312 = vector.broadcast %286 : vector<1x256xf32> to vector<2x256xf32>
      %313 = arith.addf %311, %312 : vector<2x256xf32>
      %c0_110 = arith.constant 0 : index
      %c0_111 = arith.constant 0 : index
      %314 = vector.load %arg11[%c0_110, %c0_111] : memref<2x256xf32, #tpu.memory_space<vmem>>, vector<2x256xf32>
      tpu.vector_store %arg11[%c0_110, %c0_111], %313 {strides = array<i32>} : memref<2x256xf32, #tpu.memory_space<vmem>>, vector<2x256xf32>,
    } else {
    }
    return
  }
  func.func @transform_0(%arg0: i32) -> (i32, i32) {
    %c0_i32 = arith.constant 0 : i32
    %c0_i32_0 = arith.constant 0 : i32
    %c0_i32_1 = arith.constant 0 : i32
    return %c0_i32, %c0_i32_0 : i32, i32
  }
  func.func @transform_1(%arg0: i32) -> (i32, i32) {
    %c0_i32 = arith.constant 0 : i32
    %c0_i32_0 = arith.constant 0 : i32
    %c0_i32_1 = arith.constant 0 : i32
    return %c0_i32, %c0_i32_0 : i32, i32
  }
  func.func @transform_2(%arg0: i32) -> (i32, i32) {
    %c0_i32 = arith.constant 0 : i32
    %c0_i32_0 = arith.constant 0 : i32
    %c0_i32_1 = arith.constant 0 : i32
    return %c0_i32, %c0_i32_0 : i32, i32
  }
  func.func @transform_3(%arg0: i32) -> (i32, i32, i32) {
    %c0_i32 = arith.constant 0 : i32
    %c0_i32_0 = arith.constant 0 : i32
    %c0_i32_1 = arith.constant 0 : i32
    return %arg0, %c0_i32, %c0_i32_0 : i32, i32, i32
  }
  func.func @transform_4(%arg0: i32) -> (i32, i32, i32) {
    %c0_i32 = arith.constant 0 : i32
    %c0_i32_0 = arith.constant 0 : i32
    %c0_i32_1 = arith.constant 0 : i32
    return %arg0, %c0_i32, %c0_i32_0 : i32, i32, i32
  }
  func.func @transform_5(%arg0: i32) -> (i32, i32, i32) {
    %c0_i32 = arith.constant 0 : i32
    %c0_i32_0 = arith.constant 0 : i32
    %c0_i32_1 = arith.constant 0 : i32
    return %arg0, %c0_i32, %c0_i32_0 : i32, i32, i32
  }
  func.func @transform_6(%arg0: i32) -> (i32, i32, i32) {
    %c0_i32 = arith.constant 0 : i32
    %c0_i32_0 = arith.constant 0 : i32
    %c0_i32_1 = arith.constant 0 : i32
    return %arg0, %c0_i32, %c0_i32_0 : i32, i32, i32
  }
  func.func @transform_7(%arg0: i32) -> (i32, i32, i32) {
    %c0_i32 = arith.constant 0 : i32
    %c0_i32_0 = arith.constant 0 : i32
    %c0_i32_1 = arith.constant 0 : i32
    return %arg0, %c0_i32, %c0_i32_0 : i32, i32, i32
  }
  func.func @transform_8(%arg0: i32) -> (i32, i32, i32) {
    %c0_i32 = arith.constant 0 : i32
    %c0_i32_0 = arith.constant 0 : i32
    %c0_i32_1 = arith.constant 0 : i32
    return %arg0, %c0_i32, %c0_i32_0 : i32, i32, i32
  }
  func.func @transform_9(%arg0: i32) -> (i32, i32, i32) {
    %c0_i32 = arith.constant 0 : i32
    %c0_i32_0 = arith.constant 0 : i32
    %c0_i32_1 = arith.constant 0 : i32
    return %arg0, %c0_i32, %c0_i32_0 : i32, i32, i32
  }
  func.func @transform_10(%arg0: i32) -> (i32, i32) {
    %c0_i32 = arith.constant 0 : i32
    %c0_i32_0 = arith.constant 0 : i32
    %c0_i32_1 = arith.constant 0 : i32
    return %c0_i32, %c0_i32_0 : i32, i32
  }
}

</mosaic_0001>

<llo_original>
// kernel: tpu_custom_call.1
$region0: #{tpu_custom_call.1}
  #allocation0 [shape = 'u32[]', space=smem, size = 0x4, offset = 0x4, fixed_abs, tag = 'smem constant byte address 0x4 - core index']
  #allocation1 [shape = 'u32[72,128]{1,0:T(1,128)}', space=vmem, size = 0x9000, scoped, tag = 'internal scratch']
  #allocation2 [shape = 'f32[16,256]{1,0:T(8,128)}', space=vmem, size = 0x4000, scoped, tag = 'scratch operand']
  %s0 = inlined_call_operand.hbm [shape: bf16[16,256], index: 0, kind: input, shape index: {}]
  %s1 = inlined_call_operand.hbm [shape: bf16[256,256], index: 1, kind: input, shape index: {}]
  %s2 = inlined_call_operand.hbm [shape: f32[16,256], index: 2, kind: input, shape index: {}]
  %s3 = inlined_call_operand.hbm [shape: f32[2,8,256], index: 3, kind: input, shape index: {}]
  %s4 = inlined_call_operand.hbm [shape: bf16[2,256,768], index: 4, kind: input, shape index: {}]
  %s5 = inlined_call_operand.hbm [shape: f32[2,1,768], index: 5, kind: input, shape index: {}]
  %s6 = inlined_call_operand.hbm [shape: bf16[2,256,256], index: 6, kind: input, shape index: {}]
  %s7 = inlined_call_operand.hbm [shape: bf16[2,256,1024], index: 7, kind: input, shape index: {}]
  %s8 = inlined_call_operand.hbm [shape: f32[2,1,1024], index: 8, kind: input, shape index: {}]
  %s9 = inlined_call_operand.hbm [shape: bf16[2,1024,256], index: 9, kind: input, shape index: {}]
  %s10 = inlined_call_operand.hbm [shape: f32[2,256], index: 10, kind: output, shape index: {}]
  %s11 = sld [smem:[#allocation0]]
  $region121: #{tpu_custom_call.1} parent=0
    _
  %s13 = ssub.s32 1, %s11
  %s14 = scalar_select 0, %s13, %s11
  $region1: #{tpu_custom_call.1} parent=0
    #allocation3 [shape = 'u8[8192]{0}', space=vmem, size = 0x2000, scoped, tag = 'input window, operand 0, single buffered']
    #allocation4 [shape = 's32[2]{0}', space=sflag, size = 0x8, scoped, tag = 'scoped memory for tpu_custom_call.1']
    #allocation5 [shape = 's32[2]{0}', space=sflag, size = 0x8, scoped, tag = 'scoped memory for tpu_custom_call.1']
    #allocation6 [shape = 'u8[131072]{0}', space=vmem, size = 0x20000, scoped, tag = 'input window, operand 1, single buffered']
    #allocation7 [shape = 's32[1]{0}', space=sflag, size = 0x4, scoped, tag = 'scoped memory for tpu_custom_call.1']
    #allocation8 [shape = 'u8[16384]{0}', space=vmem, size = 0x4000, scoped, tag = 'input window, operand 2, single buffered']
    #allocation9 [shape = 'u8[16384]{0}', space=vmem, size = 0x4000, scoped, tag = 'input window, operand 3']
    #allocation10 [shape = 's32[2]{0}', space=sflag, size = 0x8, scoped, tag = 'scoped memory for tpu_custom_call.1']
    #allocation11 [shape = 'u8[786432]{0}', space=vmem, size = 0xc0000, scoped, tag = 'input window, operand 4']
    #allocation12 [shape = 'u8[6144]{0}', space=vmem, size = 0x1800, scoped, tag = 'input window, operand 5']
    #allocation13 [shape = 's32[2]{0}', space=sflag, size = 0x8, scoped, tag = 'scoped memory for tpu_custom_call.1']
    #allocation14 [shape = 'u8[262144]{0}', space=vmem, size = 0x40000, scoped, tag = 'input window, operand 6']
    #allocation15 [shape = 'u8[1048576]{0}', space=vmem, size = 0x100000, scoped, tag = 'input window, operand 7']
    #allocation16 [shape = 's32[2]{0}', space=sflag, size = 0x8, scoped, tag = 'scoped memory for tpu_custom_call.1']
    #allocation17 [shape = 'u8[8192]{0}', space=vmem, size = 0x2000, scoped, tag = 'input window, operand 8']
    #allocation18 [shape = 'u8[1048576]{0}', space=vmem, size = 0x100000, scoped, tag = 'input window, operand 9']
    #allocation19 [shape = 's32[2]{0}', space=sflag, size = 0x8, scoped, tag = 'scoped memory for tpu_custom_call.1']
    #allocation20 [shape = 'u8[2048]{0}', space=vmem, size = 0x800, scoped, tag = 'output window, operand 0, single buffered']
    %15 = vsyncpa [#allocation4], 0
    %16 = vsyncpa [#allocation7], 0
    %17 = vsyncpa [#allocation10], 0
    %s18 = scalar_lea.sflag [#allocation10], 1
    %19 = vsyncpa %s18, 0
    %20 = vsyncpa [#allocation13], 0
    %s21 = scalar_lea.sflag [#allocation13], 1
    %22 = vsyncpa %s21, 0
    %23 = vsyncpa [#allocation16], 0
    %s24 = scalar_lea.sflag [#allocation16], 1
    %25 = vsyncpa %s24, 0
    %26 = vsyncpa [#allocation19], 0
    %s27 = scalar_lea.sflag [#allocation19], 1
    %28 = vsyncpa %s27, 0
    %29 = vsyncpa [#allocation5], 0
    loop: start=0, step=1, limit=4
    $region2: #{tpu_custom_call.1} parent=1 // loop_pre_header
      _
    $region3: #{tpu_custom_call.1} parent=1 // loop_header
      %s31 = sphi 0, %s35
      %p32 = scmp.ge.s32.totalorder %s31, 4
      %s39 = sphi 0, %s39
      %s41 = sphi 0, %s39
      %s42 = sphi 0, %s41
      %s56 = sphi 0, %s42
      %s60 = sphi 0, %s60
      %s62 = sphi 0, %s60
      %s63 = sphi 0, %s62
      %s77 = sphi 0, %s63
      %s81 = sphi 0, %s81
      %s83 = sphi 0, %s81
      %s84 = sphi 0, %s83
      %s98 = sphi 0, %s84
      %s104 = sphi 0, %s106
      %s107 = sphi 0, %s104
      %s108 = sphi 0, %s107
      %s124 = sphi 0, %s108
      %s130 = sphi 0, %s132
      %s133 = sphi 0, %s130
      %s134 = sphi 0, %s133
      %s150 = sphi 0, %s134
      %s156 = sphi 0, %s158
      %s159 = sphi 0, %s156
      %s160 = sphi 0, %s159
      %s176 = sphi 0, %s160
      %s182 = sphi 0, %s184
      %s185 = sphi 0, %s182
      %s186 = sphi 0, %s185
      %s202 = sphi 0, %s186
      %s208 = sphi 0, %s210
      %s211 = sphi 0, %s208
      %s212 = sphi 0, %s211
      %s228 = sphi 0, %s212
      %s234 = sphi 0, %s236
      %s237 = sphi 0, %s234
      %s238 = sphi 0, %s237
      %s254 = sphi 0, %s238
      %s260 = sphi 0, %s262
      %s263 = sphi 0, %s260
      %s264 = sphi 0, %s263
      %s280 = sphi 0, %s264
      %s284 = sphi 0, %s284
      %s286 = sphi 0, %s284
      %s287 = sphi 0, %s286
      %s301 = sphi 0, %s287
    $region4: #{tpu_custom_call.1} parent=1 // loop_header_branch
      %34 = sbr.rel (%p32) target = $region8
    $region5: #{tpu_custom_call.1} parent=1 // loop_body
      %s36 = ssub.s32 %s31, 1
      %s37 = ssub.s32 %s31, 2
      %s38 = sadd.s32 %s31, 1
      %s40 = sadd.s32 %s39, 1
      %p43 = scmp.eq.s32.totalorder %s31, 1
      %p44 = scmp.ne.s32.totalorder %s39, %s41
      %p45 = scmp.eq.s32.totalorder %s31, 0
      %p46 = por %p44, %p45
      %p47 = scmp.ne.s32.totalorder %s39, %s41
      %p48 = scmp.eq.s32.totalorder %s36, 1
      %p49 = por %p47, %p48
      %p50 = scmp.ne.s32.totalorder %s41, %s42
      %p51 = scmp.eq.s32.totalorder %s36, 0
      %p52 = por %p50, %p51
      %p53 = scmp.ne.s32.totalorder %s41, %s42
      %p54 = scmp.eq.s32.totalorder %s37, 1
      %p55 = por %p53, %p54
      %p57 = scmp.ne.s32.totalorder %s42, %s56
      %p58 = scmp.eq.s32.totalorder %s37, 0
      %p59 = por %p57, %p58
      %s61 = sadd.s32 %s60, 1
      %p64 = scmp.eq.s32.totalorder %s31, 1
      %p65 = scmp.ne.s32.totalorder %s60, %s62
      %p66 = scmp.eq.s32.totalorder %s31, 0
      %p67 = por %p65, %p66
      %p68 = scmp.ne.s32.totalorder %s60, %s62
      %p69 = scmp.eq.s32.totalorder %s36, 1
      %p70 = por %p68, %p69
      %p71 = scmp.ne.s32.totalorder %s62, %s63
      %p72 = scmp.eq.s32.totalorder %s36, 0
      %p73 = por %p71, %p72
      %p74 = scmp.ne.s32.totalorder %s62, %s63
      %p75 = scmp.eq.s32.totalorder %s37, 1
      %p76 = por %p74, %p75
      %p78 = scmp.ne.s32.totalorder %s63, %s77
      %p79 = scmp.eq.s32.totalorder %s37, 0
      %p80 = por %p78, %p79
      %s82 = sadd.s32 %s81, 1
      %p85 = scmp.eq.s32.totalorder %s31, 1
      %p86 = scmp.ne.s32.totalorder %s81, %s83
      %p87 = scmp.eq.s32.totalorder %s31, 0
      %p88 = por %p86, %p87
      %p89 = scmp.ne.s32.totalorder %s81, %s83
      %p90 = scmp.eq.s32.totalorder %s36, 1
      %p91 = por %p89, %p90
      %p92 = scmp.ne.s32.totalorder %s83, %s84
      %p93 = scmp.eq.s32.totalorder %s36, 0
      %p94 = por %p92, %p93
      %p95 = scmp.ne.s32.totalorder %s83, %s84
      %p96 = scmp.eq.s32.totalorder %s37, 1
      %p97 = por %p95, %p96
      %p99 = scmp.ne.s32.totalorder %s84, %s98
      %p100 = scmp.eq.s32.totalorder %s37, 0
      %p101 = por %p99, %p100
      %s102 = ssub.s32 %s31, %s38
      %p103 = scmp.eq.s32.totalorder %s102, 0
      %s105 = sadd.s32 %s104, 1
      %s106 = scalar_select %p103, %s104, %s105
      %p109 = pneg %p103
      %p110 = scmp.eq.s32.totalorder %s31, 1
      %p111 = por %p109, %p110
      %p112 = scmp.ne.s32.totalorder %s104, %s107
      %p113 = scmp.eq.s32.totalorder %s31, 0
      %p114 = por %p112, %p113
      %p115 = scmp.ne.s32.totalorder %s104, %s107
      %p116 = scmp.eq.s32.totalorder %s36, 1
      %p117 = por %p115, %p116
      %p118 = scmp.ne.s32.totalorder %s107, %s108
      %p119 = scmp.eq.s32.totalorder %s36, 0
      %p120 = por %p118, %p119
      %p121 = scmp.ne.s32.totalorder %s107, %s108
      %p122 = scmp.eq.s32.totalorder %s37, 1
      %p123 = por %p121, %p122
      %p125 = scmp.ne.s32.totalorder %s108, %s124
      %p126 = scmp.eq.s32.totalorder %s37, 0
      %p127 = por %p125, %p126
      %s128 = ssub.s32 %s31, %s38
      %p129 = scmp.eq.s32.totalorder %s128, 0
      %s131 = sadd.s32 %s130, 1
      %s132 = scalar_select %p129, %s130, %s131
      %p135 = pneg %p129
      %p136 = scmp.eq.s32.totalorder %s31, 1
      %p137 = por %p135, %p136
      %p138 = scmp.ne.s32.totalorder %s130, %s133
      %p139 = scmp.eq.s32.totalorder %s31, 0
      %p140 = por %p138, %p139
      %p141 = scmp.ne.s32.totalorder %s130, %s133
      %p142 = scmp.eq.s32.totalorder %s36, 1
      %p143 = por %p141, %p142
      %p144 = scmp.ne.s32.totalorder %s133, %s134
      %p145 = scmp.eq.s32.totalorder %s36, 0
      %p146 = por %p144, %p145
      %p147 = scmp.ne.s32.totalorder %s133, %s134
      %p148 = scmp.eq.s32.totalorder %s37, 1
      %p149 = por %p147, %p148
      %p151 = scmp.ne.s32.totalorder %s134, %s150
      %p152 = scmp.eq.s32.totalorder %s37, 0
      %p153 = por %p151, %p152
      %s154 = ssub.s32 %s31, %s38
      %p155 = scmp.eq.s32.totalorder %s154, 0
      %s157 = sadd.s32 %s156, 1
      %s158 = scalar_select %p155, %s156, %s157
      %p161 = pneg %p155
      %p162 = scmp.eq.s32.totalorder %s31, 1
      %p163 = por %p161, %p162
      %p164 = scmp.ne.s32.totalorder %s156, %s159
      %p165 = scmp.eq.s32.totalorder %s31, 0
      %p166 = por %p164, %p165
      %p167 = scmp.ne.s32.totalorder %s156, %s159
      %p168 = scmp.eq.s32.totalorder %s36, 1
      %p169 = por %p167, %p168
      %p170 = scmp.ne.s32.totalorder %s159, %s160
      %p171 = scmp.eq.s32.totalorder %s36, 0
      %p172 = por %p170, %p171
      %p173 = scmp.ne.s32.totalorder %s159, %s160
      %p174 = scmp.eq.s32.totalorder %s37, 1
      %p175 = por %p173, %p174
      %p177 = scmp.ne.s32.totalorder %s160, %s176
      %p178 = scmp.eq.s32.totalorder %s37, 0
      %p179 = por %p177, %p178
      %s180 = ssub.s32 %s31, %s38
      %p181 = scmp.eq.s32.totalorder %s180, 0
      %s183 = sadd.s32 %s182, 1
      %s184 = scalar_select %p181, %s182, %s183
      %p187 = pneg %p181
      %p188 = scmp.eq.s32.totalorder %s31, 1
      %p189 = por %p187, %p188
      %p190 = scmp.ne.s32.totalorder %s182, %s185
      %p191 = scmp.eq.s32.totalorder %s31, 0
      %p192 = por %p190, %p191
      %p193 = scmp.ne.s32.totalorder %s182, %s185
      %p194 = scmp.eq.s32.totalorder %s36, 1
      %p195 = por %p193, %p194
      %p196 = scmp.ne.s32.totalorder %s185, %s186
      %p197 = scmp.eq.s32.totalorder %s36, 0
      %p198 = por %p196, %p197
      %p199 = scmp.ne.s32.totalorder %s185, %s186
      %p200 = scmp.eq.s32.totalorder %s37, 1
      %p201 = por %p199, %p200
      %p203 = scmp.ne.s32.totalorder %s186, %s202
      %p204 = scmp.eq.s32.totalorder %s37, 0
      %p205 = por %p203, %p204
      %s206 = ssub.s32 %s31, %s38
      %p207 = scmp.eq.s32.totalorder %s206, 0
      %s209 = sadd.s32 %s208, 1
      %s210 = scalar_select %p207, %s208, %s209
      %p213 = pneg %p207
      %p214 = scmp.eq.s32.totalorder %s31, 1
      %p215 = por %p213, %p214
      %p216 = scmp.ne.s32.totalorder %s208, %s211
      %p217 = scmp.eq.s32.totalorder %s31, 0
      %p218 = por %p216, %p217
      %p219 = scmp.ne.s32.totalorder %s208, %s211
      %p220 = scmp.eq.s32.totalorder %s36, 1
      %p221 = por %p219, %p220
      %p222 = scmp.ne.s32.totalorder %s211, %s212
      %p223 = scmp.eq.s32.totalorder %s36, 0
      %p224 = por %p222, %p223
      %p225 = scmp.ne.s32.totalorder %s211, %s212
      %p226 = scmp.eq.s32.totalorder %s37, 1
      %p227 = por %p225, %p226
      %p229 = scmp.ne.s32.totalorder %s212, %s228
      %p230 = scmp.eq.s32.totalorder %s37, 0
      %p231 = por %p229, %p230
      %s232 = ssub.s32 %s31, %s38
      %p233 = scmp.eq.s32.totalorder %s232, 0
      %s235 = sadd.s32 %s234, 1
      %s236 = scalar_select %p233, %s234, %s235
      %p239 = pneg %p233
      %p240 = scmp.eq.s32.totalorder %s31, 1
      %p241 = por %p239, %p240
      %p242 = scmp.ne.s32.totalorder %s234, %s237
      %p243 = scmp.eq.s32.totalorder %s31, 0
      %p244 = por %p242, %p243
      %p245 = scmp.ne.s32.totalorder %s234, %s237
      %p246 = scmp.eq.s32.totalorder %s36, 1
      %p247 = por %p245, %p246
      %p248 = scmp.ne.s32.totalorder %s237, %s238
      %p249 = scmp.eq.s32.totalorder %s36, 0
      %p250 = por %p248, %p249
      %p251 = scmp.ne.s32.totalorder %s237, %s238
      %p252 = scmp.eq.s32.totalorder %s37, 1
      %p253 = por %p251, %p252
      %p255 = scmp.ne.s32.totalorder %s238, %s254
      %p256 = scmp.eq.s32.totalorder %s37, 0
      %p257 = por %p255, %p256
      %s258 = ssub.s32 %s31, %s38
      %p259 = scmp.eq.s32.totalorder %s258, 0
      %s261 = sadd.s32 %s260, 1
      %s262 = scalar_select %p259, %s260, %s261
      %p265 = pneg %p259
      %p266 = scmp.eq.s32.totalorder %s31, 1
      %p267 = por %p265, %p266
      %p268 = scmp.ne.s32.totalorder %s260, %s263
      %p269 = scmp.eq.s32.totalorder %s31, 0
      %p270 = por %p268, %p269
      %p271 = scmp.ne.s32.totalorder %s260, %s263
      %p272 = scmp.eq.s32.totalorder %s36, 1
      %p273 = por %p271, %p272
      %p274 = scmp.ne.s32.totalorder %s263, %s264
      %p275 = scmp.eq.s32.totalorder %s36, 0
      %p276 = por %p274, %p275
      %p277 = scmp.ne.s32.totalorder %s263, %s264
      %p278 = scmp.eq.s32.totalorder %s37, 1
      %p279 = por %p277, %p278
      %p281 = scmp.ne.s32.totalorder %s264, %s280
      %p282 = scmp.eq.s32.totalorder %s37, 0
      %p283 = por %p281, %p282
      %s285 = sadd.s32 %s284, 1
      %p288 = scmp.eq.s32.totalorder %s31, 1
      %p289 = scmp.ne.s32.totalorder %s284, %s286
      %p290 = scmp.eq.s32.totalorder %s31, 0
      %p291 = por %p289, %p290
      %p292 = scmp.ne.s32.totalorder %s284, %s286
      %p293 = scmp.eq.s32.totalorder %s36, 1
      %p294 = por %p292, %p293
      %p295 = scmp.ne.s32.totalorder %s286, %s287
      %p296 = scmp.eq.s32.totalorder %s36, 0
      %p297 = por %p295, %p296
      %p298 = scmp.ne.s32.totalorder %s286, %s287
      %p299 = scmp.eq.s32.totalorder %s37, 1
      %p300 = por %p298, %p299
      %p302 = scmp.ne.s32.totalorder %s287, %s301
      %p303 = scmp.eq.s32.totalorder %s37, 0
      %p304 = por %p302, %p303
      %p305 = scmp.le.s32.totalorder 1, %s31
      %p306 = scmp.lt.s32.totalorder %s31, 3
      %p307 = pnand %p305, %p306
      %p308 = pneg %p307
      // Predicated region
      $region9: #{tpu_custom_call.1} parent=5 // pred_check
        _
      $region10: #{tpu_custom_call.1} parent=5 // pred_check_branch
        %310 = sbr.rel (%p307) target = $region12
      $region11: #{tpu_custom_call.1} parent=5 // pred_region
        %s311 = ssub.s32 %s31, 1
        // Predicated region
        $region13: #{tpu_custom_call.1} parent=11 // pred_check
          %p312 = pneg %p52
        $region14: #{tpu_custom_call.1} parent=11 // pred_check_branch
          %314 = sbr.rel (%p312) target = $region16
        $region15: #{tpu_custom_call.1} parent=11 // pred_region
          %316 = vsyncadd [#allocation4], 0
          %s317 = sshll.u32 %s0, 4
          %s318 = int_to_ptr.hbm [resolvable:$true] %s317
          %s319 = sshll.u32 [#allocation3], 4
          %s320 = int_to_ptr.vmem [resolvable:$true] %s319
          %325 = dma.hbm_to_vmem [thread:$0]  %s318, 256, %s320, [#allocation4], 128, 128, 8
        $region16: #{tpu_custom_call.1} parent=11 // pred_fallthru
          _
        // Predicated region
        $region17: #{tpu_custom_call.1} parent=11 // pred_check
          %p326 = pneg %p73
        $region18: #{tpu_custom_call.1} parent=11 // pred_check_branch
          %328 = sbr.rel (%p326) target = $region20
        $region19: #{tpu_custom_call.1} parent=11 // pred_region
          %330 = vsyncadd [#allocation7], 0
          %s331 = sshll.u32 %s1, 4
          %s332 = int_to_ptr.hbm [resolvable:$true] %s331
          %s333 = sshll.u32 [#allocation6], 4
          %s334 = int_to_ptr.vmem [resolvable:$true] %s333
          %339 = dma.hbm_to_vmem [thread:$0]  %s332, 4096, %s334, [#allocation7], 128, 128, 8
        $region20: #{tpu_custom_call.1} parent=11 // pred_fallthru
          _
        // Predicated region
        $region21: #{tpu_custom_call.1} parent=11 // pred_check
          %p340 = pneg %p94
        $region22: #{tpu_custom_call.1} parent=11 // pred_check_branch
          %342 = sbr.rel (%p340) target = $region24
        $region23: #{tpu_custom_call.1} parent=11 // pred_region
          %344 = vsyncadd [#allocation7], 0
          %s345 = sshll.u32 %s2, 4
          %s346 = int_to_ptr.hbm [resolvable:$true] %s345
          %s347 = sshll.u32 [#allocation8], 4
          %s348 = int_to_ptr.vmem [resolvable:$true] %s347
          %353 = dma.hbm_to_vmem [thread:$0]  %s346, 512, %s348, [#allocation7], 256, 256, 16
        $region24: #{tpu_custom_call.1} parent=11 // pred_fallthru
          _
      $region12: #{tpu_custom_call.1} parent=5 // pred_fallthru
        _
      %p354 = scmp.lt.s32.totalorder %s31, 2
      // Predicated region
      $region25: #{tpu_custom_call.1} parent=5 // pred_check
        %p355 = pneg %p354
      $region26: #{tpu_custom_call.1} parent=5 // pred_check_branch
        %357 = sbr.rel (%p355) target = $region28
      $region27: #{tpu_custom_call.1} parent=5 // pred_region
        // Predicated region
        $region29: #{tpu_custom_call.1} parent=27 // pred_check
          %p358 = pneg %p114
        $region30: #{tpu_custom_call.1} parent=27 // pred_check_branch
          %360 = sbr.rel (%p358) target = $region32
        $region31: #{tpu_custom_call.1} parent=27 // pred_region
          %s361 = sand.u32 %s31, 1
          %s362 = scalar_lea.sflag [#allocation10], %s361
          %s363 = sand.u32 %s104, 1
          %s364 = smul.addr %s363, 16
          %s365 = scalar_lea.vmem [#allocation9], %s364
          %367 = vsyncadd %s362, 0
          %s368 = smul.addr %s31, 2
          %s369 = smul.addr %s368, 8
          %s370 = scalar_lea.hbm %s3, %s369
          %s372 = sshll.u32 %s370, 4
          %s373 = int_to_ptr.hbm [resolvable:$true] %s372
          %s374 = sshll.u32 %s365, 4
          %s375 = int_to_ptr.vmem [resolvable:$true] %s374
          %377 = dma.hbm_to_vmem [thread:$0]  %s373, 256, %s375, %s362
        $region32: #{tpu_custom_call.1} parent=27 // pred_fallthru
          _
        // Predicated region
        $region33: #{tpu_custom_call.1} parent=27 // pred_check
          %p378 = pneg %p140
        $region34: #{tpu_custom_call.1} parent=27 // pred_check_branch
          %380 = sbr.rel (%p378) target = $region36
        $region35: #{tpu_custom_call.1} parent=27 // pred_region
          %s381 = sand.u32 %s31, 1
          %s382 = scalar_lea.sflag [#allocation10], %s381
          %s383 = sand.u32 %s130, 1
          %s384 = smul.addr %s383, 768
          %s385 = scalar_lea.vmem [#allocation11], %s384
          %387 = vsyncadd %s382, 0
          %s388 = smul.addr %s31, 192
          %s389 = smul.addr %s388, 4
          %s390 = scalar_lea.hbm %s4, %s389
          %s391 = sshll.u32 %s390, 4
          %s392 = int_to_ptr.hbm [resolvable:$true] %s391
          %s393 = sshll.u32 %s385, 4
          %s394 = int_to_ptr.vmem [resolvable:$true] %s393
          %399 = dma.hbm_to_vmem [thread:$0]  %s392, 12288, %s394, %s382, 384, 384, 24
        $region36: #{tpu_custom_call.1} parent=27 // pred_fallthru
          _
        // Predicated region
        $region37: #{tpu_custom_call.1} parent=27 // pred_check
          %p400 = pneg %p166
        $region38: #{tpu_custom_call.1} parent=27 // pred_check_branch
          %402 = sbr.rel (%p400) target = $region40
        $region39: #{tpu_custom_call.1} parent=27 // pred_region
          %s403 = sand.u32 %s31, 1
          %s404 = scalar_lea.sflag [#allocation13], %s403
          %s405 = sand.u32 %s156, 1
          %s406 = smul.addr %s405, 6
          %s407 = scalar_lea.vmem [#allocation12], %s406
          %409 = vsyncadd %s404, 0
          %s410 = smul.addr %s31, 6
          %s411 = scalar_lea.hbm %s5, %s410
          %s413 = sshll.u32 %s411, 4
          %s414 = int_to_ptr.hbm [resolvable:$true] %s413
          %s415 = sshll.u32 %s407, 4
          %s416 = int_to_ptr.vmem [resolvable:$true] %s415
          %418 = dma.hbm_to_vmem [thread:$0]  %s414, 96, %s416, %s404
        $region40: #{tpu_custom_call.1} parent=27 // pred_fallthru
          _
        // Predicated region
        $region41: #{tpu_custom_call.1} parent=27 // pred_check
          %p419 = pneg %p192
        $region42: #{tpu_custom_call.1} parent=27 // pred_check_branch
          %421 = sbr.rel (%p419) target = $region44
        $region43: #{tpu_custom_call.1} parent=27 // pred_region
          %s422 = sand.u32 %s31, 1
          %s423 = scalar_lea.sflag [#allocation13], %s422
          %s424 = sand.u32 %s182, 1
          %s425 = smul.addr %s424, 256
          %s426 = scalar_lea.vmem [#allocation14], %s425
          %428 = vsyncadd %s423, 0
          %s429 = smul.addr %s31, 64
          %s430 = smul.addr %s429, 4
          %s431 = scalar_lea.hbm %s6, %s430
          %s432 = sshll.u32 %s431, 4
          %s433 = int_to_ptr.hbm [resolvable:$true] %s432
          %s434 = sshll.u32 %s426, 4
          %s435 = int_to_ptr.vmem [resolvable:$true] %s434
          %440 = dma.hbm_to_vmem [thread:$0]  %s433, 4096, %s435, %s423, 128, 128, 8
        $region44: #{tpu_custom_call.1} parent=27 // pred_fallthru
          _
        // Predicated region
        $region45: #{tpu_custom_call.1} parent=27 // pred_check
          %p441 = pneg %p218
        $region46: #{tpu_custom_call.1} parent=27 // pred_check_branch
          %443 = sbr.rel (%p441) target = $region48
        $region47: #{tpu_custom_call.1} parent=27 // pred_region
          %s444 = sand.u32 %s31, 1
          %s445 = scalar_lea.sflag [#allocation16], %s444
          %s446 = sand.u32 %s208, 1
          %s447 = smul.addr %s446, 1024
          %s448 = scalar_lea.vmem [#allocation15], %s447
          %450 = vsyncadd %s445, 0
          %s451 = smul.addr %s31, 256
          %s452 = smul.addr %s451, 4
          %s453 = scalar_lea.hbm %s7, %s452
          %s454 = sshll.u32 %s453, 4
          %s455 = int_to_ptr.hbm [resolvable:$true] %s454
          %s456 = sshll.u32 %s448, 4
          %s457 = int_to_ptr.vmem [resolvable:$true] %s456
          %462 = dma.hbm_to_vmem [thread:$0]  %s455, 16384, %s457, %s445, 512, 512, 32
        $region48: #{tpu_custom_call.1} parent=27 // pred_fallthru
          _
        // Predicated region
        $region49: #{tpu_custom_call.1} parent=27 // pred_check
          %p463 = pneg %p244
        $region50: #{tpu_custom_call.1} parent=27 // pred_check_branch
          %465 = sbr.rel (%p463) target = $region52
        $region51: #{tpu_custom_call.1} parent=27 // pred_region
          %s466 = sand.u32 %s31, 1
          %s467 = scalar_lea.sflag [#allocation16], %s466
          %s468 = sand.u32 %s234, 1
          %s469 = smul.addr %s468, 8
          %s470 = scalar_lea.vmem [#allocation17], %s469
          %472 = vsyncadd %s467, 0
          %s473 = smul.addr %s31, 8
          %s474 = scalar_lea.hbm %s8, %s473
          %s476 = sshll.u32 %s474, 4
          %s477 = int_to_ptr.hbm [resolvable:$true] %s476
          %s478 = sshll.u32 %s470, 4
          %s479 = int_to_ptr.vmem [resolvable:$true] %s478
          %481 = dma.hbm_to_vmem [thread:$0]  %s477, 128, %s479, %s467
        $region52: #{tpu_custom_call.1} parent=27 // pred_fallthru
          _
        // Predicated region
        $region53: #{tpu_custom_call.1} parent=27 // pred_check
          %p482 = pneg %p270
        $region54: #{tpu_custom_call.1} parent=27 // pred_check_branch
          %484 = sbr.rel (%p482) target = $region56
        $region55: #{tpu_custom_call.1} parent=27 // pred_region
          %s485 = sand.u32 %s260, 1
          %s486 = scalar_lea.sflag [#allocation19], %s485
          %s487 = sand.u32 %s260, 1
          %s488 = smul.addr %s487, 1024
          %s489 = scalar_lea.vmem [#allocation18], %s488
          %491 = vsyncadd %s486, 0
          %s492 = smul.addr %s31, 256
          %s493 = smul.addr %s492, 4
          %s494 = scalar_lea.hbm %s9, %s493
          %s495 = sshll.u32 %s494, 4
          %s496 = int_to_ptr.hbm [resolvable:$true] %s495
          %s497 = sshll.u32 %s489, 4
          %s498 = int_to_ptr.vmem [resolvable:$true] %s497
          %503 = dma.hbm_to_vmem [thread:$0]  %s496, 16384, %s498, %s486, 128, 128, 8
        $region56: #{tpu_custom_call.1} parent=27 // pred_fallthru
          _
      $region28: #{tpu_custom_call.1} parent=5 // pred_fallthru
        _
      %p504 = scmp.le.s32.totalorder 1, %s31
      %p505 = scmp.lt.s32.totalorder %s31, 3
      %p506 = pnand %p504, %p505
      %p507 = pneg %p506
      // Predicated region
      $region57: #{tpu_custom_call.1} parent=5 // pred_check
        _
      $region58: #{tpu_custom_call.1} parent=5 // pred_check_branch
        %509 = sbr.rel (%p506) target = $region60
      $region59: #{tpu_custom_call.1} parent=5 // pred_region
        %s510 = ssub.s32 %s31, 1
        // Predicated region
        $region61: #{tpu_custom_call.1} parent=59 // pred_check
          %p511 = pneg %p52
        $region62: #{tpu_custom_call.1} parent=59 // pred_check_branch
          %513 = sbr.rel (%p511) target = $region64
        $region63: #{tpu_custom_call.1} parent=59 // pred_region
          %515 = dma.done [#allocation4], 256
        $region64: #{tpu_custom_call.1} parent=59 // pred_fallthru
          _
        // Predicated region
        $region65: #{tpu_custom_call.1} parent=59 // pred_check
          %p516 = pneg %p73
        $region66: #{tpu_custom_call.1} parent=59 // pred_check_branch
          %518 = sbr.rel (%p516) target = $region68
        $region67: #{tpu_custom_call.1} parent=59 // pred_region
          %520 = dma.done [#allocation7], 4096
        $region68: #{tpu_custom_call.1} parent=59 // pred_fallthru
          _
        // Predicated region
        $region69: #{tpu_custom_call.1} parent=59 // pred_check
          %p521 = pneg %p94
        $region70: #{tpu_custom_call.1} parent=59 // pred_check_branch
          %523 = sbr.rel (%p521) target = $region72
        $region71: #{tpu_custom_call.1} parent=59 // pred_region
          %525 = dma.done [#allocation7], 512
        $region72: #{tpu_custom_call.1} parent=59 // pred_fallthru
          _
        %s526 = sand.u32 %s36, 1
        %s527 = scalar_lea.sflag [#allocation10], %s526
        %s528 = sand.u32 %s107, 1
        %s529 = smul.addr %s528, 16
        %s530 = scalar_lea.vmem [#allocation9], %s529
        // Predicated region
        $region73: #{tpu_custom_call.1} parent=59 // pred_check
          %p531 = pneg %p120
        $region74: #{tpu_custom_call.1} parent=59 // pred_check_branch
          %533 = sbr.rel (%p531) target = $region76
        $region75: #{tpu_custom_call.1} parent=59 // pred_region
          %535 = dma.done %s527, 256
        $region76: #{tpu_custom_call.1} parent=59 // pred_fallthru
          _
        %s536 = sand.u32 %s36, 1
        %s537 = scalar_lea.sflag [#allocation10], %s536
        %s538 = sand.u32 %s133, 1
        %s539 = smul.addr %s538, 768
        %s540 = scalar_lea.vmem [#allocation11], %s539
        // Predicated region
        $region77: #{tpu_custom_call.1} parent=59 // pred_check
          %p541 = pneg %p146
        $region78: #{tpu_custom_call.1} parent=59 // pred_check_branch
          %543 = sbr.rel (%p541) target = $region80
        $region79: #{tpu_custom_call.1} parent=59 // pred_region
          %545 = dma.done %s537, 12288
        $region80: #{tpu_custom_call.1} parent=59 // pred_fallthru
          _
        %s546 = sand.u32 %s36, 1
        %s547 = scalar_lea.sflag [#allocation13], %s546
        %s548 = sand.u32 %s159, 1
        %s549 = smul.addr %s548, 6
        %s550 = scalar_lea.vmem [#allocation12], %s549
        // Predicated region
        $region81: #{tpu_custom_call.1} parent=59 // pred_check
          %p551 = pneg %p172
        $region82: #{tpu_custom_call.1} parent=59 // pred_check_branch
          %553 = sbr.rel (%p551) target = $region84
        $region83: #{tpu_custom_call.1} parent=59 // pred_region
          %555 = dma.done %s547, 96
        $region84: #{tpu_custom_call.1} parent=59 // pred_fallthru
          _
        %s556 = sand.u32 %s36, 1
        %s557 = scalar_lea.sflag [#allocation13], %s556
        %s558 = sand.u32 %s185, 1
        %s559 = smul.addr %s558, 256
        %s560 = scalar_lea.vmem [#allocation14], %s559
        // Predicated region
        $region85: #{tpu_custom_call.1} parent=59 // pred_check
          %p561 = pneg %p198
        $region86: #{tpu_custom_call.1} parent=59 // pred_check_branch
          %563 = sbr.rel (%p561) target = $region88
        $region87: #{tpu_custom_call.1} parent=59 // pred_region
          %565 = dma.done %s557, 4096
        $region88: #{tpu_custom_call.1} parent=59 // pred_fallthru
          _
        %s566 = sand.u32 %s36, 1
        %s567 = scalar_lea.sflag [#allocation16], %s566
        %s568 = sand.u32 %s211, 1
        %s569 = smul.addr %s568, 1024
        %s570 = scalar_lea.vmem [#allocation15], %s569
        // Predicated region
        $region89: #{tpu_custom_call.1} parent=59 // pred_check
          %p571 = pneg %p224
        $region90: #{tpu_custom_call.1} parent=59 // pred_check_branch
          %573 = sbr.rel (%p571) target = $region92
        $region91: #{tpu_custom_call.1} parent=59 // pred_region
          %575 = dma.done %s567, 16384
        $region92: #{tpu_custom_call.1} parent=59 // pred_fallthru
          _
        %s576 = sand.u32 %s36, 1
        %s577 = scalar_lea.sflag [#allocation16], %s576
        %s578 = sand.u32 %s237, 1
        %s579 = smul.addr %s578, 8
        %s580 = scalar_lea.vmem [#allocation17], %s579
        // Predicated region
        $region93: #{tpu_custom_call.1} parent=59 // pred_check
          %p581 = pneg %p250
        $region94: #{tpu_custom_call.1} parent=59 // pred_check_branch
          %583 = sbr.rel (%p581) target = $region96
        $region95: #{tpu_custom_call.1} parent=59 // pred_region
          %585 = dma.done %s577, 128
        $region96: #{tpu_custom_call.1} parent=59 // pred_fallthru
          _
        %s586 = sand.u32 %s263, 1
        %s587 = scalar_lea.sflag [#allocation19], %s586
        %s588 = sand.u32 %s263, 1
        %s589 = smul.addr %s588, 1024
        %s590 = scalar_lea.vmem [#allocation18], %s589
        // Predicated region
        $region97: #{tpu_custom_call.1} parent=59 // pred_check
          %p591 = pneg %p276
        $region98: #{tpu_custom_call.1} parent=59 // pred_check_branch
          %593 = sbr.rel (%p591) target = $region100
        $region99: #{tpu_custom_call.1} parent=59 // pred_region
          %595 = dma.done %s587, 16384
        $region100: #{tpu_custom_call.1} parent=59 // pred_fallthru
          _
        %p596 = pneg %p52
        %p597 = pneg %p49
        %p598 = pneg %p73
        %p599 = pneg %p70
        %p600 = pneg %p94
        %p601 = pneg %p91
        %s602 = sand.u32 %s36, 1
        %s603 = scalar_lea.sflag [#allocation10], %s602
        %s604 = sand.u32 %s107, 1
        %s605 = smul.addr %s604, 16
        %s606 = scalar_lea.vmem [#allocation9], %s605
        %p607 = pneg %p120
        %p608 = pneg %p117
        %s609 = sand.u32 %s36, 1
        %s610 = scalar_lea.sflag [#allocation10], %s609
        %s611 = sand.u32 %s133, 1
        %s612 = smul.addr %s611, 768
        %s613 = scalar_lea.vmem [#allocation11], %s612
        %p614 = pneg %p146
        %p615 = pneg %p143
        %s616 = sand.u32 %s36, 1
        %s617 = scalar_lea.sflag [#allocation13], %s616
        %s618 = sand.u32 %s159, 1
        %s619 = smul.addr %s618, 6
        %s620 = scalar_lea.vmem [#allocation12], %s619
        %p621 = pneg %p172
        %p622 = pneg %p169
        %s623 = sand.u32 %s36, 1
        %s624 = scalar_lea.sflag [#allocation13], %s623
        %s625 = sand.u32 %s185, 1
        %s626 = smul.addr %s625, 256
        %s627 = scalar_lea.vmem [#allocation14], %s626
        %p628 = pneg %p198
        %p629 = pneg %p195
        %s630 = sand.u32 %s36, 1
        %s631 = scalar_lea.sflag [#allocation16], %s630
        %s632 = sand.u32 %s211, 1
        %s633 = smul.addr %s632, 1024
        %s634 = scalar_lea.vmem [#allocation15], %s633
        %p635 = pneg %p224
        %p636 = pneg %p221
        %s637 = sand.u32 %s36, 1
        %s638 = scalar_lea.sflag [#allocation16], %s637
        %s639 = sand.u32 %s237, 1
        %s640 = smul.addr %s639, 8
        %s641 = scalar_lea.vmem [#allocation17], %s640
        %p642 = pneg %p250
        %p643 = pneg %p247
        %s644 = sand.u32 %s263, 1
        %s645 = scalar_lea.sflag [#allocation19], %s644
        %s646 = sand.u32 %s263, 1
        %s647 = smul.addr %s646, 1024
        %s648 = scalar_lea.vmem [#allocation18], %s647
        %p649 = pneg %p276
        %p650 = pneg %p273
        %p651 = pneg %p297
        %p652 = pneg %p294
        %p653 = scmp.eq.s32.totalorder %s36, 0
        // Predicated region
        $region101: #{tpu_custom_call.1} parent=59 // pred_check
          %p654 = pneg %p653
        $region102: #{tpu_custom_call.1} parent=59 // pred_check_branch
          %656 = sbr.rel (%p654) target = $region104
        $region103: #{tpu_custom_call.1} parent=59 // pred_region
          %v657 = vld [vmem:[#allocation3] sm:$0xff]
          %v658 = vld [vmem:[#allocation3 + $0x8] sm:$0xff]
          %v659 = vld [vmem:[#allocation6] sm:$0xff]
          %v660 = vld [vmem:[#allocation6 + $0x8] sm:$0xff]
          %v661 = vld [vmem:[#allocation6 + $0x10] sm:$0xff]
          %v662 = vld [vmem:[#allocation6 + $0x18] sm:$0xff]
          %v663 = vld [vmem:[#allocation6 + $0x20] sm:$0xff]
          %v664 = vld [vmem:[#allocation6 + $0x28] sm:$0xff]
          %v665 = vld [vmem:[#allocation6 + $0x30] sm:$0xff]
          %v666 = vld [vmem:[#allocation6 + $0x38] sm:$0xff]
          %v667 = vld [vmem:[#allocation6 + $0x40] sm:$0xff]
          %v668 = vld [vmem:[#allocation6 + $0x48] sm:$0xff]
          %v669 = vld [vmem:[#allocation6 + $0x50] sm:$0xff]
          %v670 = vld [vmem:[#allocation6 + $0x58] sm:$0xff]
          %v671 = vld [vmem:[#allocation6 + $0x60] sm:$0xff]
          %v672 = vld [vmem:[#allocation6 + $0x68] sm:$0xff]
          %v673 = vld [vmem:[#allocation6 + $0x70] sm:$0xff]
          %v674 = vld [vmem:[#allocation6 + $0x78] sm:$0xff]
          %v675 = vld [vmem:[#allocation6 + $0x80] sm:$0xff]
          %v676 = vld [vmem:[#allocation6 + $0x88] sm:$0xff]
          %v677 = vld [vmem:[#allocation6 + $0x90] sm:$0xff]
          %v678 = vld [vmem:[#allocation6 + $0x98] sm:$0xff]
          %v679 = vld [vmem:[#allocation6 + $0xa0] sm:$0xff]
          %v680 = vld [vmem:[#allocation6 + $0xa8] sm:$0xff]
          %v681 = vld [vmem:[#allocation6 + $0xb0] sm:$0xff]
          %v682 = vld [vmem:[#allocation6 + $0xb8] sm:$0xff]
          %v683 = vld [vmem:[#allocation6 + $0xc0] sm:$0xff]
          %v684 = vld [vmem:[#allocation6 + $0xc8] sm:$0xff]
          %v685 = vld [vmem:[#allocation6 + $0xd0] sm:$0xff]
          %v686 = vld [vmem:[#allocation6 + $0xd8] sm:$0xff]
          %v687 = vld [vmem:[#allocation6 + $0xe0] sm:$0xff]
          %v688 = vld [vmem:[#allocation6 + $0xe8] sm:$0xff]
          %v689 = vld [vmem:[#allocation6 + $0xf0] sm:$0xff]
          %v690 = vld [vmem:[#allocation6 + $0xf8] sm:$0xff]
          %v693 = vunpack.c.l.b16 %v657
          %v694 = vunpack.c.h.b16 %v657
          %v695 = vunpack.c.l.b16 %v658
          %v696 = vunpack.c.h.b16 %v658
          %v697 = vpack.c.b16 %v695, %v693
          %v698 = vpack.c.b16 %v696, %v694
          %v733 = vunpack.c.l.b16 %v659
          %v734 = vunpack.c.h.b16 %v659
          %v735 = vunpack.c.l.b16 %v660
          %v736 = vunpack.c.h.b16 %v660
          %v737 = vunpack.c.l.b16 %v661
          %v738 = vunpack.c.h.b16 %v661
          %v739 = vunpack.c.l.b16 %v662
          %v740 = vunpack.c.h.b16 %v662
          %v741 = vunpack.c.l.b16 %v663
          %v742 = vunpack.c.h.b16 %v663
          %v743 = vunpack.c.l.b16 %v664
          %v744 = vunpack.c.h.b16 %v664
          %v745 = vunpack.c.l.b16 %v665
          %v746 = vunpack.c.h.b16 %v665
          %v747 = vunpack.c.l.b16 %v666
          %v748 = vunpack.c.h.b16 %v666
          %v749 = vunpack.c.l.b16 %v667
          %v750 = vunpack.c.h.b16 %v667
          %v751 = vunpack.c.l.b16 %v668
          %v752 = vunpack.c.h.b16 %v668
          %v753 = vunpack.c.l.b16 %v669
          %v754 = vunpack.c.h.b16 %v669
          %v755 = vunpack.c.l.b16 %v670
          %v756 = vunpack.c.h.b16 %v670
          %v757 = vunpack.c.l.b16 %v671
          %v758 = vunpack.c.h.b16 %v671
          %v759 = vunpack.c.l.b16 %v672
          %v760 = vunpack.c.h.b16 %v672
          %v761 = vunpack.c.l.b16 %v673
          %v762 = vunpack.c.h.b16 %v673
          %v763 = vunpack.c.l.b16 %v674
          %v764 = vunpack.c.h.b16 %v674
          %v765 = vunpack.c.l.b16 %v675
          %v766 = vunpack.c.h.b16 %v675
          %v767 = vunpack.c.l.b16 %v676
          %v768 = vunpack.c.h.b16 %v676
          %v769 = vunpack.c.l.b16 %v677
          %v770 = vunpack.c.h.b16 %v677
          %v771 = vunpack.c.l.b16 %v678
          %v772 = vunpack.c.h.b16 %v678
          %v773 = vunpack.c.l.b16 %v679
          %v774 = vunpack.c.h.b16 %v679
          %v775 = vunpack.c.l.b16 %v680
          %v776 = vunpack.c.h.b16 %v680
          %v777 = vunpack.c.l.b16 %v681
          %v778 = vunpack.c.h.b16 %v681
          %v779 = vunpack.c.l.b16 %v682
          %v780 = vunpack.c.h.b16 %v682
          %v781 = vunpack.c.l.b16 %v683
          %v782 = vunpack.c.h.b16 %v683
          %v783 = vunpack.c.l.b16 %v684
          %v784 = vunpack.c.h.b16 %v684
          %v785 = vunpack.c.l.b16 %v685
          %v786 = vunpack.c.h.b16 %v685
          %v787 = vunpack.c.l.b16 %v686
          %v788 = vunpack.c.h.b16 %v686
          %v789 = vunpack.c.l.b16 %v687
          %v790 = vunpack.c.h.b16 %v687
          %v791 = vunpack.c.l.b16 %v688
          %v792 = vunpack.c.h.b16 %v688
          %v793 = vunpack.c.l.b16 %v689
          %v794 = vunpack.c.h.b16 %v689
          %v795 = vunpack.c.l.b16 %v690
          %v796 = vunpack.c.h.b16 %v690
          %v797 = vpack.c.b16 %v735, %v733
          %v798 = vpack.c.b16 %v736, %v734
          %v799 = vpack.c.b16 %v739, %v737
          %v800 = vpack.c.b16 %v740, %v738
          %v801 = vpack.c.b16 %v743, %v741
          %v802 = vpack.c.b16 %v744, %v742
          %v803 = vpack.c.b16 %v747, %v745
          %v804 = vpack.c.b16 %v748, %v746
          %v805 = vpack.c.b16 %v751, %v749
          %v806 = vpack.c.b16 %v752, %v750
          %v807 = vpack.c.b16 %v755, %v753
          %v808 = vpack.c.b16 %v756, %v754
          %v809 = vpack.c.b16 %v759, %v757
          %v810 = vpack.c.b16 %v760, %v758
          %v811 = vpack.c.b16 %v763, %v761
          %v812 = vpack.c.b16 %v764, %v762
          %v813 = vpack.c.b16 %v767, %v765
          %v814 = vpack.c.b16 %v768, %v766
          %v815 = vpack.c.b16 %v771, %v769
          %v816 = vpack.c.b16 %v772, %v770
          %v817 = vpack.c.b16 %v775, %v773
          %v818 = vpack.c.b16 %v776, %v774
          %v819 = vpack.c.b16 %v779, %v777
          %v820 = vpack.c.b16 %v780, %v778
          %v821 = vpack.c.b16 %v783, %v781
          %v822 = vpack.c.b16 %v784, %v782
          %v823 = vpack.c.b16 %v787, %v785
          %v824 = vpack.c.b16 %v788, %v786
          %v825 = vpack.c.b16 %v791, %v789
          %v826 = vpack.c.b16 %v792, %v790
          %v827 = vpack.c.b16 %v795, %v793
          %v828 = vpack.c.b16 %v796, %v794
          %861 = vmatpush.bf16.msra.mxu0 %v811
          %862 = vmatpush.bf16.msra.mxu0 %v809
          %863 = vmatpush.bf16.msra.mxu0 %v807
          %864 = vmatpush.bf16.msra.mxu0 %v805
          %865 = vmatpush.bf16.msra.mxu0 %v803
          %866 = vmatpush.bf16.msra.mxu0 %v801
          %867 = vmatpush.bf16.msra.mxu0 %v799
          %868 = vmatpush.bf16.msra.mxu0 %v797
          %869 = vmatmul.bf16.gmra.mxu0 %v697
          %v870 = vpop.f32.mrf.mxu0
          %v871 = vadd.f32 0.0, %v870
          %v872 = vpop.f32.mrf.mxu0
          %v873 = vadd.f32 0.0, %v872
          %874 = vdwg.mxu0
          %875 = vmatpush.bf16.msra.mxu0 %v827
          %876 = vmatpush.bf16.msra.mxu0 %v825
          %877 = vmatpush.bf16.msra.mxu0 %v823
          %878 = vmatpush.bf16.msra.mxu0 %v821
          %879 = vmatpush.bf16.msra.mxu0 %v819
          %880 = vmatpush.bf16.msra.mxu0 %v817
          %881 = vmatpush.bf16.msra.mxu0 %v815
          %882 = vmatpush.bf16.msra.mxu0 %v813
          %883 = vmatmul.bf16.gmra.mxu0 %v698
          %v884 = vpop.f32.mrf.mxu0
          %v885 = vadd.f32 %v871, %v884
          %v886 = vpop.f32.mrf.mxu0
          %v887 = vadd.f32 %v873, %v886
          %888 = vdwg.mxu0
          %889 = vmatpush.bf16.msra.mxu0 %v812
          %890 = vmatpush.bf16.msra.mxu0 %v810
          %891 = vmatpush.bf16.msra.mxu0 %v808
          %892 = vmatpush.bf16.msra.mxu0 %v806
          %893 = vmatpush.bf16.msra.mxu0 %v804
          %894 = vmatpush.bf16.msra.mxu0 %v802
          %895 = vmatpush.bf16.msra.mxu0 %v800
          %896 = vmatpush.bf16.msra.mxu0 %v798
          %897 = vmatmul.bf16.gmra.mxu0 %v697
          %v898 = vpop.f32.mrf.mxu0
          %v899 = vadd.f32 0.0, %v898
          %v900 = vpop.f32.mrf.mxu0
          %v901 = vadd.f32 0.0, %v900
          %902 = vdwg.mxu0
          %903 = vmatpush.bf16.msra.mxu0 %v828
          %904 = vmatpush.bf16.msra.mxu0 %v826
          %905 = vmatpush.bf16.msra.mxu0 %v824
          %906 = vmatpush.bf16.msra.mxu0 %v822
          %907 = vmatpush.bf16.msra.mxu0 %v820
          %908 = vmatpush.bf16.msra.mxu0 %v818
          %909 = vmatpush.bf16.msra.mxu0 %v816
          %910 = vmatpush.bf16.msra.mxu0 %v814
          %911 = vmatmul.bf16.gmra.mxu0 %v698
          %v912 = vpop.f32.mrf.mxu0
          %v913 = vadd.f32 %v899, %v912
          %v914 = vpop.f32.mrf.mxu0
          %v915 = vadd.f32 %v901, %v914
          %916 = vdwg.mxu0
          %v917 = vld [vmem:[#allocation8] sm:$0xff]
          %v918 = vld [vmem:[#allocation8 + $0x8] sm:$0xff]
          %v919 = vadd.f32 %v885, %v917
          %v920 = vadd.f32 %v913, %v918
          %v921 = vadd.f32 %v887, %v917
          %v922 = vadd.f32 %v915, %v918
          %923 = vst [vmem:[#allocation2] sm:$0xff] %v919
          %924 = vst [vmem:[#allocation2 + $0x8] sm:$0xff] %v920
          %925 = vst [vmem:[#allocation2 + $0x10] sm:$0xff] %v921
          %926 = vst [vmem:[#allocation2 + $0x18] sm:$0xff] %v922
        $region104: #{tpu_custom_call.1} parent=59 // pred_fallthru
          _
        %v927 = vld [vmem:[%s530] ss:$8 sm:$0x3]
        %s928 = scalar_lea.vmem %s530, 1 [#allocation9]
        %v929 = vld [vmem:[%s928] ss:$8 sm:$0x3]
        %s930 = scalar_lea.vmem %s530, 2 [#allocation9]
        %v931 = vld [vmem:[%s930] ss:$8 sm:$0x3]
        %s932 = scalar_lea.vmem %s530, 3 [#allocation9]
        %v933 = vld [vmem:[%s932] ss:$8 sm:$0x3]
        %s934 = scalar_lea.vmem %s530, 4 [#allocation9]
        %v935 = vld [vmem:[%s934] ss:$8 sm:$0x3]
        %s936 = scalar_lea.vmem %s530, 5 [#allocation9]
        %v937 = vld [vmem:[%s936] ss:$8 sm:$0x3]
        %v938 = vld [vmem:[#allocation2] sm:$0xff]
        %v939 = vld [vmem:[#allocation2 + $0x8] sm:$0xff]
        %v940 = vld [vmem:[#allocation2 + $0x10] sm:$0xff]
        %v941 = vld [vmem:[#allocation2 + $0x18] sm:$0xff]
        %v942 = vld [vmem:[%s540] sm:$0xff]
        %v943 = vld [vmem:[%s540 + $0x8] sm:$0xff]
        %v944 = vld [vmem:[%s540 + $0x10] sm:$0xff]
        %v945 = vld [vmem:[%s540 + $0x18] sm:$0xff]
        %v946 = vld [vmem:[%s540 + $0x20] sm:$0xff]
        %v947 = vld [vmem:[%s540 + $0x28] sm:$0xff]
        %v948 = vld [vmem:[%s540 + $0x30] sm:$0xff]
        %v949 = vld [vmem:[%s540 + $0x38] sm:$0xff]
        %v950 = vld [vmem:[%s540 + $0x40] sm:$0xff]
        %v951 = vld [vmem:[%s540 + $0x48] sm:$0xff]
        %v952 = vld [vmem:[%s540 + $0x50] sm:$0xff]
        %v953 = vld [vmem:[%s540 + $0x58] sm:$0xff]
        %v954 = vld [vmem:[%s540 + $0x60] sm:$0xff]
        %v955 = vld [vmem:[%s540 + $0x68] sm:$0xff]
        %v956 = vld [vmem:[%s540 + $0x70] sm:$0xff]
        %v957 = vld [vmem:[%s540 + $0x78] sm:$0xff]
        %v958 = vld [vmem:[%s540 + $0x80] sm:$0xff]
        %v959 = vld [vmem:[%s540 + $0x88] sm:$0xff]
        %v960 = vld [vmem:[%s540 + $0x90] sm:$0xff]
        %v961 = vld [vmem:[%s540 + $0x98] sm:$0xff]
        %v962 = vld [vmem:[%s540 + $0xa0] sm:$0xff]
        %v963 = vld [vmem:[%s540 + $0xa8] sm:$0xff]
        %v964 = vld [vmem:[%s540 + $0xb0] sm:$0xff]
        %v965 = vld [vmem:[%s540 + $0xb8] sm:$0xff]
        %v966 = vld [vmem:[%s540 + $0xc0] sm:$0xff]
        %v967 = vld [vmem:[%s540 + $0xc8] sm:$0xff]
        %v968 = vld [vmem:[%s540 + $0xd0] sm:$0xff]
        %v969 = vld [vmem:[%s540 + $0xd8] sm:$0xff]
        %v970 = vld [vmem:[%s540 + $0xe0] sm:$0xff]
        %v971 = vld [vmem:[%s540 + $0xe8] sm:$0xff]
        %v972 = vld [vmem:[%s540 + $0xf0] sm:$0xff]
        %v973 = vld [vmem:[%s540 + $0xf8] sm:$0xff]
        %v974 = vld [vmem:[%s540 + $0x100] sm:$0xff]
        %v975 = vld [vmem:[%s540 + $0x108] sm:$0xff]
        %v976 = vld [vmem:[%s540 + $0x110] sm:$0xff]
        %v977 = vld [vmem:[%s540 + $0x118] sm:$0xff]
        %v978 = vld [vmem:[%s540 + $0x120] sm:$0xff]
        %v979 = vld [vmem:[%s540 + $0x128] sm:$0xff]
        %v980 = vld [vmem:[%s540 + $0x130] sm:$0xff]
        %v981 = vld [vmem:[%s540 + $0x138] sm:$0xff]
        %v982 = vld [vmem:[%s540 + $0x140] sm:$0xff]
        %v983 = vld [vmem:[%s540 + $0x148] sm:$0xff]
        %v984 = vld [vmem:[%s540 + $0x150] sm:$0xff]
        %v985 = vld [vmem:[%s540 + $0x158] sm:$0xff]
        %v986 = vld [vmem:[%s540 + $0x160] sm:$0xff]
        %v987 = vld [vmem:[%s540 + $0x168] sm:$0xff]
        %v988 = vld [vmem:[%s540 + $0x170] sm:$0xff]
        %v989 = vld [vmem:[%s540 + $0x178] sm:$0xff]
        %v990 = vld [vmem:[%s540 + $0x180] sm:$0xff]
        %v991 = vld [vmem:[%s540 + $0x188] sm:$0xff]
        %v992 = vld [vmem:[%s540 + $0x190] sm:$0xff]
        %v993 = vld [vmem:[%s540 + $0x198] sm:$0xff]
        %v994 = vld [vmem:[%s540 + $0x1a0] sm:$0xff]
        %v995 = vld [vmem:[%s540 + $0x1a8] sm:$0xff]
        %v996 = vld [vmem:[%s540 + $0x1b0] sm:$0xff]
        %v997 = vld [vmem:[%s540 + $0x1b8] sm:$0xff]
        %v998 = vld [vmem:[%s540 + $0x1c0] sm:$0xff]
        %v999 = vld [vmem:[%s540 + $0x1c8] sm:$0xff]
        %v1000 = vld [vmem:[%s540 + $0x1d0] sm:$0xff]
        %v1001 = vld [vmem:[%s540 + $0x1d8] sm:$0xff]
        %v1002 = vld [vmem:[%s540 + $0x1e0] sm:$0xff]
        %v1003 = vld [vmem:[%s540 + $0x1e8] sm:$0xff]
        %v1004 = vld [vmem:[%s540 + $0x1f0] sm:$0xff]
        %v1005 = vld [vmem:[%s540 + $0x1f8] sm:$0xff]
        %v1006 = vld [vmem:[%s540 + $0x200] sm:$0xff]
        %v1007 = vld [vmem:[%s540 + $0x208] sm:$0xff]
        %v1008 = vld [vmem:[%s540 + $0x210] sm:$0xff]
        %v1009 = vld [vmem:[%s540 + $0x218] sm:$0xff]
        %v1010 = vld [vmem:[%s540 + $0x220] sm:$0xff]
        %v1011 = vld [vmem:[%s540 + $0x228] sm:$0xff]
        %v1012 = vld [vmem:[%s540 + $0x230] sm:$0xff]
        %v1013 = vld [vmem:[%s540 + $0x238] sm:$0xff]
        %v1014 = vld [vmem:[%s540 + $0x240] sm:$0xff]
        %v1015 = vld [vmem:[%s540 + $0x248] sm:$0xff]
        %v1016 = vld [vmem:[%s540 + $0x250] sm:$0xff]
        %v1017 = vld [vmem:[%s540 + $0x258] sm:$0xff]
        %v1018 = vld [vmem:[%s540 + $0x260] sm:$0xff]
        %v1019 = vld [vmem:[%s540 + $0x268] sm:$0xff]
        %v1020 = vld [vmem:[%s540 + $0x270] sm:$0xff]
        %v1021 = vld [vmem:[%s540 + $0x278] sm:$0xff]
        %v1022 = vld [vmem:[%s540 + $0x280] sm:$0xff]
        %v1023 = vld [vmem:[%s540 + $0x288] sm:$0xff]
        %v1024 = vld [vmem:[%s540 + $0x290] sm:$0xff]
        %v1025 = vld [vmem:[%s540 + $0x298] sm:$0xff]
        %v1026 = vld [vmem:[%s540 + $0x2a0] sm:$0xff]
        %v1027 = vld [vmem:[%s540 + $0x2a8] sm:$0xff]
        %v1028 = vld [vmem:[%s540 + $0x2b0] sm:$0xff]
        %v1029 = vld [vmem:[%s540 + $0x2b8] sm:$0xff]
        %v1030 = vld [vmem:[%s540 + $0x2c0] sm:$0xff]
        %v1031 = vld [vmem:[%s540 + $0x2c8] sm:$0xff]
        %v1032 = vld [vmem:[%s540 + $0x2d0] sm:$0xff]
        %v1033 = vld [vmem:[%s540 + $0x2d8] sm:$0xff]
        %v1034 = vld [vmem:[%s540 + $0x2e0] sm:$0xff]
        %v1035 = vld [vmem:[%s540 + $0x2e8] sm:$0xff]
        %v1036 = vld [vmem:[%s540 + $0x2f0] sm:$0xff]
        %v1037 = vld [vmem:[%s540 + $0x2f8] sm:$0xff]
        %v1038 = vadd.f32 %v938, %v939
        %1039 = vadd.xlane.f32.xlu0 %v1038
        %v1040 = vpop.xlane.xlu0 %1039
        %v1041 = vadd.f32 %v940, %v941
        %1042 = vadd.xlane.f32.xlu0 %v1041
        %v1043 = vpop.xlane.xlu0 %1042
        %v1044 = vrcp.pop 256.0
        %v1045 = vmul.f32 256.0, %v1044
        %v1046 = vsub.f32 1.0, %v1045
        %v1047 = vmul.f32 %v1044, %v1046
        %v1048 = vadd.f32 %v1044, %v1047
        %vm1049 = vweird.f32 %v1044
        %v1050 = vsel %vm1049, %v1044, %v1048
        %v1051 = vmul.f32 %v1040, %v1050
        %v1052 = vmul.f32 %v1043, %v1050
        %v1053 = vmul.f32 %v938, %v938
        %v1054 = vmul.f32 %v939, %v939
        %v1055 = vmul.f32 %v940, %v940
        %v1056 = vmul.f32 %v941, %v941
        %v1057 = vadd.f32 %v1053, %v1054
        %1058 = vadd.xlane.f32.xlu0 %v1057
        %v1059 = vpop.xlane.xlu0 %1058
        %v1060 = vadd.f32 %v1055, %v1056
        %1061 = vadd.xlane.f32.xlu0 %v1060
        %v1062 = vpop.xlane.xlu0 %1061
        %v1063 = vmul.f32 %v1059, %v1050
        %v1064 = vmul.f32 %v1062, %v1050
        %v1065 = vmul.f32 %v1051, %v1051
        %v1066 = vmul.f32 %v1052, %v1052
        %v1067 = vsub.f32 %v1063, %v1065
        %v1068 = vsub.f32 %v1064, %v1066
        %v1069 = vmax.f32 %v1067, 0.0
        %v1070 = vmax.f32 %v1068, 0.0
        %v1071 = vsub.f32 %v938, %v1051
        %v1072 = vsub.f32 %v939, %v1051
        %v1073 = vsub.f32 %v940, %v1052
        %v1074 = vsub.f32 %v941, %v1052
        %v1075 = vadd.f32 %v1069, 1e-12
        %v1076 = vadd.f32 %v1070, 1e-12
        %v1077 = vrsqrt.pop %v1075
        %v1078 = vmul.f32 %v1077, %v1075
        %v1079 = vmul.f32 %v1078, %v1077
        %v1080 = vmul.f32 0.5, %v1079
        %v1081 = vsub.f32 1.5, %v1080
        %v1082 = vmul.f32 %v1077, %v1081
        %vm1083 = vweird.f32 %v1075
        %vm1084 = vweird.f32 %v1077
        %vm1085 = vmor %vm1083, %vm1084
        %v1086 = vsel %vm1085, %v1077, %v1082
        %v1087 = vrsqrt.pop %v1076
        %v1088 = vmul.f32 %v1087, %v1076
        %v1089 = vmul.f32 %v1088, %v1087
        %v1090 = vmul.f32 0.5, %v1089
        %v1091 = vsub.f32 1.5, %v1090
        %v1092 = vmul.f32 %v1087, %v1091
        %vm1093 = vweird.f32 %v1076
        %vm1094 = vweird.f32 %v1087
        %vm1095 = vmor %vm1093, %vm1094
        %v1096 = vsel %vm1095, %v1087, %v1092
        %v1097 = vmul.f32 %v1071, %v1086
        %v1098 = vmul.f32 %v1072, %v1086
        %v1099 = vmul.f32 %v1073, %v1096
        %v1100 = vmul.f32 %v1074, %v1096
        %v1102 = vperm.slane %v927, 0
        %v1103 = vperm.slane %v927, 1
        %v1106 = vmul.f32 %v1097, %v1102
        %v1107 = vmul.f32 %v1098, %v1103
        %v1108 = vmul.f32 %v1099, %v1102
        %v1109 = vmul.f32 %v1100, %v1103
        %v1111 = vperm.slane %v929, 0
        %v1112 = vperm.slane %v929, 1
        %v1115 = vadd.f32 %v1106, %v1111
        %v1116 = vadd.f32 %v1107, %v1112
        %v1117 = vadd.f32 %v1108, %v1111
        %v1118 = vadd.f32 %v1109, %v1112
        %v1119 = vpack.c.bf16 %v1117, %v1115
        %v1120 = vpack.c.bf16 %v1118, %v1116
        %v1121 = vld [vmem:[%s550] sm:$0x3f]
        %v1123 = vperm.slane %v1121, 0
        %v1124 = vperm.slane %v1121, 1
        %v1125 = vperm.slane %v1121, 2
        %v1126 = vperm.slane %v1121, 3
        %v1127 = vperm.slane %v1121, 4
        %v1128 = vperm.slane %v1121, 5
        %v1231 = vunpack.c.l.b16 %v942
        %v1232 = vunpack.c.h.b16 %v942
        %v1233 = vunpack.c.l.b16 %v943
        %v1234 = vunpack.c.h.b16 %v943
        %v1235 = vunpack.c.l.b16 %v944
        %v1236 = vunpack.c.h.b16 %v944
        %v1237 = vunpack.c.l.b16 %v945
        %v1238 = vunpack.c.h.b16 %v945
        %v1239 = vunpack.c.l.b16 %v946
        %v1240 = vunpack.c.h.b16 %v946
        %v1241 = vunpack.c.l.b16 %v947
        %v1242 = vunpack.c.h.b16 %v947
        %v1243 = vunpack.c.l.b16 %v948
        %v1244 = vunpack.c.h.b16 %v948
        %v1245 = vunpack.c.l.b16 %v949
        %v1246 = vunpack.c.h.b16 %v949
        %v1247 = vunpack.c.l.b16 %v950
        %v1248 = vunpack.c.h.b16 %v950
        %v1249 = vunpack.c.l.b16 %v951
        %v1250 = vunpack.c.h.b16 %v951
        %v1251 = vunpack.c.l.b16 %v952
        %v1252 = vunpack.c.h.b16 %v952
        %v1253 = vunpack.c.l.b16 %v953
        %v1254 = vunpack.c.h.b16 %v953
        %v1255 = vunpack.c.l.b16 %v954
        %v1256 = vunpack.c.h.b16 %v954
        %v1257 = vunpack.c.l.b16 %v955
        %v1258 = vunpack.c.h.b16 %v955
        %v1259 = vunpack.c.l.b16 %v956
        %v1260 = vunpack.c.h.b16 %v956
        %v1261 = vunpack.c.l.b16 %v957
        %v1262 = vunpack.c.h.b16 %v957
        %v1263 = vunpack.c.l.b16 %v958
        %v1264 = vunpack.c.h.b16 %v958
        %v1265 = vunpack.c.l.b16 %v959
        %v1266 = vunpack.c.h.b16 %v959
        %v1267 = vunpack.c.l.b16 %v960
        %v1268 = vunpack.c.h.b16 %v960
        %v1269 = vunpack.c.l.b16 %v961
        %v1270 = vunpack.c.h.b16 %v961
        %v1271 = vunpack.c.l.b16 %v962
        %v1272 = vunpack.c.h.b16 %v962
        %v1273 = vunpack.c.l.b16 %v963
        %v1274 = vunpack.c.h.b16 %v963
        %v1275 = vunpack.c.l.b16 %v964
        %v1276 = vunpack.c.h.b16 %v964
        %v1277 = vunpack.c.l.b16 %v965
        %v1278 = vunpack.c.h.b16 %v965
        %v1279 = vunpack.c.l.b16 %v966
        %v1280 = vunpack.c.h.b16 %v966
        %v1281 = vunpack.c.l.b16 %v967
        %v1282 = vunpack.c.h.b16 %v967
        %v1283 = vunpack.c.l.b16 %v968
        %v1284 = vunpack.c.h.b16 %v968
        %v1285 = vunpack.c.l.b16 %v969
        %v1286 = vunpack.c.h.b16 %v969
        %v1287 = vunpack.c.l.b16 %v970
        %v1288 = vunpack.c.h.b16 %v970
        %v1289 = vunpack.c.l.b16 %v971
        %v1290 = vunpack.c.h.b16 %v971
        %v1291 = vunpack.c.l.b16 %v972
        %v1292 = vunpack.c.h.b16 %v972
        %v1293 = vunpack.c.l.b16 %v973
        %v1294 = vunpack.c.h.b16 %v973
        %v1295 = vunpack.c.l.b16 %v974
        %v1296 = vunpack.c.h.b16 %v974
        %v1297 = vunpack.c.l.b16 %v975
        %v1298 = vunpack.c.h.b16 %v975
        %v1299 = vunpack.c.l.b16 %v976
        %v1300 = vunpack.c.h.b16 %v976
        %v1301 = vunpack.c.l.b16 %v977
        %v1302 = vunpack.c.h.b16 %v977
        %v1303 = vunpack.c.l.b16 %v978
        %v1304 = vunpack.c.h.b16 %v978
        %v1305 = vunpack.c.l.b16 %v979
        %v1306 = vunpack.c.h.b16 %v979
        %v1307 = vunpack.c.l.b16 %v980
        %v1308 = vunpack.c.h.b16 %v980
        %v1309 = vunpack.c.l.b16 %v981
        %v1310 = vunpack.c.h.b16 %v981
        %v1311 = vunpack.c.l.b16 %v982
        %v1312 = vunpack.c.h.b16 %v982
        %v1313 = vunpack.c.l.b16 %v983
        %v1314 = vunpack.c.h.b16 %v983
        %v1315 = vunpack.c.l.b16 %v984
        %v1316 = vunpack.c.h.b16 %v984
        %v1317 = vunpack.c.l.b16 %v985
        %v1318 = vunpack.c.h.b16 %v985
        %v1319 = vunpack.c.l.b16 %v986
        %v1320 = vunpack.c.h.b16 %v986
        %v1321 = vunpack.c.l.b16 %v987
        %v1322 = vunpack.c.h.b16 %v987
        %v1323 = vunpack.c.l.b16 %v988
        %v1324 = vunpack.c.h.b16 %v988
        %v1325 = vunpack.c.l.b16 %v989
        %v1326 = vunpack.c.h.b16 %v989
        %v1327 = vunpack.c.l.b16 %v990
        %v1328 = vunpack.c.h.b16 %v990
        %v1329 = vunpack.c.l.b16 %v991
        %v1330 = vunpack.c.h.b16 %v991
        %v1331 = vunpack.c.l.b16 %v992
        %v1332 = vunpack.c.h.b16 %v992
        %v1333 = vunpack.c.l.b16 %v993
        %v1334 = vunpack.c.h.b16 %v993
        %v1335 = vunpack.c.l.b16 %v994
        %v1336 = vunpack.c.h.b16 %v994
        %v1337 = vunpack.c.l.b16 %v995
        %v1338 = vunpack.c.h.b16 %v995
        %v1339 = vunpack.c.l.b16 %v996
        %v1340 = vunpack.c.h.b16 %v996
        %v1341 = vunpack.c.l.b16 %v997
        %v1342 = vunpack.c.h.b16 %v997
        %v1343 = vunpack.c.l.b16 %v998
        %v1344 = vunpack.c.h.b16 %v998
        %v1345 = vunpack.c.l.b16 %v999
        %v1346 = vunpack.c.h.b16 %v999
        %v1347 = vunpack.c.l.b16 %v1000
        %v1348 = vunpack.c.h.b16 %v1000
        %v1349 = vunpack.c.l.b16 %v1001
        %v1350 = vunpack.c.h.b16 %v1001
        %v1351 = vunpack.c.l.b16 %v1002
        %v1352 = vunpack.c.h.b16 %v1002
        %v1353 = vunpack.c.l.b16 %v1003
        %v1354 = vunpack.c.h.b16 %v1003
        %v1355 = vunpack.c.l.b16 %v1004
        %v1356 = vunpack.c.h.b16 %v1004
        %v1357 = vunpack.c.l.b16 %v1005
        %v1358 = vunpack.c.h.b16 %v1005
        %v1359 = vunpack.c.l.b16 %v1006
        %v1360 = vunpack.c.h.b16 %v1006
        %v1361 = vunpack.c.l.b16 %v1007
        %v1362 = vunpack.c.h.b16 %v1007
        %v1363 = vunpack.c.l.b16 %v1008
        %v1364 = vunpack.c.h.b16 %v1008
        %v1365 = vunpack.c.l.b16 %v1009
        %v1366 = vunpack.c.h.b16 %v1009
        %v1367 = vunpack.c.l.b16 %v1010
        %v1368 = vunpack.c.h.b16 %v1010
        %v1369 = vunpack.c.l.b16 %v1011
        %v1370 = vunpack.c.h.b16 %v1011
        %v1371 = vunpack.c.l.b16 %v1012
        %v1372 = vunpack.c.h.b16 %v1012
        %v1373 = vunpack.c.l.b16 %v1013
        %v1374 = vunpack.c.h.b16 %v1013
        %v1375 = vunpack.c.l.b16 %v1014
        %v1376 = vunpack.c.h.b16 %v1014
        %v1377 = vunpack.c.l.b16 %v1015
        %v1378 = vunpack.c.h.b16 %v1015
        %v1379 = vunpack.c.l.b16 %v1016
        %v1380 = vunpack.c.h.b16 %v1016
        %v1381 = vunpack.c.l.b16 %v1017
        %v1382 = vunpack.c.h.b16 %v1017
        %v1383 = vunpack.c.l.b16 %v1018
        %v1384 = vunpack.c.h.b16 %v1018
        %v1385 = vunpack.c.l.b16 %v1019
        %v1386 = vunpack.c.h.b16 %v1019
        %v1387 = vunpack.c.l.b16 %v1020
        %v1388 = vunpack.c.h.b16 %v1020
        %v1389 = vunpack.c.l.b16 %v1021
        %v1390 = vunpack.c.h.b16 %v1021
        %v1391 = vunpack.c.l.b16 %v1022
        %v1392 = vunpack.c.h.b16 %v1022
        %v1393 = vunpack.c.l.b16 %v1023
        %v1394 = vunpack.c.h.b16 %v1023
        %v1395 = vunpack.c.l.b16 %v1024
        %v1396 = vunpack.c.h.b16 %v1024
        %v1397 = vunpack.c.l.b16 %v1025
        %v1398 = vunpack.c.h.b16 %v1025
        %v1399 = vunpack.c.l.b16 %v1026
        %v1400 = vunpack.c.h.b16 %v1026
        %v1401 = vunpack.c.l.b16 %v1027
        %v1402 = vunpack.c.h.b16 %v1027
        %v1403 = vunpack.c.l.b16 %v1028
        %v1404 = vunpack.c.h.b16 %v1028
        %v1405 = vunpack.c.l.b16 %v1029
        %v1406 = vunpack.c.h.b16 %v1029
        %v1407 = vunpack.c.l.b16 %v1030
        %v1408 = vunpack.c.h.b16 %v1030
        %v1409 = vunpack.c.l.b16 %v1031
        %v1410 = vunpack.c.h.b16 %v1031
        %v1411 = vunpack.c.l.b16 %v1032
        %v1412 = vunpack.c.h.b16 %v1032
        %v1413 = vunpack.c.l.b16 %v1033
        %v1414 = vunpack.c.h.b16 %v1033
        %v1415 = vunpack.c.l.b16 %v1034
        %v1416 = vunpack.c.h.b16 %v1034
        %v1417 = vunpack.c.l.b16 %v1035
        %v1418 = vunpack.c.h.b16 %v1035
        %v1419 = vunpack.c.l.b16 %v1036
        %v1420 = vunpack.c.h.b16 %v1036
        %v1421 = vunpack.c.l.b16 %v1037
        %v1422 = vunpack.c.h.b16 %v1037
        %v1423 = vpack.c.b16 %v1237, %v1231
        %v1424 = vpack.c.b16 %v1238, %v1232
        %v1425 = vpack.c.b16 %v1239, %v1233
        %v1426 = vpack.c.b16 %v1240, %v1234
        %v1427 = vpack.c.b16 %v1241, %v1235
        %v1428 = vpack.c.b16 %v1242, %v1236
        %v1429 = vpack.c.b16 %v1249, %v1243
        %v1430 = vpack.c.b16 %v1250, %v1244
        %v1431 = vpack.c.b16 %v1251, %v1245
        %v1432 = vpack.c.b16 %v1252, %v1246
        %v1433 = vpack.c.b16 %v1253, %v1247
        %v1434 = vpack.c.b16 %v1254, %v1248
        %v1435 = vpack.c.b16 %v1261, %v1255
        %v1436 = vpack.c.b16 %v1262, %v1256
        %v1437 = vpack.c.b16 %v1263, %v1257
        %v1438 = vpack.c.b16 %v1264, %v1258
        %v1439 = vpack.c.b16 %v1265, %v1259
        %v1440 = vpack.c.b16 %v1266, %v1260
        %v1441 = vpack.c.b16 %v1273, %v1267
        %v1442 = vpack.c.b16 %v1274, %v1268
        %v1443 = vpack.c.b16 %v1275, %v1269
        %v1444 = vpack.c.b16 %v1276, %v1270
        %v1445 = vpack.c.b16 %v1277, %v1271
        %v1446 = vpack.c.b16 %v1278, %v1272
        %v1447 = vpack.c.b16 %v1285, %v1279
        %v1448 = vpack.c.b16 %v1286, %v1280
        %v1449 = vpack.c.b16 %v1287, %v1281
        %v1450 = vpack.c.b16 %v1288, %v1282
        %v1451 = vpack.c.b16 %v1289, %v1283
        %v1452 = vpack.c.b16 %v1290, %v1284
        %v1453 = vpack.c.b16 %v1297, %v1291
        %v1454 = vpack.c.b16 %v1298, %v1292
        %v1455 = vpack.c.b16 %v1299, %v1293
        %v1456 = vpack.c.b16 %v1300, %v1294
        %v1457 = vpack.c.b16 %v1301, %v1295
        %v1458 = vpack.c.b16 %v1302, %v1296
        %v1459 = vpack.c.b16 %v1309, %v1303
        %v1460 = vpack.c.b16 %v1310, %v1304
        %v1461 = vpack.c.b16 %v1311, %v1305
        %v1462 = vpack.c.b16 %v1312, %v1306
        %v1463 = vpack.c.b16 %v1313, %v1307
        %v1464 = vpack.c.b16 %v1314, %v1308
        %v1465 = vpack.c.b16 %v1321, %v1315
        %v1466 = vpack.c.b16 %v1322, %v1316
        %v1467 = vpack.c.b16 %v1323, %v1317
        %v1468 = vpack.c.b16 %v1324, %v1318
        %v1469 = vpack.c.b16 %v1325, %v1319
        %v1470 = vpack.c.b16 %v1326, %v1320
        %v1471 = vpack.c.b16 %v1333, %v1327
        %v1472 = vpack.c.b16 %v1334, %v1328
        %v1473 = vpack.c.b16 %v1335, %v1329
        %v1474 = vpack.c.b16 %v1336, %v1330
        %v1475 = vpack.c.b16 %v1337, %v1331
        %v1476 = vpack.c.b16 %v1338, %v1332
        %v1477 = vpack.c.b16 %v1345, %v1339
        %v1478 = vpack.c.b16 %v1346, %v1340
        %v1479 = vpack.c.b16 %v1347, %v1341
        %v1480 = vpack.c.b16 %v1348, %v1342
        %v1481 = vpack.c.b16 %v1349, %v1343
        %v1482 = vpack.c.b16 %v1350, %v1344
        %v1483 = vpack.c.b16 %v1357, %v1351
        %v1484 = vpack.c.b16 %v1358, %v1352
        %v1485 = vpack.c.b16 %v1359, %v1353
        %v1486 = vpack.c.b16 %v1360, %v1354
        %v1487 = vpack.c.b16 %v1361, %v1355
        %v1488 = vpack.c.b16 %v1362, %v1356
        %v1489 = vpack.c.b16 %v1369, %v1363
        %v1490 = vpack.c.b16 %v1370, %v1364
        %v1491 = vpack.c.b16 %v1371, %v1365
        %v1492 = vpack.c.b16 %v1372, %v1366
        %v1493 = vpack.c.b16 %v1373, %v1367
        %v1494 = vpack.c.b16 %v1374, %v1368
        %v1495 = vpack.c.b16 %v1381, %v1375
        %v1496 = vpack.c.b16 %v1382, %v1376
        %v1497 = vpack.c.b16 %v1383, %v1377
        %v1498 = vpack.c.b16 %v1384, %v1378
        %v1499 = vpack.c.b16 %v1385, %v1379
        %v1500 = vpack.c.b16 %v1386, %v1380
        %v1501 = vpack.c.b16 %v1393, %v1387
        %v1502 = vpack.c.b16 %v1394, %v1388
        %v1503 = vpack.c.b16 %v1395, %v1389
        %v1504 = vpack.c.b16 %v1396, %v1390
        %v1505 = vpack.c.b16 %v1397, %v1391
        %v1506 = vpack.c.b16 %v1398, %v1392
        %v1507 = vpack.c.b16 %v1405, %v1399
        %v1508 = vpack.c.b16 %v1406, %v1400
        %v1509 = vpack.c.b16 %v1407, %v1401
        %v1510 = vpack.c.b16 %v1408, %v1402
        %v1511 = vpack.c.b16 %v1409, %v1403
        %v1512 = vpack.c.b16 %v1410, %v1404
        %v1513 = vpack.c.b16 %v1417, %v1411
        %v1514 = vpack.c.b16 %v1418, %v1412
        %v1515 = vpack.c.b16 %v1419, %v1413
        %v1516 = vpack.c.b16 %v1420, %v1414
        %v1517 = vpack.c.b16 %v1421, %v1415
        %v1518 = vpack.c.b16 %v1422, %v1416
        %1615 = vmatpush.bf16.msra.mxu0 %v1465
        %1616 = vmatpush.bf16.msra.mxu0 %v1459
        %1617 = vmatpush.bf16.msra.mxu0 %v1453
        %1618 = vmatpush.bf16.msra.mxu0 %v1447
        %1619 = vmatpush.bf16.msra.mxu0 %v1441
        %1620 = vmatpush.bf16.msra.mxu0 %v1435
        %1621 = vmatpush.bf16.msra.mxu0 %v1429
        %1622 = vmatpush.bf16.msra.mxu0 %v1423
        %1623 = vmatmul.bf16.gmra.mxu0 %v1119
        %v1624 = vpop.f32.mrf.mxu0
        %v1625 = vadd.f32 %v1123, %v1624
        %v1626 = vpop.f32.mrf.mxu0
        %v1627 = vadd.f32 %v1123, %v1626
        %1628 = vdwg.mxu0
        %1629 = vmatpush.bf16.msra.mxu0 %v1513
        %1630 = vmatpush.bf16.msra.mxu0 %v1507
        %1631 = vmatpush.bf16.msra.mxu0 %v1501
        %1632 = vmatpush.bf16.msra.mxu0 %v1495
        %1633 = vmatpush.bf16.msra.mxu0 %v1489
        %1634 = vmatpush.bf16.msra.mxu0 %v1483
        %1635 = vmatpush.bf16.msra.mxu0 %v1477
        %1636 = vmatpush.bf16.msra.mxu0 %v1471
        %1637 = vmatmul.bf16.gmra.mxu0 %v1120
        %v1638 = vpop.f32.mrf.mxu0
        %v1639 = vadd.f32 %v1625, %v1638
        %v1640 = vpop.f32.mrf.mxu0
        %v1641 = vadd.f32 %v1627, %v1640
        %1642 = vdwg.mxu0
        %1643 = vmatpush.bf16.msra.mxu0 %v1466
        %1644 = vmatpush.bf16.msra.mxu0 %v1460
        %1645 = vmatpush.bf16.msra.mxu0 %v1454
        %1646 = vmatpush.bf16.msra.mxu0 %v1448
        %1647 = vmatpush.bf16.msra.mxu0 %v1442
        %1648 = vmatpush.bf16.msra.mxu0 %v1436
        %1649 = vmatpush.bf16.msra.mxu0 %v1430
        %1650 = vmatpush.bf16.msra.mxu0 %v1424
        %1651 = vmatmul.bf16.gmra.mxu0 %v1119
        %v1652 = vpop.f32.mrf.mxu0
        %v1653 = vadd.f32 %v1124, %v1652
        %v1654 = vpop.f32.mrf.mxu0
        %v1655 = vadd.f32 %v1124, %v1654
        %1656 = vdwg.mxu0
        %1657 = vmatpush.bf16.msra.mxu0 %v1514
        %1658 = vmatpush.bf16.msra.mxu0 %v1508
        %1659 = vmatpush.bf16.msra.mxu0 %v1502
        %1660 = vmatpush.bf16.msra.mxu0 %v1496
        %1661 = vmatpush.bf16.msra.mxu0 %v1490
        %1662 = vmatpush.bf16.msra.mxu0 %v1484
        %1663 = vmatpush.bf16.msra.mxu0 %v1478
        %1664 = vmatpush.bf16.msra.mxu0 %v1472
        %1665 = vmatmul.bf16.gmra.mxu0 %v1120
        %v1666 = vpop.f32.mrf.mxu0
        %v1667 = vadd.f32 %v1653, %v1666
        %v1668 = vpop.f32.mrf.mxu0
        %v1669 = vadd.f32 %v1655, %v1668
        %1670 = vdwg.mxu0
        %1671 = vmatpush.bf16.msra.mxu0 %v1467
        %1672 = vmatpush.bf16.msra.mxu0 %v1461
        %1673 = vmatpush.bf16.msra.mxu0 %v1455
        %1674 = vmatpush.bf16.msra.mxu0 %v1449
        %1675 = vmatpush.bf16.msra.mxu0 %v1443
        %1676 = vmatpush.bf16.msra.mxu0 %v1437
        %1677 = vmatpush.bf16.msra.mxu0 %v1431
        %1678 = vmatpush.bf16.msra.mxu0 %v1425
        %1679 = vmatmul.bf16.gmra.mxu0 %v1119
        %v1680 = vpop.f32.mrf.mxu0
        %v1681 = vadd.f32 %v1125, %v1680
        %v1682 = vpop.f32.mrf.mxu0
        %v1683 = vadd.f32 %v1125, %v1682
        %1684 = vdwg.mxu0
        %1685 = vmatpush.bf16.msra.mxu0 %v1515
        %1686 = vmatpush.bf16.msra.mxu0 %v1509
        %1687 = vmatpush.bf16.msra.mxu0 %v1503
        %1688 = vmatpush.bf16.msra.mxu0 %v1497
        %1689 = vmatpush.bf16.msra.mxu0 %v1491
        %1690 = vmatpush.bf16.msra.mxu0 %v1485
        %1691 = vmatpush.bf16.msra.mxu0 %v1479
        %1692 = vmatpush.bf16.msra.mxu0 %v1473
        %1693 = vmatmul.bf16.gmra.mxu0 %v1120
        %v1694 = vpop.f32.mrf.mxu0
        %v1695 = vadd.f32 %v1681, %v1694
        %v1696 = vpop.f32.mrf.mxu0
        %v1697 = vadd.f32 %v1683, %v1696
        %1698 = vdwg.mxu0
        %1699 = vmatpush.bf16.msra.mxu0 %v1468
        %1700 = vmatpush.bf16.msra.mxu0 %v1462
        %1701 = vmatpush.bf16.msra.mxu0 %v1456
        %1702 = vmatpush.bf16.msra.mxu0 %v1450
        %1703 = vmatpush.bf16.msra.mxu0 %v1444
        %1704 = vmatpush.bf16.msra.mxu0 %v1438
        %1705 = vmatpush.bf16.msra.mxu0 %v1432
        %1706 = vmatpush.bf16.msra.mxu0 %v1426
        %1707 = vmatmul.bf16.gmra.mxu0 %v1119
        %v1708 = vpop.f32.mrf.mxu0
        %v1709 = vadd.f32 %v1126, %v1708
        %v1710 = vpop.f32.mrf.mxu0
        %v1711 = vadd.f32 %v1126, %v1710
        %1712 = vdwg.mxu0
        %1713 = vmatpush.bf16.msra.mxu0 %v1516
        %1714 = vmatpush.bf16.msra.mxu0 %v1510
        %1715 = vmatpush.bf16.msra.mxu0 %v1504
        %1716 = vmatpush.bf16.msra.mxu0 %v1498
        %1717 = vmatpush.bf16.msra.mxu0 %v1492
        %1718 = vmatpush.bf16.msra.mxu0 %v1486
        %1719 = vmatpush.bf16.msra.mxu0 %v1480
        %1720 = vmatpush.bf16.msra.mxu0 %v1474
        %1721 = vmatmul.bf16.gmra.mxu0 %v1120
        %v1722 = vpop.f32.mrf.mxu0
        %v1723 = vadd.f32 %v1709, %v1722
        %v1724 = vpop.f32.mrf.mxu0
        %v1725 = vadd.f32 %v1711, %v1724
        %1726 = vdwg.mxu0
        %1727 = vmatpush.bf16.msra.mxu0 %v1469
        %1728 = vmatpush.bf16.msra.mxu0 %v1463
        %1729 = vmatpush.bf16.msra.mxu0 %v1457
        %1730 = vmatpush.bf16.msra.mxu0 %v1451
        %1731 = vmatpush.bf16.msra.mxu0 %v1445
        %1732 = vmatpush.bf16.msra.mxu0 %v1439
        %1733 = vmatpush.bf16.msra.mxu0 %v1433
        %1734 = vmatpush.bf16.msra.mxu0 %v1427
        %1735 = vmatmul.bf16.gmra.mxu0 %v1119
        %v1736 = vpop.f32.mrf.mxu0
        %v1737 = vadd.f32 %v1127, %v1736
        %v1738 = vpop.f32.mrf.mxu0
        %v1739 = vadd.f32 %v1127, %v1738
        %1740 = vdwg.mxu0
        %1741 = vmatpush.bf16.msra.mxu0 %v1517
        %1742 = vmatpush.bf16.msra.mxu0 %v1511
        %1743 = vmatpush.bf16.msra.mxu0 %v1505
        %1744 = vmatpush.bf16.msra.mxu0 %v1499
        %1745 = vmatpush.bf16.msra.mxu0 %v1493
        %1746 = vmatpush.bf16.msra.mxu0 %v1487
        %1747 = vmatpush.bf16.msra.mxu0 %v1481
        %1748 = vmatpush.bf16.msra.mxu0 %v1475
        %1749 = vmatmul.bf16.gmra.mxu0 %v1120
        %v1750 = vpop.f32.mrf.mxu0
        %v1751 = vadd.f32 %v1737, %v1750
        %v1752 = vpop.f32.mrf.mxu0
        %v1753 = vadd.f32 %v1739, %v1752
        %1754 = vdwg.mxu0
        %1755 = vmatpush.bf16.msra.mxu0 %v1470
        %1756 = vmatpush.bf16.msra.mxu0 %v1464
        %1757 = vmatpush.bf16.msra.mxu0 %v1458
        %1758 = vmatpush.bf16.msra.mxu0 %v1452
        %1759 = vmatpush.bf16.msra.mxu0 %v1446
        %1760 = vmatpush.bf16.msra.mxu0 %v1440
        %1761 = vmatpush.bf16.msra.mxu0 %v1434
        %1762 = vmatpush.bf16.msra.mxu0 %v1428
        %1763 = vmatmul.bf16.gmra.mxu0 %v1119
        %v1764 = vpop.f32.mrf.mxu0
        %v1765 = vadd.f32 %v1128, %v1764
        %v1766 = vpop.f32.mrf.mxu0
        %v1767 = vadd.f32 %v1128, %v1766
        %1768 = vdwg.mxu0
        %1769 = vmatpush.bf16.msra.mxu0 %v1518
        %1770 = vmatpush.bf16.msra.mxu0 %v1512
        %1771 = vmatpush.bf16.msra.mxu0 %v1506
        %1772 = vmatpush.bf16.msra.mxu0 %v1500
        %1773 = vmatpush.bf16.msra.mxu0 %v1494
        %1774 = vmatpush.bf16.msra.mxu0 %v1488
        %1775 = vmatpush.bf16.msra.mxu0 %v1482
        %1776 = vmatpush.bf16.msra.mxu0 %v1476
        %1777 = vmatmul.bf16.gmra.mxu0 %v1120
        %v1778 = vpop.f32.mrf.mxu0
        %v1779 = vadd.f32 %v1765, %v1778
        %v1780 = vpop.f32.mrf.mxu0
        %v1781 = vadd.f32 %v1767, %v1780
        %1782 = vdwg.mxu0
        %v1783 = vlaneseq
        %v1784 = vand.u32 %v1783, 127
        %vm1785 = vcmp.lt.s32.totalorder %v1784, 5
        %vm1786 = vcmask 261120
        %v1788 = vsel %vm1786, %v1639, 0
        %v1791 = vsel %vm1786, %v1695, 0
        %1793 = vmatpush.xpose.msra.mxu0 0.0
        %1794 = vmatpush.xpose.msra.mxu0 0.0
        %1795 = vmatpush.xpose.msra.mxu0 0.0
        %1796 = vmatpush.xpose.msra.mxu0 0.0
        %1797 = vmatpush.xpose.msra.mxu0 0.0
        %1798 = vmatpush.xpose.msra.mxu0 0.0
        %1799 = vmatpush.xpose.msra.mxu0 0.0
        %1800 = vmatpush.xpose.msra.mxu0 0.0
        %1801 = vmatpush.xpose.msra.mxu0 0.0
        %1802 = vmatpush.xpose.msra.mxu0 0.0
        %1803 = vmatpush.xpose.msra.mxu0 0.0
        %1804 = vmatpush.xpose.msra.mxu0 0.0
        %1805 = vmatpush.xpose.msra.mxu0 0.0
        %1806 = vmatpush.xpose.msra.mxu0 0.0
        %1807 = vmatpush.xpose.msra.mxu0 0.0
        %1808 = vmatpush.xpose.msra.mxu0 %v1791
        %1809 = vmatmul.f32.gmra.mxu0 %v1788
        %v1810 = vpop.f32.mrf.mxu0
        %v1811 = vadd.f32 0.0, %v1810
        %1812 = vdwg.mxu0
        %v1814 = vsel %vm1786, %v1641, 0
        %v1817 = vsel %vm1786, %v1697, 0
        %1819 = vmatpush.xpose.msra.mxu0 0.0
        %1820 = vmatpush.xpose.msra.mxu0 0.0
        %1821 = vmatpush.xpose.msra.mxu0 0.0
        %1822 = vmatpush.xpose.msra.mxu0 0.0
        %1823 = vmatpush.xpose.msra.mxu0 0.0
        %1824 = vmatpush.xpose.msra.mxu0 0.0
        %1825 = vmatpush.xpose.msra.mxu0 0.0
        %1826 = vmatpush.xpose.msra.mxu0 0.0
        %1827 = vmatpush.xpose.msra.mxu0 0.0
        %1828 = vmatpush.xpose.msra.mxu0 0.0
        %1829 = vmatpush.xpose.msra.mxu0 0.0
        %1830 = vmatpush.xpose.msra.mxu0 0.0
        %1831 = vmatpush.xpose.msra.mxu0 0.0
        %1832 = vmatpush.xpose.msra.mxu0 0.0
        %1833 = vmatpush.xpose.msra.mxu0 0.0
        %1834 = vmatpush.xpose.msra.mxu0 %v1817
        %1835 = vmatmul.f32.gmra.mxu0 %v1814
        %v1836 = vpop.f32.mrf.mxu0
        %v1837 = vadd.f32 0.0, %v1836
        %1838 = vdwg.mxu0
        %v1839 = vmul.f32 %v1811, 0.17677669
        %v1840 = vmul.f32 %v1837, 0.17677669
        %v1841 = vsel %vm1785, 1, 0
        %vm1842 = vcmp.eq.s32.totalorder %v1841, 1
        %v1843 = vsel %vm1842, %v1839, -1e+30
        %v1844 = vsel %vm1842, %v1840, -1e+30
        %vm1845 = vcmask 64512
        %v1846 = vsel %vm1845, %v1843, -inf
        %1847 = vmax.xlane.f32.xlu0 %v1846
        %v1848 = vpop.xlane.xlu0 %1847
        %v1849 = vsel %vm1845, %v1844, -inf
        %1850 = vmax.xlane.f32.xlu0 %v1849
        %v1851 = vpop.xlane.xlu0 %1850
        %v1852 = vsub.f32 %v1843, %v1848
        %v1853 = vsub.f32 %v1844, %v1851
        %v1854 = vmul.f32 %v1852, 1.442695
        %v1855 = vpow.pop %v1854
        %v1856 = vmul.f32 %v1853, 1.442695
        %v1857 = vpow.pop %v1856
        %v1858 = vsel %vm1845, %v1855, 0.0
        %1859 = vadd.xlane.f32.xlu0 %v1858
        %v1860 = vpop.xlane.xlu0 %1859
        %v1861 = vsel %vm1845, %v1857, 0.0
        %1862 = vadd.xlane.f32.xlu0 %v1861
        %v1863 = vpop.xlane.xlu0 %1862
        %v1864 = vrcp.pop %v1860
        %v1865 = vrcp.pop %v1863
        %v1866 = vmul.f32 %v1855, %v1864
        %v1867 = vmul.f32 %v1857, %v1865
        %v1869 = vsel %vm1845, %v1866, 0
        %1871 = vmatpush.msra.mxu0 0.0
        %1872 = vmatpush.msra.mxu0 0.0
        %1873 = vmatpush.msra.mxu0 0.0
        %1874 = vmatpush.msra.mxu0 0.0
        %1875 = vmatpush.msra.mxu0 0.0
        %1876 = vmatpush.msra.mxu0 0.0
        %1877 = vmatpush.msra.mxu0 0.0
        %1878 = vmatpush.msra.mxu0 0.0
        %1879 = vmatpush.msra.mxu0 0.0
        %1880 = vmatpush.msra.mxu0 0.0
        %1881 = vmatpush.msra.mxu0 0.0
        %1882 = vmatpush.msra.mxu0 0.0
        %1883 = vmatpush.msra.mxu0 0.0
        %1884 = vmatpush.msra.mxu0 0.0
        %1885 = vmatpush.msra.mxu0 0.0
        %1886 = vmatpush.msra.mxu0 %v1751
        %1887 = vmatmul.f32.gmra.mxu0 %v1869
        %v1888 = vpop.f32.mrf.mxu0
        %v1889 = vadd.f32 0.0, %v1888
        %1890 = vdwg.mxu0
        %v1892 = vsel %vm1845, %v1867, 0
        %1894 = vmatpush.msra.mxu0 0.0
        %1895 = vmatpush.msra.mxu0 0.0
        %1896 = vmatpush.msra.mxu0 0.0
        %1897 = vmatpush.msra.mxu0 0.0
        %1898 = vmatpush.msra.mxu0 0.0
        %1899 = vmatpush.msra.mxu0 0.0
        %1900 = vmatpush.msra.mxu0 0.0
        %1901 = vmatpush.msra.mxu0 0.0
        %1902 = vmatpush.msra.mxu0 0.0
        %1903 = vmatpush.msra.mxu0 0.0
        %1904 = vmatpush.msra.mxu0 0.0
        %1905 = vmatpush.msra.mxu0 0.0
        %1906 = vmatpush.msra.mxu0 0.0
        %1907 = vmatpush.msra.mxu0 0.0
        %1908 = vmatpush.msra.mxu0 0.0
        %1909 = vmatpush.msra.mxu0 %v1753
        %1910 = vmatmul.f32.gmra.mxu0 %v1892
        %v1911 = vpop.f32.mrf.mxu0
        %v1912 = vadd.f32 0.0, %v1911
        %1913 = vdwg.mxu0
        %1914 = vrot.lane.b32.xlu0 %v1639, 96
        %v1915 = vpop.permute.xlu0 %1914
        %1916 = vrot.lane.b32.xlu0 %v1695, 96
        %v1917 = vpop.permute.xlu0 %1916
        %v1918 = vsel %vm1786, %v1915, 0
        %v1920 = vsel %vm1786, %v1917, 0
        %1922 = vmatpush.xpose.msra.mxu0 0.0
        %1923 = vmatpush.xpose.msra.mxu0 0.0
        %1924 = vmatpush.xpose.msra.mxu0 0.0
        %1925 = vmatpush.xpose.msra.mxu0 0.0
        %1926 = vmatpush.xpose.msra.mxu0 0.0
        %1927 = vmatpush.xpose.msra.mxu0 0.0
        %1928 = vmatpush.xpose.msra.mxu0 0.0
        %1929 = vmatpush.xpose.msra.mxu0 0.0
        %1930 = vmatpush.xpose.msra.mxu0 0.0
        %1931 = vmatpush.xpose.msra.mxu0 0.0
        %1932 = vmatpush.xpose.msra.mxu0 0.0
        %1933 = vmatpush.xpose.msra.mxu0 0.0
        %1934 = vmatpush.xpose.msra.mxu0 0.0
        %1935 = vmatpush.xpose.msra.mxu0 0.0
        %1936 = vmatpush.xpose.msra.mxu0 0.0
        %1937 = vmatpush.xpose.msra.mxu0 %v1920
        %1938 = vmatmul.f32.gmra.mxu0 %v1918
        %v1939 = vpop.f32.mrf.mxu0
        %v1940 = vadd.f32 0.0, %v1939
        %1941 = vdwg.mxu0
        %1942 = vrot.lane.b32.xlu0 %v1641, 96
        %v1943 = vpop.permute.xlu0 %1942
        %1944 = vrot.lane.b32.xlu0 %v1697, 96
        %v1945 = vpop.permute.xlu0 %1944
        %v1946 = vsel %vm1786, %v1943, 0
        %v1948 = vsel %vm1786, %v1945, 0
        %1950 = vmatpush.xpose.msra.mxu0 0.0
        %1951 = vmatpush.xpose.msra.mxu0 0.0
        %1952 = vmatpush.xpose.msra.mxu0 0.0
        %1953 = vmatpush.xpose.msra.mxu0 0.0
        %1954 = vmatpush.xpose.msra.mxu0 0.0
        %1955 = vmatpush.xpose.msra.mxu0 0.0
        %1956 = vmatpush.xpose.msra.mxu0 0.0
        %1957 = vmatpush.xpose.msra.mxu0 0.0
        %1958 = vmatpush.xpose.msra.mxu0 0.0
        %1959 = vmatpush.xpose.msra.mxu0 0.0
        %1960 = vmatpush.xpose.msra.mxu0 0.0
        %1961 = vmatpush.xpose.msra.mxu0 0.0
        %1962 = vmatpush.xpose.msra.mxu0 0.0
        %1963 = vmatpush.xpose.msra.mxu0 0.0
        %1964 = vmatpush.xpose.msra.mxu0 0.0
        %1965 = vmatpush.xpose.msra.mxu0 %v1948
        %1966 = vmatmul.f32.gmra.mxu0 %v1946
        %v1967 = vpop.f32.mrf.mxu0
        %v1968 = vadd.f32 0.0, %v1967
        %1969 = vdwg.mxu0
        %v1970 = vmul.f32 %v1940, 0.17677669
        %v1971 = vmul.f32 %v1968, 0.17677669
        %v1972 = vsel %vm1842, %v1970, -1e+30
        %v1973 = vsel %vm1842, %v1971, -1e+30
        %v1974 = vsel %vm1845, %v1972, -inf
        %1975 = vmax.xlane.f32.xlu0 %v1974
        %v1976 = vpop.xlane.xlu0 %1975
        %v1977 = vsel %vm1845, %v1973, -inf
        %1978 = vmax.xlane.f32.xlu0 %v1977
        %v1979 = vpop.xlane.xlu0 %1978
        %v1980 = vsub.f32 %v1972, %v1976
        %v1981 = vsub.f32 %v1973, %v1979
        %v1982 = vmul.f32 %v1980, 1.442695
        %v1983 = vpow.pop %v1982
        %v1984 = vmul.f32 %v1981, 1.442695
        %v1985 = vpow.pop %v1984
        %v1986 = vsel %vm1845, %v1983, 0.0
        %1987 = vadd.xlane.f32.xlu0 %v1986
        %v1988 = vpop.xlane.xlu0 %1987
        %v1989 = vsel %vm1845, %v1985, 0.0
        %1990 = vadd.xlane.f32.xlu0 %v1989
        %v1991 = vpop.xlane.xlu0 %1990
        %v1992 = vrcp.pop %v1988
        %v1993 = vrcp.pop %v1991
        %v1994 = vmul.f32 %v1983, %v1992
        %v1995 = vmul.f32 %v1985, %v1993
        %1997 = vrot.lane.b32.xlu0 %v1751, 96
        %v1998 = vpop.permute.xlu0 %1997
        %v2001 = vsel %vm1845, %v1994, 0
        %2003 = vmatpush.msra.mxu0 0.0
        %2004 = vmatpush.msra.mxu0 0.0
        %2005 = vmatpush.msra.mxu0 0.0
        %2006 = vmatpush.msra.mxu0 0.0
        %2007 = vmatpush.msra.mxu0 0.0
        %2008 = vmatpush.msra.mxu0 0.0
        %2009 = vmatpush.msra.mxu0 0.0
        %2010 = vmatpush.msra.mxu0 0.0
        %2011 = vmatpush.msra.mxu0 0.0
        %2012 = vmatpush.msra.mxu0 0.0
        %2013 = vmatpush.msra.mxu0 0.0
        %2014 = vmatpush.msra.mxu0 0.0
        %2015 = vmatpush.msra.mxu0 0.0
        %2016 = vmatpush.msra.mxu0 0.0
        %2017 = vmatpush.msra.mxu0 0.0
        %2018 = vmatpush.msra.mxu0 %v1998
        %2019 = vmatmul.f32.gmra.mxu0 %v2001
        %v2020 = vpop.f32.mrf.mxu0
        %v2021 = vadd.f32 0.0, %v2020
        %2022 = vdwg.mxu0
        %2024 = vrot.lane.b32.xlu0 %v1753, 96
        %v2025 = vpop.permute.xlu0 %2024
        %v2028 = vsel %vm1845, %v1995, 0
        %2030 = vmatpush.msra.mxu0 0.0
        %2031 = vmatpush.msra.mxu0 0.0
        %2032 = vmatpush.msra.mxu0 0.0
        %2033 = vmatpush.msra.mxu0 0.0
        %2034 = vmatpush.msra.mxu0 0.0
        %2035 = vmatpush.msra.mxu0 0.0
        %2036 = vmatpush.msra.mxu0 0.0
        %2037 = vmatpush.msra.mxu0 0.0
        %2038 = vmatpush.msra.mxu0 0.0
        %2039 = vmatpush.msra.mxu0 0.0
        %2040 = vmatpush.msra.mxu0 0.0
        %2041 = vmatpush.msra.mxu0 0.0
        %2042 = vmatpush.msra.mxu0 0.0
        %2043 = vmatpush.msra.mxu0 0.0
        %2044 = vmatpush.msra.mxu0 0.0
        %2045 = vmatpush.msra.mxu0 %v2025
        %2046 = vmatmul.f32.gmra.mxu0 %v2028
        %v2047 = vpop.f32.mrf.mxu0
        %v2048 = vadd.f32 0.0, %v2047
        %2049 = vdwg.mxu0
        %2050 = vrot.lane.b32.xlu0 %v1639, 64
        %v2051 = vpop.permute.xlu0 %2050
        %2052 = vrot.lane.b32.xlu0 %v1695, 64
        %v2053 = vpop.permute.xlu0 %2052
        %v2054 = vsel %vm1786, %v2051, 0
        %v2056 = vsel %vm1786, %v2053, 0
        %2058 = vmatpush.xpose.msra.mxu0 0.0
        %2059 = vmatpush.xpose.msra.mxu0 0.0
        %2060 = vmatpush.xpose.msra.mxu0 0.0
        %2061 = vmatpush.xpose.msra.mxu0 0.0
        %2062 = vmatpush.xpose.msra.mxu0 0.0
        %2063 = vmatpush.xpose.msra.mxu0 0.0
        %2064 = vmatpush.xpose.msra.mxu0 0.0
        %2065 = vmatpush.xpose.msra.mxu0 0.0
        %2066 = vmatpush.xpose.msra.mxu0 0.0
        %2067 = vmatpush.xpose.msra.mxu0 0.0
        %2068 = vmatpush.xpose.msra.mxu0 0.0
        %2069 = vmatpush.xpose.msra.mxu0 0.0
        %2070 = vmatpush.xpose.msra.mxu0 0.0
        %2071 = vmatpush.xpose.msra.mxu0 0.0
        %2072 = vmatpush.xpose.msra.mxu0 0.0
        %2073 = vmatpush.xpose.msra.mxu0 %v2056
        %2074 = vmatmul.f32.gmra.mxu0 %v2054
        %v2075 = vpop.f32.mrf.mxu0
        %v2076 = vadd.f32 0.0, %v2075
        %2077 = vdwg.mxu0
        %2078 = vrot.lane.b32.xlu0 %v1641, 64
        %v2079 = vpop.permute.xlu0 %2078
        %2080 = vrot.lane.b32.xlu0 %v1697, 64
        %v2081 = vpop.permute.xlu0 %2080
        %v2082 = vsel %vm1786, %v2079, 0
        %v2084 = vsel %vm1786, %v2081, 0
        %2086 = vmatpush.xpose.msra.mxu0 0.0
        %2087 = vmatpush.xpose.msra.mxu0 0.0
        %2088 = vmatpush.xpose.msra.mxu0 0.0
        %2089 = vmatpush.xpose.msra.mxu0 0.0
        %2090 = vmatpush.xpose.msra.mxu0 0.0
        %2091 = vmatpush.xpose.msra.mxu0 0.0
        %2092 = vmatpush.xpose.msra.mxu0 0.0
        %2093 = vmatpush.xpose.msra.mxu0 0.0
        %2094 = vmatpush.xpose.msra.mxu0 0.0
        %2095 = vmatpush.xpose.msra.mxu0 0.0
        %2096 = vmatpush.xpose.msra.mxu0 0.0
        %2097 = vmatpush.xpose.msra.mxu0 0.0
        %2098 = vmatpush.xpose.msra.mxu0 0.0
        %2099 = vmatpush.xpose.msra.mxu0 0.0
        %2100 = vmatpush.xpose.msra.mxu0 0.0
        %2101 = vmatpush.xpose.msra.mxu0 %v2084
        %2102 = vmatmul.f32.gmra.mxu0 %v2082
        %v2103 = vpop.f32.mrf.mxu0
        %v2104 = vadd.f32 0.0, %v2103
        %2105 = vdwg.mxu0
        %v2106 = vmul.f32 %v2076, 0.17677669
        %v2107 = vmul.f32 %v2104, 0.17677669
        %v2108 = vsel %vm1842, %v2106, -1e+30
        %v2109 = vsel %vm1842, %v2107, -1e+30
        %v2110 = vsel %vm1845, %v2108, -inf
        %2111 = vmax.xlane.f32.xlu0 %v2110
        %v2112 = vpop.xlane.xlu0 %2111
        %v2113 = vsel %vm1845, %v2109, -inf
        %2114 = vmax.xlane.f32.xlu0 %v2113
        %v2115 = vpop.xlane.xlu0 %2114
        %v2116 = vsub.f32 %v2108, %v2112
        %v2117 = vsub.f32 %v2109, %v2115
        %v2118 = vmul.f32 %v2116, 1.442695
        %v2119 = vpow.pop %v2118
        %v2120 = vmul.f32 %v2117, 1.442695
        %v2121 = vpow.pop %v2120
        %v2122 = vsel %vm1845, %v2119, 0.0
        %2123 = vadd.xlane.f32.xlu0 %v2122
        %v2124 = vpop.xlane.xlu0 %2123
        %v2125 = vsel %vm1845, %v2121, 0.0
        %2126 = vadd.xlane.f32.xlu0 %v2125
        %v2127 = vpop.xlane.xlu0 %2126
        %v2128 = vrcp.pop %v2124
        %v2129 = vrcp.pop %v2127
        %v2130 = vmul.f32 %v2119, %v2128
        %v2131 = vmul.f32 %v2121, %v2129
        %2132 = vrot.lane.b32.xlu0 %v1751, 64
        %v2133 = vpop.permute.xlu0 %2132
        %v2136 = vsel %vm1845, %v2130, 0
        %2138 = vmatpush.msra.mxu0 0.0
        %2139 = vmatpush.msra.mxu0 0.0
        %2140 = vmatpush.msra.mxu0 0.0
        %2141 = vmatpush.msra.mxu0 0.0
        %2142 = vmatpush.msra.mxu0 0.0
        %2143 = vmatpush.msra.mxu0 0.0
        %2144 = vmatpush.msra.mxu0 0.0
        %2145 = vmatpush.msra.mxu0 0.0
        %2146 = vmatpush.msra.mxu0 0.0
        %2147 = vmatpush.msra.mxu0 0.0
        %2148 = vmatpush.msra.mxu0 0.0
        %2149 = vmatpush.msra.mxu0 0.0
        %2150 = vmatpush.msra.mxu0 0.0
        %2151 = vmatpush.msra.mxu0 0.0
        %2152 = vmatpush.msra.mxu0 0.0
        %2153 = vmatpush.msra.mxu0 %v2133
        %2154 = vmatmul.f32.gmra.mxu0 %v2136
        %v2155 = vpop.f32.mrf.mxu0
        %v2156 = vadd.f32 0.0, %v2155
        %2157 = vdwg.mxu0
        %2158 = vrot.lane.b32.xlu0 %v1753, 64
        %v2159 = vpop.permute.xlu0 %2158
        %v2162 = vsel %vm1845, %v2131, 0
        %2164 = vmatpush.msra.mxu0 0.0
        %2165 = vmatpush.msra.mxu0 0.0
        %2166 = vmatpush.msra.mxu0 0.0
        %2167 = vmatpush.msra.mxu0 0.0
        %2168 = vmatpush.msra.mxu0 0.0
        %2169 = vmatpush.msra.mxu0 0.0
        %2170 = vmatpush.msra.mxu0 0.0
        %2171 = vmatpush.msra.mxu0 0.0
        %2172 = vmatpush.msra.mxu0 0.0
        %2173 = vmatpush.msra.mxu0 0.0
        %2174 = vmatpush.msra.mxu0 0.0
        %2175 = vmatpush.msra.mxu0 0.0
        %2176 = vmatpush.msra.mxu0 0.0
        %2177 = vmatpush.msra.mxu0 0.0
        %2178 = vmatpush.msra.mxu0 0.0
        %2179 = vmatpush.msra.mxu0 %v2159
        %2180 = vmatmul.f32.gmra.mxu0 %v2162
        %v2181 = vpop.f32.mrf.mxu0
        %v2182 = vadd.f32 0.0, %v2181
        %2183 = vdwg.mxu0
        %2184 = vrot.lane.b32.xlu0 %v1639, 32
        %v2185 = vpop.permute.xlu0 %2184
        %2186 = vrot.lane.b32.xlu0 %v1695, 32
        %v2187 = vpop.permute.xlu0 %2186
        %v2188 = vsel %vm1786, %v2185, 0
        %v2190 = vsel %vm1786, %v2187, 0
        %2192 = vmatpush.xpose.msra.mxu0 0.0
        %2193 = vmatpush.xpose.msra.mxu0 0.0
        %2194 = vmatpush.xpose.msra.mxu0 0.0
        %2195 = vmatpush.xpose.msra.mxu0 0.0
        %2196 = vmatpush.xpose.msra.mxu0 0.0
        %2197 = vmatpush.xpose.msra.mxu0 0.0
        %2198 = vmatpush.xpose.msra.mxu0 0.0
        %2199 = vmatpush.xpose.msra.mxu0 0.0
        %2200 = vmatpush.xpose.msra.mxu0 0.0
        %2201 = vmatpush.xpose.msra.mxu0 0.0
        %2202 = vmatpush.xpose.msra.mxu0 0.0
        %2203 = vmatpush.xpose.msra.mxu0 0.0
        %2204 = vmatpush.xpose.msra.mxu0 0.0
        %2205 = vmatpush.xpose.msra.mxu0 0.0
        %2206 = vmatpush.xpose.msra.mxu0 0.0
        %2207 = vmatpush.xpose.msra.mxu0 %v2190
        %2208 = vmatmul.f32.gmra.mxu0 %v2188
        %v2209 = vpop.f32.mrf.mxu0
        %v2210 = vadd.f32 0.0, %v2209
        %2211 = vdwg.mxu0
        %2212 = vrot.lane.b32.xlu0 %v1641, 32
        %v2213 = vpop.permute.xlu0 %2212
        %2214 = vrot.lane.b32.xlu0 %v1697, 32
        %v2215 = vpop.permute.xlu0 %2214
        %v2216 = vsel %vm1786, %v2213, 0
        %v2218 = vsel %vm1786, %v2215, 0
        %2220 = vmatpush.xpose.msra.mxu0 0.0
        %2221 = vmatpush.xpose.msra.mxu0 0.0
        %2222 = vmatpush.xpose.msra.mxu0 0.0
        %2223 = vmatpush.xpose.msra.mxu0 0.0
        %2224 = vmatpush.xpose.msra.mxu0 0.0
        %2225 = vmatpush.xpose.msra.mxu0 0.0
        %2226 = vmatpush.xpose.msra.mxu0 0.0
        %2227 = vmatpush.xpose.msra.mxu0 0.0
        %2228 = vmatpush.xpose.msra.mxu0 0.0
        %2229 = vmatpush.xpose.msra.mxu0 0.0
        %2230 = vmatpush.xpose.msra.mxu0 0.0
        %2231 = vmatpush.xpose.msra.mxu0 0.0
        %2232 = vmatpush.xpose.msra.mxu0 0.0
        %2233 = vmatpush.xpose.msra.mxu0 0.0
        %2234 = vmatpush.xpose.msra.mxu0 0.0
        %2235 = vmatpush.xpose.msra.mxu0 %v2218
        %2236 = vmatmul.f32.gmra.mxu0 %v2216
        %v2237 = vpop.f32.mrf.mxu0
        %v2238 = vadd.f32 0.0, %v2237
        %2239 = vdwg.mxu0
        %v2240 = vmul.f32 %v2210, 0.17677669
        %v2241 = vmul.f32 %v2238, 0.17677669
        %v2242 = vsel %vm1842, %v2240, -1e+30
        %v2243 = vsel %vm1842, %v2241, -1e+30
        %v2244 = vsel %vm1845, %v2242, -inf
        %2245 = vmax.xlane.f32.xlu0 %v2244
        %v2246 = vpop.xlane.xlu0 %2245
        %v2247 = vsel %vm1845, %v2243, -inf
        %2248 = vmax.xlane.f32.xlu0 %v2247
        %v2249 = vpop.xlane.xlu0 %2248
        %v2250 = vsub.f32 %v2242, %v2246
        %v2251 = vsub.f32 %v2243, %v2249
        %v2252 = vmul.f32 %v2250, 1.442695
        %v2253 = vpow.pop %v2252
        %v2254 = vmul.f32 %v2251, 1.442695
        %v2255 = vpow.pop %v2254
        %v2256 = vsel %vm1845, %v2253, 0.0
        %2257 = vadd.xlane.f32.xlu0 %v2256
        %v2258 = vpop.xlane.xlu0 %2257
        %v2259 = vsel %vm1845, %v2255, 0.0
        %2260 = vadd.xlane.f32.xlu0 %v2259
        %v2261 = vpop.xlane.xlu0 %2260
        %v2262 = vrcp.pop %v2258
        %v2263 = vrcp.pop %v2261
        %v2264 = vmul.f32 %v2253, %v2262
        %v2265 = vmul.f32 %v2255, %v2263
        %2266 = vrot.lane.b32.xlu0 %v1751, 32
        %v2267 = vpop.permute.xlu0 %2266
        %v2270 = vsel %vm1845, %v2264, 0
        %2272 = vmatpush.msra.mxu0 0.0
        %2273 = vmatpush.msra.mxu0 0.0
        %2274 = vmatpush.msra.mxu0 0.0
        %2275 = vmatpush.msra.mxu0 0.0
        %2276 = vmatpush.msra.mxu0 0.0
        %2277 = vmatpush.msra.mxu0 0.0
        %2278 = vmatpush.msra.mxu0 0.0
        %2279 = vmatpush.msra.mxu0 0.0
        %2280 = vmatpush.msra.mxu0 0.0
        %2281 = vmatpush.msra.mxu0 0.0
        %2282 = vmatpush.msra.mxu0 0.0
        %2283 = vmatpush.msra.mxu0 0.0
        %2284 = vmatpush.msra.mxu0 0.0
        %2285 = vmatpush.msra.mxu0 0.0
        %2286 = vmatpush.msra.mxu0 0.0
        %2287 = vmatpush.msra.mxu0 %v2267
        %2288 = vmatmul.f32.gmra.mxu0 %v2270
        %v2289 = vpop.f32.mrf.mxu0
        %v2290 = vadd.f32 0.0, %v2289
        %2291 = vdwg.mxu0
        %2292 = vrot.lane.b32.xlu0 %v1753, 32
        %v2293 = vpop.permute.xlu0 %2292
        %v2296 = vsel %vm1845, %v2265, 0
        %2298 = vmatpush.msra.mxu0 0.0
        %2299 = vmatpush.msra.mxu0 0.0
        %2300 = vmatpush.msra.mxu0 0.0
        %2301 = vmatpush.msra.mxu0 0.0
        %2302 = vmatpush.msra.mxu0 0.0
        %2303 = vmatpush.msra.mxu0 0.0
        %2304 = vmatpush.msra.mxu0 0.0
        %2305 = vmatpush.msra.mxu0 0.0
        %2306 = vmatpush.msra.mxu0 0.0
        %2307 = vmatpush.msra.mxu0 0.0
        %2308 = vmatpush.msra.mxu0 0.0
        %2309 = vmatpush.msra.mxu0 0.0
        %2310 = vmatpush.msra.mxu0 0.0
        %2311 = vmatpush.msra.mxu0 0.0
        %2312 = vmatpush.msra.mxu0 0.0
        %2313 = vmatpush.msra.mxu0 %v2293
        %2314 = vmatmul.f32.gmra.mxu0 %v2296
        %v2315 = vpop.f32.mrf.mxu0
        %v2316 = vadd.f32 0.0, %v2315
        %2317 = vdwg.mxu0
        %v2319 = vsel %vm1786, %v1667, 0
        %v2322 = vsel %vm1786, %v1723, 0
        %2324 = vmatpush.xpose.msra.mxu0 0.0
        %2325 = vmatpush.xpose.msra.mxu0 0.0
        %2326 = vmatpush.xpose.msra.mxu0 0.0
        %2327 = vmatpush.xpose.msra.mxu0 0.0
        %2328 = vmatpush.xpose.msra.mxu0 0.0
        %2329 = vmatpush.xpose.msra.mxu0 0.0
        %2330 = vmatpush.xpose.msra.mxu0 0.0
        %2331 = vmatpush.xpose.msra.mxu0 0.0
        %2332 = vmatpush.xpose.msra.mxu0 0.0
        %2333 = vmatpush.xpose.msra.mxu0 0.0
        %2334 = vmatpush.xpose.msra.mxu0 0.0
        %2335 = vmatpush.xpose.msra.mxu0 0.0
        %2336 = vmatpush.xpose.msra.mxu0 0.0
        %2337 = vmatpush.xpose.msra.mxu0 0.0
        %2338 = vmatpush.xpose.msra.mxu0 0.0
        %2339 = vmatpush.xpose.msra.mxu0 %v2322
        %2340 = vmatmul.f32.gmra.mxu0 %v2319
        %v2341 = vpop.f32.mrf.mxu0
        %v2342 = vadd.f32 0.0, %v2341
        %2343 = vdwg.mxu0
        %v2345 = vsel %vm1786, %v1669, 0
        %v2348 = vsel %vm1786, %v1725, 0
        %2350 = vmatpush.xpose.msra.mxu0 0.0
        %2351 = vmatpush.xpose.msra.mxu0 0.0
        %2352 = vmatpush.xpose.msra.mxu0 0.0
        %2353 = vmatpush.xpose.msra.mxu0 0.0
        %2354 = vmatpush.xpose.msra.mxu0 0.0
        %2355 = vmatpush.xpose.msra.mxu0 0.0
        %2356 = vmatpush.xpose.msra.mxu0 0.0
        %2357 = vmatpush.xpose.msra.mxu0 0.0
        %2358 = vmatpush.xpose.msra.mxu0 0.0
        %2359 = vmatpush.xpose.msra.mxu0 0.0
        %2360 = vmatpush.xpose.msra.mxu0 0.0
        %2361 = vmatpush.xpose.msra.mxu0 0.0
        %2362 = vmatpush.xpose.msra.mxu0 0.0
        %2363 = vmatpush.xpose.msra.mxu0 0.0
        %2364 = vmatpush.xpose.msra.mxu0 0.0
        %2365 = vmatpush.xpose.msra.mxu0 %v2348
        %2366 = vmatmul.f32.gmra.mxu0 %v2345
        %v2367 = vpop.f32.mrf.mxu0
        %v2368 = vadd.f32 0.0, %v2367
        %2369 = vdwg.mxu0
        %v2370 = vmul.f32 %v2342, 0.17677669
        %v2371 = vmul.f32 %v2368, 0.17677669
        %v2372 = vsel %vm1842, %v2370, -1e+30
        %v2373 = vsel %vm1842, %v2371, -1e+30
        %v2374 = vsel %vm1845, %v2372, -inf
        %2375 = vmax.xlane.f32.xlu0 %v2374
        %v2376 = vpop.xlane.xlu0 %2375
        %v2377 = vsel %vm1845, %v2373, -inf
        %2378 = vmax.xlane.f32.xlu0 %v2377
        %v2379 = vpop.xlane.xlu0 %2378
        %v2380 = vsub.f32 %v2372, %v2376
        %v2381 = vsub.f32 %v2373, %v2379
        %v2382 = vmul.f32 %v2380, 1.442695
        %v2383 = vpow.pop %v2382
        %v2384 = vmul.f32 %v2381, 1.442695
        %v2385 = vpow.pop %v2384
        %v2386 = vsel %vm1845, %v2383, 0.0
        %2387 = vadd.xlane.f32.xlu0 %v2386
        %v2388 = vpop.xlane.xlu0 %2387
        %v2389 = vsel %vm1845, %v2385, 0.0
        %2390 = vadd.xlane.f32.xlu0 %v2389
        %v2391 = vpop.xlane.xlu0 %2390
        %v2392 = vrcp.pop %v2388
        %v2393 = vrcp.pop %v2391
        %v2394 = vmul.f32 %v2383, %v2392
        %v2395 = vmul.f32 %v2385, %v2393
        %v2397 = vsel %vm1845, %v2394, 0
        %2399 = vmatpush.msra.mxu0 0.0
        %2400 = vmatpush.msra.mxu0 0.0
        %2401 = vmatpush.msra.mxu0 0.0
        %2402 = vmatpush.msra.mxu0 0.0
        %2403 = vmatpush.msra.mxu0 0.0
        %2404 = vmatpush.msra.mxu0 0.0
        %2405 = vmatpush.msra.mxu0 0.0
        %2406 = vmatpush.msra.mxu0 0.0
        %2407 = vmatpush.msra.mxu0 0.0
        %2408 = vmatpush.msra.mxu0 0.0
        %2409 = vmatpush.msra.mxu0 0.0
        %2410 = vmatpush.msra.mxu0 0.0
        %2411 = vmatpush.msra.mxu0 0.0
        %2412 = vmatpush.msra.mxu0 0.0
        %2413 = vmatpush.msra.mxu0 0.0
        %2414 = vmatpush.msra.mxu0 %v1779
        %2415 = vmatmul.f32.gmra.mxu0 %v2397
        %v2416 = vpop.f32.mrf.mxu0
        %v2417 = vadd.f32 0.0, %v2416
        %2418 = vdwg.mxu0
        %v2420 = vsel %vm1845, %v2395, 0
        %2422 = vmatpush.msra.mxu0 0.0
        %2423 = vmatpush.msra.mxu0 0.0
        %2424 = vmatpush.msra.mxu0 0.0
        %2425 = vmatpush.msra.mxu0 0.0
        %2426 = vmatpush.msra.mxu0 0.0
        %2427 = vmatpush.msra.mxu0 0.0
        %2428 = vmatpush.msra.mxu0 0.0
        %2429 = vmatpush.msra.mxu0 0.0
        %2430 = vmatpush.msra.mxu0 0.0
        %2431 = vmatpush.msra.mxu0 0.0
        %2432 = vmatpush.msra.mxu0 0.0
        %2433 = vmatpush.msra.mxu0 0.0
        %2434 = vmatpush.msra.mxu0 0.0
        %2435 = vmatpush.msra.mxu0 0.0
        %2436 = vmatpush.msra.mxu0 0.0
        %2437 = vmatpush.msra.mxu0 %v1781
        %2438 = vmatmul.f32.gmra.mxu0 %v2420
        %v2439 = vpop.f32.mrf.mxu0
        %v2440 = vadd.f32 0.0, %v2439
        %2441 = vdwg.mxu0
        %2442 = vrot.lane.b32.xlu0 %v1667, 96
        %v2443 = vpop.permute.xlu0 %2442
        %2444 = vrot.lane.b32.xlu0 %v1723, 96
        %v2445 = vpop.permute.xlu0 %2444
        %v2446 = vsel %vm1786, %v2443, 0
        %v2448 = vsel %vm1786, %v2445, 0
        %2450 = vmatpush.xpose.msra.mxu0 0.0
        %2451 = vmatpush.xpose.msra.mxu0 0.0
        %2452 = vmatpush.xpose.msra.mxu0 0.0
        %2453 = vmatpush.xpose.msra.mxu0 0.0
        %2454 = vmatpush.xpose.msra.mxu0 0.0
        %2455 = vmatpush.xpose.msra.mxu0 0.0
        %2456 = vmatpush.xpose.msra.mxu0 0.0
        %2457 = vmatpush.xpose.msra.mxu0 0.0
        %2458 = vmatpush.xpose.msra.mxu0 0.0
        %2459 = vmatpush.xpose.msra.mxu0 0.0
        %2460 = vmatpush.xpose.msra.mxu0 0.0
        %2461 = vmatpush.xpose.msra.mxu0 0.0
        %2462 = vmatpush.xpose.msra.mxu0 0.0
        %2463 = vmatpush.xpose.msra.mxu0 0.0
        %2464 = vmatpush.xpose.msra.mxu0 0.0
        %2465 = vmatpush.xpose.msra.mxu0 %v2448
        %2466 = vmatmul.f32.gmra.mxu0 %v2446
        %v2467 = vpop.f32.mrf.mxu0
        %v2468 = vadd.f32 0.0, %v2467
        %2469 = vdwg.mxu0
        %2470 = vrot.lane.b32.xlu0 %v1669, 96
        %v2471 = vpop.permute.xlu0 %2470
        %2472 = vrot.lane.b32.xlu0 %v1725, 96
        %v2473 = vpop.permute.xlu0 %2472
        %v2474 = vsel %vm1786, %v2471, 0
        %v2476 = vsel %vm1786, %v2473, 0
        %2478 = vmatpush.xpose.msra.mxu0 0.0
        %2479 = vmatpush.xpose.msra.mxu0 0.0
        %2480 = vmatpush.xpose.msra.mxu0 0.0
        %2481 = vmatpush.xpose.msra.mxu0 0.0
        %2482 = vmatpush.xpose.msra.mxu0 0.0
        %2483 = vmatpush.xpose.msra.mxu0 0.0
        %2484 = vmatpush.xpose.msra.mxu0 0.0
        %2485 = vmatpush.xpose.msra.mxu0 0.0
        %2486 = vmatpush.xpose.msra.mxu0 0.0
        %2487 = vmatpush.xpose.msra.mxu0 0.0
        %2488 = vmatpush.xpose.msra.mxu0 0.0
        %2489 = vmatpush.xpose.msra.mxu0 0.0
        %2490 = vmatpush.xpose.msra.mxu0 0.0
        %2491 = vmatpush.xpose.msra.mxu0 0.0
        %2492 = vmatpush.xpose.msra.mxu0 0.0
        %2493 = vmatpush.xpose.msra.mxu0 %v2476
        %2494 = vmatmul.f32.gmra.mxu0 %v2474
        %v2495 = vpop.f32.mrf.mxu0
        %v2496 = vadd.f32 0.0, %v2495
        %2497 = vdwg.mxu0
        %v2498 = vmul.f32 %v2468, 0.17677669
        %v2499 = vmul.f32 %v2496, 0.17677669
        %v2500 = vsel %vm1842, %v2498, -1e+30
        %v2501 = vsel %vm1842, %v2499, -1e+30
        %v2502 = vsel %vm1845, %v2500, -inf
        %2503 = vmax.xlane.f32.xlu0 %v2502
        %v2504 = vpop.xlane.xlu0 %2503
        %v2505 = vsel %vm1845, %v2501, -inf
        %2506 = vmax.xlane.f32.xlu0 %v2505
        %v2507 = vpop.xlane.xlu0 %2506
        %v2508 = vsub.f32 %v2500, %v2504
        %v2509 = vsub.f32 %v2501, %v2507
        %v2510 = vmul.f32 %v2508, 1.442695
        %v2511 = vpow.pop %v2510
        %v2512 = vmul.f32 %v2509, 1.442695
        %v2513 = vpow.pop %v2512
        %v2514 = vsel %vm1845, %v2511, 0.0
        %2515 = vadd.xlane.f32.xlu0 %v2514
        %v2516 = vpop.xlane.xlu0 %2515
        %v2517 = vsel %vm1845, %v2513, 0.0
        %2518 = vadd.xlane.f32.xlu0 %v2517
        %v2519 = vpop.xlane.xlu0 %2518
        %v2520 = vrcp.pop %v2516
        %v2521 = vrcp.pop %v2519
        %v2522 = vmul.f32 %v2511, %v2520
        %v2523 = vmul.f32 %v2513, %v2521
        %2525 = vrot.lane.b32.xlu0 %v1779, 96
        %v2526 = vpop.permute.xlu0 %2525
        %v2529 = vsel %vm1845, %v2522, 0
        %2531 = vmatpush.msra.mxu0 0.0
        %2532 = vmatpush.msra.mxu0 0.0
        %2533 = vmatpush.msra.mxu0 0.0
        %2534 = vmatpush.msra.mxu0 0.0
        %2535 = vmatpush.msra.mxu0 0.0
        %2536 = vmatpush.msra.mxu0 0.0
        %2537 = vmatpush.msra.mxu0 0.0
        %2538 = vmatpush.msra.mxu0 0.0
        %2539 = vmatpush.msra.mxu0 0.0
        %2540 = vmatpush.msra.mxu0 0.0
        %2541 = vmatpush.msra.mxu0 0.0
        %2542 = vmatpush.msra.mxu0 0.0
        %2543 = vmatpush.msra.mxu0 0.0
        %2544 = vmatpush.msra.mxu0 0.0
        %2545 = vmatpush.msra.mxu0 0.0
        %2546 = vmatpush.msra.mxu0 %v2526
        %2547 = vmatmul.f32.gmra.mxu0 %v2529
        %v2548 = vpop.f32.mrf.mxu0
        %v2549 = vadd.f32 0.0, %v2548
        %2550 = vdwg.mxu0
        %2552 = vrot.lane.b32.xlu0 %v1781, 96
        %v2553 = vpop.permute.xlu0 %2552
        %v2556 = vsel %vm1845, %v2523, 0
        %2558 = vmatpush.msra.mxu0 0.0
        %2559 = vmatpush.msra.mxu0 0.0
        %2560 = vmatpush.msra.mxu0 0.0
        %2561 = vmatpush.msra.mxu0 0.0
        %2562 = vmatpush.msra.mxu0 0.0
        %2563 = vmatpush.msra.mxu0 0.0
        %2564 = vmatpush.msra.mxu0 0.0
        %2565 = vmatpush.msra.mxu0 0.0
        %2566 = vmatpush.msra.mxu0 0.0
        %2567 = vmatpush.msra.mxu0 0.0
        %2568 = vmatpush.msra.mxu0 0.0
        %2569 = vmatpush.msra.mxu0 0.0
        %2570 = vmatpush.msra.mxu0 0.0
        %2571 = vmatpush.msra.mxu0 0.0
        %2572 = vmatpush.msra.mxu0 0.0
        %2573 = vmatpush.msra.mxu0 %v2553
        %2574 = vmatmul.f32.gmra.mxu0 %v2556
        %v2575 = vpop.f32.mrf.mxu0
        %v2576 = vadd.f32 0.0, %v2575
        %2577 = vdwg.mxu0
        %2578 = vrot.lane.b32.xlu0 %v1667, 64
        %v2579 = vpop.permute.xlu0 %2578
        %2580 = vrot.lane.b32.xlu0 %v1723, 64
        %v2581 = vpop.permute.xlu0 %2580
        %v2582 = vsel %vm1786, %v2579, 0
        %v2584 = vsel %vm1786, %v2581, 0
        %2586 = vmatpush.xpose.msra.mxu0 0.0
        %2587 = vmatpush.xpose.msra.mxu0 0.0
        %2588 = vmatpush.xpose.msra.mxu0 0.0
        %2589 = vmatpush.xpose.msra.mxu0 0.0
        %2590 = vmatpush.xpose.msra.mxu0 0.0
        %2591 = vmatpush.xpose.msra.mxu0 0.0
        %2592 = vmatpush.xpose.msra.mxu0 0.0
        %2593 = vmatpush.xpose.msra.mxu0 0.0
        %2594 = vmatpush.xpose.msra.mxu0 0.0
        %2595 = vmatpush.xpose.msra.mxu0 0.0
        %2596 = vmatpush.xpose.msra.mxu0 0.0
        %2597 = vmatpush.xpose.msra.mxu0 0.0
        %2598 = vmatpush.xpose.msra.mxu0 0.0
        %2599 = vmatpush.xpose.msra.mxu0 0.0
        %2600 = vmatpush.xpose.msra.mxu0 0.0
        %2601 = vmatpush.xpose.msra.mxu0 %v2584
        %2602 = vmatmul.f32.gmra.mxu0 %v2582
        %v2603 = vpop.f32.mrf.mxu0
        %v2604 = vadd.f32 0.0, %v2603
        %2605 = vdwg.mxu0
        %2606 = vrot.lane.b32.xlu0 %v1669, 64
        %v2607 = vpop.permute.xlu0 %2606
        %2608 = vrot.lane.b32.xlu0 %v1725, 64
        %v2609 = vpop.permute.xlu0 %2608
        %v2610 = vsel %vm1786, %v2607, 0
        %v2612 = vsel %vm1786, %v2609, 0
        %2614 = vmatpush.xpose.msra.mxu0 0.0
        %2615 = vmatpush.xpose.msra.mxu0 0.0
        %2616 = vmatpush.xpose.msra.mxu0 0.0
        %2617 = vmatpush.xpose.msra.mxu0 0.0
        %2618 = vmatpush.xpose.msra.mxu0 0.0
        %2619 = vmatpush.xpose.msra.mxu0 0.0
        %2620 = vmatpush.xpose.msra.mxu0 0.0
        %2621 = vmatpush.xpose.msra.mxu0 0.0
        %2622 = vmatpush.xpose.msra.mxu0 0.0
        %2623 = vmatpush.xpose.msra.mxu0 0.0
        %2624 = vmatpush.xpose.msra.mxu0 0.0
        %2625 = vmatpush.xpose.msra.mxu0 0.0
        %2626 = vmatpush.xpose.msra.mxu0 0.0
        %2627 = vmatpush.xpose.msra.mxu0 0.0
        %2628 = vmatpush.xpose.msra.mxu0 0.0
        %2629 = vmatpush.xpose.msra.mxu0 %v2612
        %2630 = vmatmul.f32.gmra.mxu0 %v2610
        %v2631 = vpop.f32.mrf.mxu0
        %v2632 = vadd.f32 0.0, %v2631
        %2633 = vdwg.mxu0
        %v2634 = vmul.f32 %v2604, 0.17677669
        %v2635 = vmul.f32 %v2632, 0.17677669
        %v2636 = vsel %vm1842, %v2634, -1e+30
        %v2637 = vsel %vm1842, %v2635, -1e+30
        %v2638 = vsel %vm1845, %v2636, -inf
        %2639 = vmax.xlane.f32.xlu0 %v2638
        %v2640 = vpop.xlane.xlu0 %2639
        %v2641 = vsel %vm1845, %v2637, -inf
        %2642 = vmax.xlane.f32.xlu0 %v2641
        %v2643 = vpop.xlane.xlu0 %2642
        %v2644 = vsub.f32 %v2636, %v2640
        %v2645 = vsub.f32 %v2637, %v2643
        %v2646 = vmul.f32 %v2644, 1.442695
        %v2647 = vpow.pop %v2646
        %v2648 = vmul.f32 %v2645, 1.442695
        %v2649 = vpow.pop %v2648
        %v2650 = vsel %vm1845, %v2647, 0.0
        %2651 = vadd.xlane.f32.xlu0 %v2650
        %v2652 = vpop.xlane.xlu0 %2651
        %v2653 = vsel %vm1845, %v2649, 0.0
        %2654 = vadd.xlane.f32.xlu0 %v2653
        %v2655 = vpop.xlane.xlu0 %2654
        %v2656 = vrcp.pop %v2652
        %v2657 = vrcp.pop %v2655
        %v2658 = vmul.f32 %v2647, %v2656
        %v2659 = vmul.f32 %v2649, %v2657
        %2660 = vrot.lane.b32.xlu0 %v1779, 64
        %v2661 = vpop.permute.xlu0 %2660
        %v2664 = vsel %vm1845, %v2658, 0
        %2666 = vmatpush.msra.mxu0 0.0
        %2667 = vmatpush.msra.mxu0 0.0
        %2668 = vmatpush.msra.mxu0 0.0
        %2669 = vmatpush.msra.mxu0 0.0
        %2670 = vmatpush.msra.mxu0 0.0
        %2671 = vmatpush.msra.mxu0 0.0
        %2672 = vmatpush.msra.mxu0 0.0
        %2673 = vmatpush.msra.mxu0 0.0
        %2674 = vmatpush.msra.mxu0 0.0
        %2675 = vmatpush.msra.mxu0 0.0
        %2676 = vmatpush.msra.mxu0 0.0
        %2677 = vmatpush.msra.mxu0 0.0
        %2678 = vmatpush.msra.mxu0 0.0
        %2679 = vmatpush.msra.mxu0 0.0
        %2680 = vmatpush.msra.mxu0 0.0
        %2681 = vmatpush.msra.mxu0 %v2661
        %2682 = vmatmul.f32.gmra.mxu0 %v2664
        %v2683 = vpop.f32.mrf.mxu0
        %v2684 = vadd.f32 0.0, %v2683
        %2685 = vdwg.mxu0
        %2686 = vrot.lane.b32.xlu0 %v1781, 64
        %v2687 = vpop.permute.xlu0 %2686
        %v2690 = vsel %vm1845, %v2659, 0
        %2692 = vmatpush.msra.mxu0 0.0
        %2693 = vmatpush.msra.mxu0 0.0
        %2694 = vmatpush.msra.mxu0 0.0
        %2695 = vmatpush.msra.mxu0 0.0
        %2696 = vmatpush.msra.mxu0 0.0
        %2697 = vmatpush.msra.mxu0 0.0
        %2698 = vmatpush.msra.mxu0 0.0
        %2699 = vmatpush.msra.mxu0 0.0
        %2700 = vmatpush.msra.mxu0 0.0
        %2701 = vmatpush.msra.mxu0 0.0
        %2702 = vmatpush.msra.mxu0 0.0
        %2703 = vmatpush.msra.mxu0 0.0
        %2704 = vmatpush.msra.mxu0 0.0
        %2705 = vmatpush.msra.mxu0 0.0
        %2706 = vmatpush.msra.mxu0 0.0
        %2707 = vmatpush.msra.mxu0 %v2687
        %2708 = vmatmul.f32.gmra.mxu0 %v2690
        %v2709 = vpop.f32.mrf.mxu0
        %v2710 = vadd.f32 0.0, %v2709
        %2711 = vdwg.mxu0
        %2712 = vrot.lane.b32.xlu0 %v1667, 32
        %v2713 = vpop.permute.xlu0 %2712
        %2714 = vrot.lane.b32.xlu0 %v1723, 32
        %v2715 = vpop.permute.xlu0 %2714
        %v2716 = vsel %vm1786, %v2713, 0
        %v2718 = vsel %vm1786, %v2715, 0
        %2720 = vmatpush.xpose.msra.mxu0 0.0
        %2721 = vmatpush.xpose.msra.mxu0 0.0
        %2722 = vmatpush.xpose.msra.mxu0 0.0
        %2723 = vmatpush.xpose.msra.mxu0 0.0
        %2724 = vmatpush.xpose.msra.mxu0 0.0
        %2725 = vmatpush.xpose.msra.mxu0 0.0
        %2726 = vmatpush.xpose.msra.mxu0 0.0
        %2727 = vmatpush.xpose.msra.mxu0 0.0
        %2728 = vmatpush.xpose.msra.mxu0 0.0
        %2729 = vmatpush.xpose.msra.mxu0 0.0
        %2730 = vmatpush.xpose.msra.mxu0 0.0
        %2731 = vmatpush.xpose.msra.mxu0 0.0
        %2732 = vmatpush.xpose.msra.mxu0 0.0
        %2733 = vmatpush.xpose.msra.mxu0 0.0
        %2734 = vmatpush.xpose.msra.mxu0 0.0
        %2735 = vmatpush.xpose.msra.mxu0 %v2718
        %2736 = vmatmul.f32.gmra.mxu0 %v2716
        %v2737 = vpop.f32.mrf.mxu0
        %v2738 = vadd.f32 0.0, %v2737
        %2739 = vdwg.mxu0
        %2740 = vrot.lane.b32.xlu0 %v1669, 32
        %v2741 = vpop.permute.xlu0 %2740
        %2742 = vrot.lane.b32.xlu0 %v1725, 32
        %v2743 = vpop.permute.xlu0 %2742
        %v2744 = vsel %vm1786, %v2741, 0
        %v2746 = vsel %vm1786, %v2743, 0
        %2748 = vmatpush.xpose.msra.mxu0 0.0
        %2749 = vmatpush.xpose.msra.mxu0 0.0
        %2750 = vmatpush.xpose.msra.mxu0 0.0
        %2751 = vmatpush.xpose.msra.mxu0 0.0
        %2752 = vmatpush.xpose.msra.mxu0 0.0
        %2753 = vmatpush.xpose.msra.mxu0 0.0
        %2754 = vmatpush.xpose.msra.mxu0 0.0
        %2755 = vmatpush.xpose.msra.mxu0 0.0
        %2756 = vmatpush.xpose.msra.mxu0 0.0
        %2757 = vmatpush.xpose.msra.mxu0 0.0
        %2758 = vmatpush.xpose.msra.mxu0 0.0
        %2759 = vmatpush.xpose.msra.mxu0 0.0
        %2760 = vmatpush.xpose.msra.mxu0 0.0
        %2761 = vmatpush.xpose.msra.mxu0 0.0
        %2762 = vmatpush.xpose.msra.mxu0 0.0
        %2763 = vmatpush.xpose.msra.mxu0 %v2746
        %2764 = vmatmul.f32.gmra.mxu0 %v2744
        %v2765 = vpop.f32.mrf.mxu0
        %v2766 = vadd.f32 0.0, %v2765
        %2767 = vdwg.mxu0
        %v2768 = vmul.f32 %v2738, 0.17677669
        %v2769 = vmul.f32 %v2766, 0.17677669
        %v2770 = vsel %vm1842, %v2768, -1e+30
        %v2771 = vsel %vm1842, %v2769, -1e+30
        %v2772 = vsel %vm1845, %v2770, -inf
        %2773 = vmax.xlane.f32.xlu0 %v2772
        %v2774 = vpop.xlane.xlu0 %2773
        %v2775 = vsel %vm1845, %v2771, -inf
        %2776 = vmax.xlane.f32.xlu0 %v2775
        %v2777 = vpop.xlane.xlu0 %2776
        %v2778 = vsub.f32 %v2770, %v2774
        %v2779 = vsub.f32 %v2771, %v2777
        %v2780 = vmul.f32 %v2778, 1.442695
        %v2781 = vpow.pop %v2780
        %v2782 = vmul.f32 %v2779, 1.442695
        %v2783 = vpow.pop %v2782
        %v2784 = vsel %vm1845, %v2781, 0.0
        %2785 = vadd.xlane.f32.xlu0 %v2784
        %v2786 = vpop.xlane.xlu0 %2785
        %v2787 = vsel %vm1845, %v2783, 0.0
        %2788 = vadd.xlane.f32.xlu0 %v2787
        %v2789 = vpop.xlane.xlu0 %2788
        %v2790 = vrcp.pop %v2786
        %v2791 = vrcp.pop %v2789
        %v2792 = vmul.f32 %v2781, %v2790
        %v2793 = vmul.f32 %v2783, %v2791
        %2794 = vrot.lane.b32.xlu0 %v1779, 32
        %v2795 = vpop.permute.xlu0 %2794
        %v2798 = vsel %vm1845, %v2792, 0
        %2800 = vmatpush.msra.mxu0 0.0
        %2801 = vmatpush.msra.mxu0 0.0
        %2802 = vmatpush.msra.mxu0 0.0
        %2803 = vmatpush.msra.mxu0 0.0
        %2804 = vmatpush.msra.mxu0 0.0
        %2805 = vmatpush.msra.mxu0 0.0
        %2806 = vmatpush.msra.mxu0 0.0
        %2807 = vmatpush.msra.mxu0 0.0
        %2808 = vmatpush.msra.mxu0 0.0
        %2809 = vmatpush.msra.mxu0 0.0
        %2810 = vmatpush.msra.mxu0 0.0
        %2811 = vmatpush.msra.mxu0 0.0
        %2812 = vmatpush.msra.mxu0 0.0
        %2813 = vmatpush.msra.mxu0 0.0
        %2814 = vmatpush.msra.mxu0 0.0
        %2815 = vmatpush.msra.mxu0 %v2795
        %2816 = vmatmul.f32.gmra.mxu0 %v2798
        %v2817 = vpop.f32.mrf.mxu0
        %v2818 = vadd.f32 0.0, %v2817
        %2819 = vdwg.mxu0
        %2820 = vrot.lane.b32.xlu0 %v1781, 32
        %v2821 = vpop.permute.xlu0 %2820
        %v2824 = vsel %vm1845, %v2793, 0
        %2826 = vmatpush.msra.mxu0 0.0
        %2827 = vmatpush.msra.mxu0 0.0
        %2828 = vmatpush.msra.mxu0 0.0
        %2829 = vmatpush.msra.mxu0 0.0
        %2830 = vmatpush.msra.mxu0 0.0
        %2831 = vmatpush.msra.mxu0 0.0
        %2832 = vmatpush.msra.mxu0 0.0
        %2833 = vmatpush.msra.mxu0 0.0
        %2834 = vmatpush.msra.mxu0 0.0
        %2835 = vmatpush.msra.mxu0 0.0
        %2836 = vmatpush.msra.mxu0 0.0
        %2837 = vmatpush.msra.mxu0 0.0
        %2838 = vmatpush.msra.mxu0 0.0
        %2839 = vmatpush.msra.mxu0 0.0
        %2840 = vmatpush.msra.mxu0 0.0
        %2841 = vmatpush.msra.mxu0 %v2821
        %2842 = vmatmul.f32.gmra.mxu0 %v2824
        %v2843 = vpop.f32.mrf.mxu0
        %v2844 = vadd.f32 0.0, %v2843
        %2845 = vdwg.mxu0
        %2848 = vrot.lane.b32.xlu0 %v2021, 32
        %v2849 = vpop.permute.xlu0 %2848
        %2850 = vrot.lane.b32.xlu0 %v2048, 32
        %v2851 = vpop.permute.xlu0 %2850
        %2856 = vrot.lane.b32.xlu0 %v2156, 64
        %v2857 = vpop.permute.xlu0 %2856
        %2858 = vrot.lane.b32.xlu0 %v2182, 64
        %v2859 = vpop.permute.xlu0 %2858
        %2864 = vrot.lane.b32.xlu0 %v2290, 96
        %v2865 = vpop.permute.xlu0 %2864
        %2866 = vrot.lane.b32.xlu0 %v2316, 96
        %v2867 = vpop.permute.xlu0 %2866
        %2872 = vrot.lane.b32.xlu0 %v2549, 32
        %v2873 = vpop.permute.xlu0 %2872
        %2874 = vrot.lane.b32.xlu0 %v2576, 32
        %v2875 = vpop.permute.xlu0 %2874
        %2880 = vrot.lane.b32.xlu0 %v2684, 64
        %v2881 = vpop.permute.xlu0 %2880
        %2882 = vrot.lane.b32.xlu0 %v2710, 64
        %v2883 = vpop.permute.xlu0 %2882
        %2888 = vrot.lane.b32.xlu0 %v2818, 96
        %v2889 = vpop.permute.xlu0 %2888
        %2890 = vrot.lane.b32.xlu0 %v2844, 96
        %v2891 = vpop.permute.xlu0 %2890
        %v2894 = vsel %vm1786, %v1889, %v2849
        %v2895 = vsel %vm1786, %v1912, %v2851
        %vm2896 = vcmask 523264
        %v2897 = vsel %vm2896, %v2894, %v2857
        %v2898 = vsel %vm2896, %v2895, %v2859
        %vm2899 = vcmask 785408
        %v2900 = vsel %vm2899, %v2897, %v2865
        %v2901 = vsel %vm2899, %v2898, %v2867
        %v2902 = vsel %vm1786, %v2417, %v2873
        %v2903 = vsel %vm1786, %v2440, %v2875
        %v2904 = vsel %vm2896, %v2902, %v2881
        %v2905 = vsel %vm2896, %v2903, %v2883
        %v2906 = vsel %vm2899, %v2904, %v2889
        %v2907 = vsel %vm2899, %v2905, %v2891
        %v2908 = vld [vmem:[%s560] sm:$0xff]
        %v2909 = vld [vmem:[%s560 + $0x8] sm:$0xff]
        %v2910 = vld [vmem:[%s560 + $0x10] sm:$0xff]
        %v2911 = vld [vmem:[%s560 + $0x18] sm:$0xff]
        %v2912 = vld [vmem:[%s560 + $0x20] sm:$0xff]
        %v2913 = vld [vmem:[%s560 + $0x28] sm:$0xff]
        %v2914 = vld [vmem:[%s560 + $0x30] sm:$0xff]
        %v2915 = vld [vmem:[%s560 + $0x38] sm:$0xff]
        %v2916 = vld [vmem:[%s560 + $0x40] sm:$0xff]
        %v2917 = vld [vmem:[%s560 + $0x48] sm:$0xff]
        %v2918 = vld [vmem:[%s560 + $0x50] sm:$0xff]
        %v2919 = vld [vmem:[%s560 + $0x58] sm:$0xff]
        %v2920 = vld [vmem:[%s560 + $0x60] sm:$0xff]
        %v2921 = vld [vmem:[%s560 + $0x68] sm:$0xff]
        %v2922 = vld [vmem:[%s560 + $0x70] sm:$0xff]
        %v2923 = vld [vmem:[%s560 + $0x78] sm:$0xff]
        %v2924 = vld [vmem:[%s560 + $0x80] sm:$0xff]
        %v2925 = vld [vmem:[%s560 + $0x88] sm:$0xff]
        %v2926 = vld [vmem:[%s560 + $0x90] sm:$0xff]
        %v2927 = vld [vmem:[%s560 + $0x98] sm:$0xff]
        %v2928 = vld [vmem:[%s560 + $0xa0] sm:$0xff]
        %v2929 = vld [vmem:[%s560 + $0xa8] sm:$0xff]
        %v2930 = vld [vmem:[%s560 + $0xb0] sm:$0xff]
        %v2931 = vld [vmem:[%s560 + $0xb8] sm:$0xff]
        %v2932 = vld [vmem:[%s560 + $0xc0] sm:$0xff]
        %v2933 = vld [vmem:[%s560 + $0xc8] sm:$0xff]
        %v2934 = vld [vmem:[%s560 + $0xd0] sm:$0xff]
        %v2935 = vld [vmem:[%s560 + $0xd8] sm:$0xff]
        %v2936 = vld [vmem:[%s560 + $0xe0] sm:$0xff]
        %v2937 = vld [vmem:[%s560 + $0xe8] sm:$0xff]
        %v2938 = vld [vmem:[%s560 + $0xf0] sm:$0xff]
        %v2939 = vld [vmem:[%s560 + $0xf8] sm:$0xff]
        %v2940 = vpack.c.bf16 %v2901, %v2900
        %v2941 = vpack.c.bf16 %v2907, %v2906
        %v2943 = vperm.slane %v935, 0
        %v2944 = vperm.slane %v935, 1
        %v2979 = vunpack.c.l.b16 %v2908
        %v2980 = vunpack.c.h.b16 %v2908
        %v2981 = vunpack.c.l.b16 %v2909
        %v2982 = vunpack.c.h.b16 %v2909
        %v2983 = vunpack.c.l.b16 %v2910
        %v2984 = vunpack.c.h.b16 %v2910
        %v2985 = vunpack.c.l.b16 %v2911
        %v2986 = vunpack.c.h.b16 %v2911
        %v2987 = vunpack.c.l.b16 %v2912
        %v2988 = vunpack.c.h.b16 %v2912
        %v2989 = vunpack.c.l.b16 %v2913
        %v2990 = vunpack.c.h.b16 %v2913
        %v2991 = vunpack.c.l.b16 %v2914
        %v2992 = vunpack.c.h.b16 %v2914
        %v2993 = vunpack.c.l.b16 %v2915
        %v2994 = vunpack.c.h.b16 %v2915
        %v2995 = vunpack.c.l.b16 %v2916
        %v2996 = vunpack.c.h.b16 %v2916
        %v2997 = vunpack.c.l.b16 %v2917
        %v2998 = vunpack.c.h.b16 %v2917
        %v2999 = vunpack.c.l.b16 %v2918
        %v3000 = vunpack.c.h.b16 %v2918
        %v3001 = vunpack.c.l.b16 %v2919
        %v3002 = vunpack.c.h.b16 %v2919
        %v3003 = vunpack.c.l.b16 %v2920
        %v3004 = vunpack.c.h.b16 %v2920
        %v3005 = vunpack.c.l.b16 %v2921
        %v3006 = vunpack.c.h.b16 %v2921
        %v3007 = vunpack.c.l.b16 %v2922
        %v3008 = vunpack.c.h.b16 %v2922
        %v3009 = vunpack.c.l.b16 %v2923
        %v3010 = vunpack.c.h.b16 %v2923
        %v3011 = vunpack.c.l.b16 %v2924
        %v3012 = vunpack.c.h.b16 %v2924
        %v3013 = vunpack.c.l.b16 %v2925
        %v3014 = vunpack.c.h.b16 %v2925
        %v3015 = vunpack.c.l.b16 %v2926
        %v3016 = vunpack.c.h.b16 %v2926
        %v3017 = vunpack.c.l.b16 %v2927
        %v3018 = vunpack.c.h.b16 %v2927
        %v3019 = vunpack.c.l.b16 %v2928
        %v3020 = vunpack.c.h.b16 %v2928
        %v3021 = vunpack.c.l.b16 %v2929
        %v3022 = vunpack.c.h.b16 %v2929
        %v3023 = vunpack.c.l.b16 %v2930
        %v3024 = vunpack.c.h.b16 %v2930
        %v3025 = vunpack.c.l.b16 %v2931
        %v3026 = vunpack.c.h.b16 %v2931
        %v3027 = vunpack.c.l.b16 %v2932
        %v3028 = vunpack.c.h.b16 %v2932
        %v3029 = vunpack.c.l.b16 %v2933
        %v3030 = vunpack.c.h.b16 %v2933
        %v3031 = vunpack.c.l.b16 %v2934
        %v3032 = vunpack.c.h.b16 %v2934
        %v3033 = vunpack.c.l.b16 %v2935
        %v3034 = vunpack.c.h.b16 %v2935
        %v3035 = vunpack.c.l.b16 %v2936
        %v3036 = vunpack.c.h.b16 %v2936
        %v3037 = vunpack.c.l.b16 %v2937
        %v3038 = vunpack.c.h.b16 %v2937
        %v3039 = vunpack.c.l.b16 %v2938
        %v3040 = vunpack.c.h.b16 %v2938
        %v3041 = vunpack.c.l.b16 %v2939
        %v3042 = vunpack.c.h.b16 %v2939
        %v3043 = vpack.c.b16 %v2981, %v2979
        %v3044 = vpack.c.b16 %v2982, %v2980
        %v3045 = vpack.c.b16 %v2985, %v2983
        %v3046 = vpack.c.b16 %v2986, %v2984
        %v3047 = vpack.c.b16 %v2989, %v2987
        %v3048 = vpack.c.b16 %v2990, %v2988
        %v3049 = vpack.c.b16 %v2993, %v2991
        %v3050 = vpack.c.b16 %v2994, %v2992
        %v3051 = vpack.c.b16 %v2997, %v2995
        %v3052 = vpack.c.b16 %v2998, %v2996
        %v3053 = vpack.c.b16 %v3001, %v2999
        %v3054 = vpack.c.b16 %v3002, %v3000
        %v3055 = vpack.c.b16 %v3005, %v3003
        %v3056 = vpack.c.b16 %v3006, %v3004
        %v3057 = vpack.c.b16 %v3009, %v3007
        %v3058 = vpack.c.b16 %v3010, %v3008
        %v3059 = vpack.c.b16 %v3013, %v3011
        %v3060 = vpack.c.b16 %v3014, %v3012
        %v3061 = vpack.c.b16 %v3017, %v3015
        %v3062 = vpack.c.b16 %v3018, %v3016
        %v3063 = vpack.c.b16 %v3021, %v3019
        %v3064 = vpack.c.b16 %v3022, %v3020
        %v3065 = vpack.c.b16 %v3025, %v3023
        %v3066 = vpack.c.b16 %v3026, %v3024
        %v3067 = vpack.c.b16 %v3029, %v3027
        %v3068 = vpack.c.b16 %v3030, %v3028
        %v3069 = vpack.c.b16 %v3033, %v3031
        %v3070 = vpack.c.b16 %v3034, %v3032
        %v3071 = vpack.c.b16 %v3037, %v3035
        %v3072 = vpack.c.b16 %v3038, %v3036
        %v3073 = vpack.c.b16 %v3041, %v3039
        %v3074 = vpack.c.b16 %v3042, %v3040
        %3107 = vmatpush.bf16.msra.mxu0 %v3057
        %3108 = vmatpush.bf16.msra.mxu0 %v3055
        %3109 = vmatpush.bf16.msra.mxu0 %v3053
        %3110 = vmatpush.bf16.msra.mxu0 %v3051
        %3111 = vmatpush.bf16.msra.mxu0 %v3049
        %3112 = vmatpush.bf16.msra.mxu0 %v3047
        %3113 = vmatpush.bf16.msra.mxu0 %v3045
        %3114 = vmatpush.bf16.msra.mxu0 %v3043
        %3115 = vmatmul.bf16.gmra.mxu0 %v2940
        %v3116 = vpop.f32.mrf.mxu0
        %v3117 = vadd.f32 %v2943, %v3116
        %v3118 = vpop.f32.mrf.mxu0
        %v3119 = vadd.f32 %v2943, %v3118
        %3120 = vdwg.mxu0
        %3121 = vmatpush.bf16.msra.mxu0 %v3073
        %3122 = vmatpush.bf16.msra.mxu0 %v3071
        %3123 = vmatpush.bf16.msra.mxu0 %v3069
        %3124 = vmatpush.bf16.msra.mxu0 %v3067
        %3125 = vmatpush.bf16.msra.mxu0 %v3065
        %3126 = vmatpush.bf16.msra.mxu0 %v3063
        %3127 = vmatpush.bf16.msra.mxu0 %v3061
        %3128 = vmatpush.bf16.msra.mxu0 %v3059
        %3129 = vmatmul.bf16.gmra.mxu0 %v2941
        %v3130 = vpop.f32.mrf.mxu0
        %v3131 = vadd.f32 %v3117, %v3130
        %v3132 = vpop.f32.mrf.mxu0
        %v3133 = vadd.f32 %v3119, %v3132
        %3134 = vdwg.mxu0
        %3135 = vmatpush.bf16.msra.mxu0 %v3058
        %3136 = vmatpush.bf16.msra.mxu0 %v3056
        %3137 = vmatpush.bf16.msra.mxu0 %v3054
        %3138 = vmatpush.bf16.msra.mxu0 %v3052
        %3139 = vmatpush.bf16.msra.mxu0 %v3050
        %3140 = vmatpush.bf16.msra.mxu0 %v3048
        %3141 = vmatpush.bf16.msra.mxu0 %v3046
        %3142 = vmatpush.bf16.msra.mxu0 %v3044
        %3143 = vmatmul.bf16.gmra.mxu0 %v2940
        %v3144 = vpop.f32.mrf.mxu0
        %v3145 = vadd.f32 %v2944, %v3144
        %v3146 = vpop.f32.mrf.mxu0
        %v3147 = vadd.f32 %v2944, %v3146
        %3148 = vdwg.mxu0
        %3149 = vmatpush.bf16.msra.mxu0 %v3074
        %3150 = vmatpush.bf16.msra.mxu0 %v3072
        %3151 = vmatpush.bf16.msra.mxu0 %v3070
        %3152 = vmatpush.bf16.msra.mxu0 %v3068
        %3153 = vmatpush.bf16.msra.mxu0 %v3066
        %3154 = vmatpush.bf16.msra.mxu0 %v3064
        %3155 = vmatpush.bf16.msra.mxu0 %v3062
        %3156 = vmatpush.bf16.msra.mxu0 %v3060
        %3157 = vmatmul.bf16.gmra.mxu0 %v2941
        %v3158 = vpop.f32.mrf.mxu0
        %v3159 = vadd.f32 %v3145, %v3158
        %v3160 = vpop.f32.mrf.mxu0
        %v3161 = vadd.f32 %v3147, %v3160
        %3162 = vdwg.mxu0
        %v3163 = vadd.f32 %v938, %v3131
        %v3164 = vadd.f32 %v939, %v3159
        %v3165 = vadd.f32 %v940, %v3133
        %v3166 = vadd.f32 %v941, %v3161
        %v3167 = vld [vmem:[%s570] sm:$0xff]
        %v3168 = vld [vmem:[%s570 + $0x8] sm:$0xff]
        %v3169 = vld [vmem:[%s570 + $0x10] sm:$0xff]
        %v3170 = vld [vmem:[%s570 + $0x18] sm:$0xff]
        %v3171 = vld [vmem:[%s570 + $0x20] sm:$0xff]
        %v3172 = vld [vmem:[%s570 + $0x28] sm:$0xff]
        %v3173 = vld [vmem:[%s570 + $0x30] sm:$0xff]
        %v3174 = vld [vmem:[%s570 + $0x38] sm:$0xff]
        %v3175 = vld [vmem:[%s570 + $0x40] sm:$0xff]
        %v3176 = vld [vmem:[%s570 + $0x48] sm:$0xff]
        %v3177 = vld [vmem:[%s570 + $0x50] sm:$0xff]
        %v3178 = vld [vmem:[%s570 + $0x58] sm:$0xff]
        %v3179 = vld [vmem:[%s570 + $0x60] sm:$0xff]
        %v3180 = vld [vmem:[%s570 + $0x68] sm:$0xff]
        %v3181 = vld [vmem:[%s570 + $0x70] sm:$0xff]
        %v3182 = vld [vmem:[%s570 + $0x78] sm:$0xff]
        %v3183 = vld [vmem:[%s570 + $0x80] sm:$0xff]
        %v3184 = vld [vmem:[%s570 + $0x88] sm:$0xff]
        %v3185 = vld [vmem:[%s570 + $0x90] sm:$0xff]
        %v3186 = vld [vmem:[%s570 + $0x98] sm:$0xff]
        %v3187 = vld [vmem:[%s570 + $0xa0] sm:$0xff]
        %v3188 = vld [vmem:[%s570 + $0xa8] sm:$0xff]
        %v3189 = vld [vmem:[%s570 + $0xb0] sm:$0xff]
        %v3190 = vld [vmem:[%s570 + $0xb8] sm:$0xff]
        %v3191 = vld [vmem:[%s570 + $0xc0] sm:$0xff]
        %v3192 = vld [vmem:[%s570 + $0xc8] sm:$0xff]
        %v3193 = vld [vmem:[%s570 + $0xd0] sm:$0xff]
        %v3194 = vld [vmem:[%s570 + $0xd8] sm:$0xff]
        %v3195 = vld [vmem:[%s570 + $0xe0] sm:$0xff]
        %v3196 = vld [vmem:[%s570 + $0xe8] sm:$0xff]
        %v3197 = vld [vmem:[%s570 + $0xf0] sm:$0xff]
        %v3198 = vld [vmem:[%s570 + $0xf8] sm:$0xff]
        %v3199 = vld [vmem:[%s570 + $0x100] sm:$0xff]
        %v3200 = vld [vmem:[%s570 + $0x108] sm:$0xff]
        %v3201 = vld [vmem:[%s570 + $0x110] sm:$0xff]
        %v3202 = vld [vmem:[%s570 + $0x118] sm:$0xff]
        %v3203 = vld [vmem:[%s570 + $0x120] sm:$0xff]
        %v3204 = vld [vmem:[%s570 + $0x128] sm:$0xff]
        %v3205 = vld [vmem:[%s570 + $0x130] sm:$0xff]
        %v3206 = vld [vmem:[%s570 + $0x138] sm:$0xff]
        %v3207 = vld [vmem:[%s570 + $0x140] sm:$0xff]
        %v3208 = vld [vmem:[%s570 + $0x148] sm:$0xff]
        %v3209 = vld [vmem:[%s570 + $0x150] sm:$0xff]
        %v3210 = vld [vmem:[%s570 + $0x158] sm:$0xff]
        %v3211 = vld [vmem:[%s570 + $0x160] sm:$0xff]
        %v3212 = vld [vmem:[%s570 + $0x168] sm:$0xff]
        %v3213 = vld [vmem:[%s570 + $0x170] sm:$0xff]
        %v3214 = vld [vmem:[%s570 + $0x178] sm:$0xff]
        %v3215 = vld [vmem:[%s570 + $0x180] sm:$0xff]
        %v3216 = vld [vmem:[%s570 + $0x188] sm:$0xff]
        %v3217 = vld [vmem:[%s570 + $0x190] sm:$0xff]
        %v3218 = vld [vmem:[%s570 + $0x198] sm:$0xff]
        %v3219 = vld [vmem:[%s570 + $0x1a0] sm:$0xff]
        %v3220 = vld [vmem:[%s570 + $0x1a8] sm:$0xff]
        %v3221 = vld [vmem:[%s570 + $0x1b0] sm:$0xff]
        %v3222 = vld [vmem:[%s570 + $0x1b8] sm:$0xff]
        %v3223 = vld [vmem:[%s570 + $0x1c0] sm:$0xff]
        %v3224 = vld [vmem:[%s570 + $0x1c8] sm:$0xff]
        %v3225 = vld [vmem:[%s570 + $0x1d0] sm:$0xff]
        %v3226 = vld [vmem:[%s570 + $0x1d8] sm:$0xff]
        %v3227 = vld [vmem:[%s570 + $0x1e0] sm:$0xff]
        %v3228 = vld [vmem:[%s570 + $0x1e8] sm:$0xff]
        %v3229 = vld [vmem:[%s570 + $0x1f0] sm:$0xff]
        %v3230 = vld [vmem:[%s570 + $0x1f8] sm:$0xff]
        %v3231 = vld [vmem:[%s570 + $0x200] sm:$0xff]
        %v3232 = vld [vmem:[%s570 + $0x208] sm:$0xff]
        %v3233 = vld [vmem:[%s570 + $0x210] sm:$0xff]
        %v3234 = vld [vmem:[%s570 + $0x218] sm:$0xff]
        %v3235 = vld [vmem:[%s570 + $0x220] sm:$0xff]
        %v3236 = vld [vmem:[%s570 + $0x228] sm:$0xff]
        %v3237 = vld [vmem:[%s570 + $0x230] sm:$0xff]
        %v3238 = vld [vmem:[%s570 + $0x238] sm:$0xff]
        %v3239 = vld [vmem:[%s570 + $0x240] sm:$0xff]
        %v3240 = vld [vmem:[%s570 + $0x248] sm:$0xff]
        %v3241 = vld [vmem:[%s570 + $0x250] sm:$0xff]
        %v3242 = vld [vmem:[%s570 + $0x258] sm:$0xff]
        %v3243 = vld [vmem:[%s570 + $0x260] sm:$0xff]
        %v3244 = vld [vmem:[%s570 + $0x268] sm:$0xff]
        %v3245 = vld [vmem:[%s570 + $0x270] sm:$0xff]
        %v3246 = vld [vmem:[%s570 + $0x278] sm:$0xff]
        %v3247 = vld [vmem:[%s570 + $0x280] sm:$0xff]
        %v3248 = vld [vmem:[%s570 + $0x288] sm:$0xff]
        %v3249 = vld [vmem:[%s570 + $0x290] sm:$0xff]
        %v3250 = vld [vmem:[%s570 + $0x298] sm:$0xff]
        %v3251 = vld [vmem:[%s570 + $0x2a0] sm:$0xff]
        %v3252 = vld [vmem:[%s570 + $0x2a8] sm:$0xff]
        %v3253 = vld [vmem:[%s570 + $0x2b0] sm:$0xff]
        %v3254 = vld [vmem:[%s570 + $0x2b8] sm:$0xff]
        %v3255 = vld [vmem:[%s570 + $0x2c0] sm:$0xff]
        %v3256 = vld [vmem:[%s570 + $0x2c8] sm:$0xff]
        %v3257 = vld [vmem:[%s570 + $0x2d0] sm:$0xff]
        %v3258 = vld [vmem:[%s570 + $0x2d8] sm:$0xff]
        %v3259 = vld [vmem:[%s570 + $0x2e0] sm:$0xff]
        %v3260 = vld [vmem:[%s570 + $0x2e8] sm:$0xff]
        %v3261 = vld [vmem:[%s570 + $0x2f0] sm:$0xff]
        %v3262 = vld [vmem:[%s570 + $0x2f8] sm:$0xff]
        %v3263 = vld [vmem:[%s570 + $0x300] sm:$0xff]
        %v3264 = vld [vmem:[%s570 + $0x308] sm:$0xff]
        %v3265 = vld [vmem:[%s570 + $0x310] sm:$0xff]
        %v3266 = vld [vmem:[%s570 + $0x318] sm:$0xff]
        %v3267 = vld [vmem:[%s570 + $0x320] sm:$0xff]
        %v3268 = vld [vmem:[%s570 + $0x328] sm:$0xff]
        %v3269 = vld [vmem:[%s570 + $0x330] sm:$0xff]
        %v3270 = vld [vmem:[%s570 + $0x338] sm:$0xff]
        %v3271 = vld [vmem:[%s570 + $0x340] sm:$0xff]
        %v3272 = vld [vmem:[%s570 + $0x348] sm:$0xff]
        %v3273 = vld [vmem:[%s570 + $0x350] sm:$0xff]
        %v3274 = vld [vmem:[%s570 + $0x358] sm:$0xff]
        %v3275 = vld [vmem:[%s570 + $0x360] sm:$0xff]
        %v3276 = vld [vmem:[%s570 + $0x368] sm:$0xff]
        %v3277 = vld [vmem:[%s570 + $0x370] sm:$0xff]
        %v3278 = vld [vmem:[%s570 + $0x378] sm:$0xff]
        %v3279 = vld [vmem:[%s570 + $0x380] sm:$0xff]
        %v3280 = vld [vmem:[%s570 + $0x388] sm:$0xff]
        %v3281 = vld [vmem:[%s570 + $0x390] sm:$0xff]
        %v3282 = vld [vmem:[%s570 + $0x398] sm:$0xff]
        %v3283 = vld [vmem:[%s570 + $0x3a0] sm:$0xff]
        %v3284 = vld [vmem:[%s570 + $0x3a8] sm:$0xff]
        %v3285 = vld [vmem:[%s570 + $0x3b0] sm:$0xff]
        %v3286 = vld [vmem:[%s570 + $0x3b8] sm:$0xff]
        %v3287 = vld [vmem:[%s570 + $0x3c0] sm:$0xff]
        %v3288 = vld [vmem:[%s570 + $0x3c8] sm:$0xff]
        %v3289 = vld [vmem:[%s570 + $0x3d0] sm:$0xff]
        %v3290 = vld [vmem:[%s570 + $0x3d8] sm:$0xff]
        %v3291 = vld [vmem:[%s570 + $0x3e0] sm:$0xff]
        %v3292 = vld [vmem:[%s570 + $0x3e8] sm:$0xff]
        %v3293 = vld [vmem:[%s570 + $0x3f0] sm:$0xff]
        %v3294 = vld [vmem:[%s570 + $0x3f8] sm:$0xff]
        %v3295 = vld [vmem:[%s590] sm:$0xff]
        %v3296 = vld [vmem:[%s590 + $0x8] sm:$0xff]
        %v3297 = vld [vmem:[%s590 + $0x10] sm:$0xff]
        %v3298 = vld [vmem:[%s590 + $0x18] sm:$0xff]
        %v3299 = vld [vmem:[%s590 + $0x20] sm:$0xff]
        %v3300 = vld [vmem:[%s590 + $0x28] sm:$0xff]
        %v3301 = vld [vmem:[%s590 + $0x30] sm:$0xff]
        %v3302 = vld [vmem:[%s590 + $0x38] sm:$0xff]
        %v3303 = vld [vmem:[%s590 + $0x40] sm:$0xff]
        %v3304 = vld [vmem:[%s590 + $0x48] sm:$0xff]
        %v3305 = vld [vmem:[%s590 + $0x50] sm:$0xff]
        %v3306 = vld [vmem:[%s590 + $0x58] sm:$0xff]
        %v3307 = vld [vmem:[%s590 + $0x60] sm:$0xff]
        %v3308 = vld [vmem:[%s590 + $0x68] sm:$0xff]
        %v3309 = vld [vmem:[%s590 + $0x70] sm:$0xff]
        %v3310 = vld [vmem:[%s590 + $0x78] sm:$0xff]
        %v3311 = vld [vmem:[%s590 + $0x80] sm:$0xff]
        %v3312 = vld [vmem:[%s590 + $0x88] sm:$0xff]
        %v3313 = vld [vmem:[%s590 + $0x90] sm:$0xff]
        %v3314 = vld [vmem:[%s590 + $0x98] sm:$0xff]
        %v3315 = vld [vmem:[%s590 + $0xa0] sm:$0xff]
        %v3316 = vld [vmem:[%s590 + $0xa8] sm:$0xff]
        %v3317 = vld [vmem:[%s590 + $0xb0] sm:$0xff]
        %v3318 = vld [vmem:[%s590 + $0xb8] sm:$0xff]
        %v3319 = vld [vmem:[%s590 + $0xc0] sm:$0xff]
        %v3320 = vld [vmem:[%s590 + $0xc8] sm:$0xff]
        %v3321 = vld [vmem:[%s590 + $0xd0] sm:$0xff]
        %v3322 = vld [vmem:[%s590 + $0xd8] sm:$0xff]
        %v3323 = vld [vmem:[%s590 + $0xe0] sm:$0xff]
        %v3324 = vld [vmem:[%s590 + $0xe8] sm:$0xff]
        %v3325 = vld [vmem:[%s590 + $0xf0] sm:$0xff]
        %v3326 = vld [vmem:[%s590 + $0xf8] sm:$0xff]
        %v3327 = vld [vmem:[%s590 + $0x100] sm:$0xff]
        %v3328 = vld [vmem:[%s590 + $0x108] sm:$0xff]
        %v3329 = vld [vmem:[%s590 + $0x110] sm:$0xff]
        %v3330 = vld [vmem:[%s590 + $0x118] sm:$0xff]
        %v3331 = vld [vmem:[%s590 + $0x120] sm:$0xff]
        %v3332 = vld [vmem:[%s590 + $0x128] sm:$0xff]
        %v3333 = vld [vmem:[%s590 + $0x130] sm:$0xff]
        %v3334 = vld [vmem:[%s590 + $0x138] sm:$0xff]
        %v3335 = vld [vmem:[%s590 + $0x140] sm:$0xff]
        %v3336 = vld [vmem:[%s590 + $0x148] sm:$0xff]
        %v3337 = vld [vmem:[%s590 + $0x150] sm:$0xff]
        %v3338 = vld [vmem:[%s590 + $0x158] sm:$0xff]
        %v3339 = vld [vmem:[%s590 + $0x160] sm:$0xff]
        %v3340 = vld [vmem:[%s590 + $0x168] sm:$0xff]
        %v3341 = vld [vmem:[%s590 + $0x170] sm:$0xff]
        %v3342 = vld [vmem:[%s590 + $0x178] sm:$0xff]
        %v3343 = vld [vmem:[%s590 + $0x180] sm:$0xff]
        %v3344 = vld [vmem:[%s590 + $0x188] sm:$0xff]
        %v3345 = vld [vmem:[%s590 + $0x190] sm:$0xff]
        %v3346 = vld [vmem:[%s590 + $0x198] sm:$0xff]
        %v3347 = vld [vmem:[%s590 + $0x1a0] sm:$0xff]
        %v3348 = vld [vmem:[%s590 + $0x1a8] sm:$0xff]
        %v3349 = vld [vmem:[%s590 + $0x1b0] sm:$0xff]
        %v3350 = vld [vmem:[%s590 + $0x1b8] sm:$0xff]
        %v3351 = vld [vmem:[%s590 + $0x1c0] sm:$0xff]
        %v3352 = vld [vmem:[%s590 + $0x1c8] sm:$0xff]
        %v3353 = vld [vmem:[%s590 + $0x1d0] sm:$0xff]
        %v3354 = vld [vmem:[%s590 + $0x1d8] sm:$0xff]
        %v3355 = vld [vmem:[%s590 + $0x1e0] sm:$0xff]
        %v3356 = vld [vmem:[%s590 + $0x1e8] sm:$0xff]
        %v3357 = vld [vmem:[%s590 + $0x1f0] sm:$0xff]
        %v3358 = vld [vmem:[%s590 + $0x1f8] sm:$0xff]
        %v3359 = vld [vmem:[%s590 + $0x200] sm:$0xff]
        %v3360 = vld [vmem:[%s590 + $0x208] sm:$0xff]
        %v3361 = vld [vmem:[%s590 + $0x210] sm:$0xff]
        %v3362 = vld [vmem:[%s590 + $0x218] sm:$0xff]
        %v3363 = vld [vmem:[%s590 + $0x220] sm:$0xff]
        %v3364 = vld [vmem:[%s590 + $0x228] sm:$0xff]
        %v3365 = vld [vmem:[%s590 + $0x230] sm:$0xff]
        %v3366 = vld [vmem:[%s590 + $0x238] sm:$0xff]
        %v3367 = vld [vmem:[%s590 + $0x240] sm:$0xff]
        %v3368 = vld [vmem:[%s590 + $0x248] sm:$0xff]
        %v3369 = vld [vmem:[%s590 + $0x250] sm:$0xff]
        %v3370 = vld [vmem:[%s590 + $0x258] sm:$0xff]
        %v3371 = vld [vmem:[%s590 + $0x260] sm:$0xff]
        %v3372 = vld [vmem:[%s590 + $0x268] sm:$0xff]
        %v3373 = vld [vmem:[%s590 + $0x270] sm:$0xff]
        %v3374 = vld [vmem:[%s590 + $0x278] sm:$0xff]
        %v3375 = vld [vmem:[%s590 + $0x280] sm:$0xff]
        %v3376 = vld [vmem:[%s590 + $0x288] sm:$0xff]
        %v3377 = vld [vmem:[%s590 + $0x290] sm:$0xff]
        %v3378 = vld [vmem:[%s590 + $0x298] sm:$0xff]
        %v3379 = vld [vmem:[%s590 + $0x2a0] sm:$0xff]
        %v3380 = vld [vmem:[%s590 + $0x2a8] sm:$0xff]
        %v3381 = vld [vmem:[%s590 + $0x2b0] sm:$0xff]
        %v3382 = vld [vmem:[%s590 + $0x2b8] sm:$0xff]
        %v3383 = vld [vmem:[%s590 + $0x2c0] sm:$0xff]
        %v3384 = vld [vmem:[%s590 + $0x2c8] sm:$0xff]
        %v3385 = vld [vmem:[%s590 + $0x2d0] sm:$0xff]
        %v3386 = vld [vmem:[%s590 + $0x2d8] sm:$0xff]
        %v3387 = vld [vmem:[%s590 + $0x2e0] sm:$0xff]
        %v3388 = vld [vmem:[%s590 + $0x2e8] sm:$0xff]
        %v3389 = vld [vmem:[%s590 + $0x2f0] sm:$0xff]
        %v3390 = vld [vmem:[%s590 + $0x2f8] sm:$0xff]
        %v3391 = vld [vmem:[%s590 + $0x300] sm:$0xff]
        %v3392 = vld [vmem:[%s590 + $0x308] sm:$0xff]
        %v3393 = vld [vmem:[%s590 + $0x310] sm:$0xff]
        %v3394 = vld [vmem:[%s590 + $0x318] sm:$0xff]
        %v3395 = vld [vmem:[%s590 + $0x320] sm:$0xff]
        %v3396 = vld [vmem:[%s590 + $0x328] sm:$0xff]
        %v3397 = vld [vmem:[%s590 + $0x330] sm:$0xff]
        %v3398 = vld [vmem:[%s590 + $0x338] sm:$0xff]
        %v3399 = vld [vmem:[%s590 + $0x340] sm:$0xff]
        %v3400 = vld [vmem:[%s590 + $0x348] sm:$0xff]
        %v3401 = vld [vmem:[%s590 + $0x350] sm:$0xff]
        %v3402 = vld [vmem:[%s590 + $0x358] sm:$0xff]
        %v3403 = vld [vmem:[%s590 + $0x360] sm:$0xff]
        %v3404 = vld [vmem:[%s590 + $0x368] sm:$0xff]
        %v3405 = vld [vmem:[%s590 + $0x370] sm:$0xff]
        %v3406 = vld [vmem:[%s590 + $0x378] sm:$0xff]
        %v3407 = vld [vmem:[%s590 + $0x380] sm:$0xff]
        %v3408 = vld [vmem:[%s590 + $0x388] sm:$0xff]
        %v3409 = vld [vmem:[%s590 + $0x390] sm:$0xff]
        %v3410 = vld [vmem:[%s590 + $0x398] sm:$0xff]
        %v3411 = vld [vmem:[%s590 + $0x3a0] sm:$0xff]
        %v3412 = vld [vmem:[%s590 + $0x3a8] sm:$0xff]
        %v3413 = vld [vmem:[%s590 + $0x3b0] sm:$0xff]
        %v3414 = vld [vmem:[%s590 + $0x3b8] sm:$0xff]
        %v3415 = vld [vmem:[%s590 + $0x3c0] sm:$0xff]
        %v3416 = vld [vmem:[%s590 + $0x3c8] sm:$0xff]
        %v3417 = vld [vmem:[%s590 + $0x3d0] sm:$0xff]
        %v3418 = vld [vmem:[%s590 + $0x3d8] sm:$0xff]
        %v3419 = vld [vmem:[%s590 + $0x3e0] sm:$0xff]
        %v3420 = vld [vmem:[%s590 + $0x3e8] sm:$0xff]
        %v3421 = vld [vmem:[%s590 + $0x3f0] sm:$0xff]
        %v3422 = vld [vmem:[%s590 + $0x3f8] sm:$0xff]
        %v3423 = vadd.f32 %v3163, %v3164
        %3424 = vadd.xlane.f32.xlu0 %v3423
        %v3425 = vpop.xlane.xlu0 %3424
        %v3426 = vadd.f32 %v3165, %v3166
        %3427 = vadd.xlane.f32.xlu0 %v3426
        %v3428 = vpop.xlane.xlu0 %3427
        %v3429 = vmul.f32 %v3425, %v1050
        %v3430 = vmul.f32 %v3428, %v1050
        %v3431 = vmul.f32 %v3163, %v3163
        %v3432 = vmul.f32 %v3164, %v3164
        %v3433 = vmul.f32 %v3165, %v3165
        %v3434 = vmul.f32 %v3166, %v3166
        %v3435 = vadd.f32 %v3431, %v3432
        %3436 = vadd.xlane.f32.xlu0 %v3435
        %v3437 = vpop.xlane.xlu0 %3436
        %v3438 = vadd.f32 %v3433, %v3434
        %3439 = vadd.xlane.f32.xlu0 %v3438
        %v3440 = vpop.xlane.xlu0 %3439
        %v3441 = vmul.f32 %v3437, %v1050
        %v3442 = vmul.f32 %v3440, %v1050
        %v3443 = vmul.f32 %v3429, %v3429
        %v3444 = vmul.f32 %v3430, %v3430
        %v3445 = vsub.f32 %v3441, %v3443
        %v3446 = vsub.f32 %v3442, %v3444
        %v3447 = vmax.f32 %v3445, 0.0
        %v3448 = vmax.f32 %v3446, 0.0
        %v3449 = vsub.f32 %v3163, %v3429
        %v3450 = vsub.f32 %v3164, %v3429
        %v3451 = vsub.f32 %v3165, %v3430
        %v3452 = vsub.f32 %v3166, %v3430
        %v3453 = vadd.f32 %v3447, 1e-12
        %v3454 = vadd.f32 %v3448, 1e-12
        %v3455 = vrsqrt.pop %v3453
        %v3456 = vmul.f32 %v3455, %v3453
        %v3457 = vmul.f32 %v3456, %v3455
        %v3458 = vmul.f32 0.5, %v3457
        %v3459 = vsub.f32 1.5, %v3458
        %v3460 = vmul.f32 %v3455, %v3459
        %vm3461 = vweird.f32 %v3453
        %vm3462 = vweird.f32 %v3455
        %vm3463 = vmor %vm3461, %vm3462
        %v3464 = vsel %vm3463, %v3455, %v3460
        %v3465 = vrsqrt.pop %v3454
        %v3466 = vmul.f32 %v3465, %v3454
        %v3467 = vmul.f32 %v3466, %v3465
        %v3468 = vmul.f32 0.5, %v3467
        %v3469 = vsub.f32 1.5, %v3468
        %v3470 = vmul.f32 %v3465, %v3469
        %vm3471 = vweird.f32 %v3454
        %vm3472 = vweird.f32 %v3465
        %vm3473 = vmor %vm3471, %vm3472
        %v3474 = vsel %vm3473, %v3465, %v3470
        %v3475 = vmul.f32 %v3449, %v3464
        %v3476 = vmul.f32 %v3450, %v3464
        %v3477 = vmul.f32 %v3451, %v3474
        %v3478 = vmul.f32 %v3452, %v3474
        %v3480 = vperm.slane %v931, 0
        %v3481 = vperm.slane %v931, 1
        %v3484 = vmul.f32 %v3475, %v3480
        %v3485 = vmul.f32 %v3476, %v3481
        %v3486 = vmul.f32 %v3477, %v3480
        %v3487 = vmul.f32 %v3478, %v3481
        %v3489 = vperm.slane %v933, 0
        %v3490 = vperm.slane %v933, 1
        %v3493 = vadd.f32 %v3484, %v3489
        %v3494 = vadd.f32 %v3485, %v3490
        %v3495 = vadd.f32 %v3486, %v3489
        %v3496 = vadd.f32 %v3487, %v3490
        %v3497 = vpack.c.bf16 %v3495, %v3493
        %v3498 = vpack.c.bf16 %v3496, %v3494
        %v3499 = vld [vmem:[%s580] sm:$0xff]
        %v3501 = vperm.slane %v3499, 0
        %v3502 = vperm.slane %v3499, 1
        %v3503 = vperm.slane %v3499, 2
        %v3504 = vperm.slane %v3499, 3
        %v3505 = vperm.slane %v3499, 4
        %v3506 = vperm.slane %v3499, 5
        %v3507 = vperm.slane %v3499, 6
        %v3508 = vperm.slane %v3499, 7
        %v3645 = vunpack.c.l.b16 %v3167
        %v3646 = vunpack.c.h.b16 %v3167
        %v3647 = vunpack.c.l.b16 %v3168
        %v3648 = vunpack.c.h.b16 %v3168
        %v3649 = vunpack.c.l.b16 %v3169
        %v3650 = vunpack.c.h.b16 %v3169
        %v3651 = vunpack.c.l.b16 %v3170
        %v3652 = vunpack.c.h.b16 %v3170
        %v3653 = vunpack.c.l.b16 %v3171
        %v3654 = vunpack.c.h.b16 %v3171
        %v3655 = vunpack.c.l.b16 %v3172
        %v3656 = vunpack.c.h.b16 %v3172
        %v3657 = vunpack.c.l.b16 %v3173
        %v3658 = vunpack.c.h.b16 %v3173
        %v3659 = vunpack.c.l.b16 %v3174
        %v3660 = vunpack.c.h.b16 %v3174
        %v3661 = vunpack.c.l.b16 %v3175
        %v3662 = vunpack.c.h.b16 %v3175
        %v3663 = vunpack.c.l.b16 %v3176
        %v3664 = vunpack.c.h.b16 %v3176
        %v3665 = vunpack.c.l.b16 %v3177
        %v3666 = vunpack.c.h.b16 %v3177
        %v3667 = vunpack.c.l.b16 %v3178
        %v3668 = vunpack.c.h.b16 %v3178
        %v3669 = vunpack.c.l.b16 %v3179
        %v3670 = vunpack.c.h.b16 %v3179
        %v3671 = vunpack.c.l.b16 %v3180
        %v3672 = vunpack.c.h.b16 %v3180
        %v3673 = vunpack.c.l.b16 %v3181
        %v3674 = vunpack.c.h.b16 %v3181
        %v3675 = vunpack.c.l.b16 %v3182
        %v3676 = vunpack.c.h.b16 %v3182
        %v3677 = vunpack.c.l.b16 %v3183
        %v3678 = vunpack.c.h.b16 %v3183
        %v3679 = vunpack.c.l.b16 %v3184
        %v3680 = vunpack.c.h.b16 %v3184
        %v3681 = vunpack.c.l.b16 %v3185
        %v3682 = vunpack.c.h.b16 %v3185
        %v3683 = vunpack.c.l.b16 %v3186
        %v3684 = vunpack.c.h.b16 %v3186
        %v3685 = vunpack.c.l.b16 %v3187
        %v3686 = vunpack.c.h.b16 %v3187
        %v3687 = vunpack.c.l.b16 %v3188
        %v3688 = vunpack.c.h.b16 %v3188
        %v3689 = vunpack.c.l.b16 %v3189
        %v3690 = vunpack.c.h.b16 %v3189
        %v3691 = vunpack.c.l.b16 %v3190
        %v3692 = vunpack.c.h.b16 %v3190
        %v3693 = vunpack.c.l.b16 %v3191
        %v3694 = vunpack.c.h.b16 %v3191
        %v3695 = vunpack.c.l.b16 %v3192
        %v3696 = vunpack.c.h.b16 %v3192
        %v3697 = vunpack.c.l.b16 %v3193
        %v3698 = vunpack.c.h.b16 %v3193
        %v3699 = vunpack.c.l.b16 %v3194
        %v3700 = vunpack.c.h.b16 %v3194
        %v3701 = vunpack.c.l.b16 %v3195
        %v3702 = vunpack.c.h.b16 %v3195
        %v3703 = vunpack.c.l.b16 %v3196
        %v3704 = vunpack.c.h.b16 %v3196
        %v3705 = vunpack.c.l.b16 %v3197
        %v3706 = vunpack.c.h.b16 %v3197
        %v3707 = vunpack.c.l.b16 %v3198
        %v3708 = vunpack.c.h.b16 %v3198
        %v3709 = vunpack.c.l.b16 %v3199
        %v3710 = vunpack.c.h.b16 %v3199
        %v3711 = vunpack.c.l.b16 %v3200
        %v3712 = vunpack.c.h.b16 %v3200
        %v3713 = vunpack.c.l.b16 %v3201
        %v3714 = vunpack.c.h.b16 %v3201
        %v3715 = vunpack.c.l.b16 %v3202
        %v3716 = vunpack.c.h.b16 %v3202
        %v3717 = vunpack.c.l.b16 %v3203
        %v3718 = vunpack.c.h.b16 %v3203
        %v3719 = vunpack.c.l.b16 %v3204
        %v3720 = vunpack.c.h.b16 %v3204
        %v3721 = vunpack.c.l.b16 %v3205
        %v3722 = vunpack.c.h.b16 %v3205
        %v3723 = vunpack.c.l.b16 %v3206
        %v3724 = vunpack.c.h.b16 %v3206
        %v3725 = vunpack.c.l.b16 %v3207
        %v3726 = vunpack.c.h.b16 %v3207
        %v3727 = vunpack.c.l.b16 %v3208
        %v3728 = vunpack.c.h.b16 %v3208
        %v3729 = vunpack.c.l.b16 %v3209
        %v3730 = vunpack.c.h.b16 %v3209
        %v3731 = vunpack.c.l.b16 %v3210
        %v3732 = vunpack.c.h.b16 %v3210
        %v3733 = vunpack.c.l.b16 %v3211
        %v3734 = vunpack.c.h.b16 %v3211
        %v3735 = vunpack.c.l.b16 %v3212
        %v3736 = vunpack.c.h.b16 %v3212
        %v3737 = vunpack.c.l.b16 %v3213
        %v3738 = vunpack.c.h.b16 %v3213
        %v3739 = vunpack.c.l.b16 %v3214
        %v3740 = vunpack.c.h.b16 %v3214
        %v3741 = vunpack.c.l.b16 %v3215
        %v3742 = vunpack.c.h.b16 %v3215
        %v3743 = vunpack.c.l.b16 %v3216
        %v3744 = vunpack.c.h.b16 %v3216
        %v3745 = vunpack.c.l.b16 %v3217
        %v3746 = vunpack.c.h.b16 %v3217
        %v3747 = vunpack.c.l.b16 %v3218
        %v3748 = vunpack.c.h.b16 %v3218
        %v3749 = vunpack.c.l.b16 %v3219
        %v3750 = vunpack.c.h.b16 %v3219
        %v3751 = vunpack.c.l.b16 %v3220
        %v3752 = vunpack.c.h.b16 %v3220
        %v3753 = vunpack.c.l.b16 %v3221
        %v3754 = vunpack.c.h.b16 %v3221
        %v3755 = vunpack.c.l.b16 %v3222
        %v3756 = vunpack.c.h.b16 %v3222
        %v3757 = vunpack.c.l.b16 %v3223
        %v3758 = vunpack.c.h.b16 %v3223
        %v3759 = vunpack.c.l.b16 %v3224
        %v3760 = vunpack.c.h.b16 %v3224
        %v3761 = vunpack.c.l.b16 %v3225
        %v3762 = vunpack.c.h.b16 %v3225
        %v3763 = vunpack.c.l.b16 %v3226
        %v3764 = vunpack.c.h.b16 %v3226
        %v3765 = vunpack.c.l.b16 %v3227
        %v3766 = vunpack.c.h.b16 %v3227
        %v3767 = vunpack.c.l.b16 %v3228
        %v3768 = vunpack.c.h.b16 %v3228
        %v3769 = vunpack.c.l.b16 %v3229
        %v3770 = vunpack.c.h.b16 %v3229
        %v3771 = vunpack.c.l.b16 %v3230
        %v3772 = vunpack.c.h.b16 %v3230
        %v3773 = vunpack.c.l.b16 %v3231
        %v3774 = vunpack.c.h.b16 %v3231
        %v3775 = vunpack.c.l.b16 %v3232
        %v3776 = vunpack.c.h.b16 %v3232
        %v3777 = vunpack.c.l.b16 %v3233
        %v3778 = vunpack.c.h.b16 %v3233
        %v3779 = vunpack.c.l.b16 %v3234
        %v3780 = vunpack.c.h.b16 %v3234
        %v3781 = vunpack.c.l.b16 %v3235
        %v3782 = vunpack.c.h.b16 %v3235
        %v3783 = vunpack.c.l.b16 %v3236
        %v3784 = vunpack.c.h.b16 %v3236
        %v3785 = vunpack.c.l.b16 %v3237
        %v3786 = vunpack.c.h.b16 %v3237
        %v3787 = vunpack.c.l.b16 %v3238
        %v3788 = vunpack.c.h.b16 %v3238
        %v3789 = vunpack.c.l.b16 %v3239
        %v3790 = vunpack.c.h.b16 %v3239
        %v3791 = vunpack.c.l.b16 %v3240
        %v3792 = vunpack.c.h.b16 %v3240
        %v3793 = vunpack.c.l.b16 %v3241
        %v3794 = vunpack.c.h.b16 %v3241
        %v3795 = vunpack.c.l.b16 %v3242
        %v3796 = vunpack.c.h.b16 %v3242
        %v3797 = vunpack.c.l.b16 %v3243
        %v3798 = vunpack.c.h.b16 %v3243
        %v3799 = vunpack.c.l.b16 %v3244
        %v3800 = vunpack.c.h.b16 %v3244
        %v3801 = vunpack.c.l.b16 %v3245
        %v3802 = vunpack.c.h.b16 %v3245
        %v3803 = vunpack.c.l.b16 %v3246
        %v3804 = vunpack.c.h.b16 %v3246
        %v3805 = vunpack.c.l.b16 %v3247
        %v3806 = vunpack.c.h.b16 %v3247
        %v3807 = vunpack.c.l.b16 %v3248
        %v3808 = vunpack.c.h.b16 %v3248
        %v3809 = vunpack.c.l.b16 %v3249
        %v3810 = vunpack.c.h.b16 %v3249
        %v3811 = vunpack.c.l.b16 %v3250
        %v3812 = vunpack.c.h.b16 %v3250
        %v3813 = vunpack.c.l.b16 %v3251
        %v3814 = vunpack.c.h.b16 %v3251
        %v3815 = vunpack.c.l.b16 %v3252
        %v3816 = vunpack.c.h.b16 %v3252
        %v3817 = vunpack.c.l.b16 %v3253
        %v3818 = vunpack.c.h.b16 %v3253
        %v3819 = vunpack.c.l.b16 %v3254
        %v3820 = vunpack.c.h.b16 %v3254
        %v3821 = vunpack.c.l.b16 %v3255
        %v3822 = vunpack.c.h.b16 %v3255
        %v3823 = vunpack.c.l.b16 %v3256
        %v3824 = vunpack.c.h.b16 %v3256
        %v3825 = vunpack.c.l.b16 %v3257
        %v3826 = vunpack.c.h.b16 %v3257
        %v3827 = vunpack.c.l.b16 %v3258
        %v3828 = vunpack.c.h.b16 %v3258
        %v3829 = vunpack.c.l.b16 %v3259
        %v3830 = vunpack.c.h.b16 %v3259
        %v3831 = vunpack.c.l.b16 %v3260
        %v3832 = vunpack.c.h.b16 %v3260
        %v3833 = vunpack.c.l.b16 %v3261
        %v3834 = vunpack.c.h.b16 %v3261
        %v3835 = vunpack.c.l.b16 %v3262
        %v3836 = vunpack.c.h.b16 %v3262
        %v3837 = vunpack.c.l.b16 %v3263
        %v3838 = vunpack.c.h.b16 %v3263
        %v3839 = vunpack.c.l.b16 %v3264
        %v3840 = vunpack.c.h.b16 %v3264
        %v3841 = vunpack.c.l.b16 %v3265
        %v3842 = vunpack.c.h.b16 %v3265
        %v3843 = vunpack.c.l.b16 %v3266
        %v3844 = vunpack.c.h.b16 %v3266
        %v3845 = vunpack.c.l.b16 %v3267
        %v3846 = vunpack.c.h.b16 %v3267
        %v3847 = vunpack.c.l.b16 %v3268
        %v3848 = vunpack.c.h.b16 %v3268
        %v3849 = vunpack.c.l.b16 %v3269
        %v3850 = vunpack.c.h.b16 %v3269
        %v3851 = vunpack.c.l.b16 %v3270
        %v3852 = vunpack.c.h.b16 %v3270
        %v3853 = vunpack.c.l.b16 %v3271
        %v3854 = vunpack.c.h.b16 %v3271
        %v3855 = vunpack.c.l.b16 %v3272
        %v3856 = vunpack.c.h.b16 %v3272
        %v3857 = vunpack.c.l.b16 %v3273
        %v3858 = vunpack.c.h.b16 %v3273
        %v3859 = vunpack.c.l.b16 %v3274
        %v3860 = vunpack.c.h.b16 %v3274
        %v3861 = vunpack.c.l.b16 %v3275
        %v3862 = vunpack.c.h.b16 %v3275
        %v3863 = vunpack.c.l.b16 %v3276
        %v3864 = vunpack.c.h.b16 %v3276
        %v3865 = vunpack.c.l.b16 %v3277
        %v3866 = vunpack.c.h.b16 %v3277
        %v3867 = vunpack.c.l.b16 %v3278
        %v3868 = vunpack.c.h.b16 %v3278
        %v3869 = vunpack.c.l.b16 %v3279
        %v3870 = vunpack.c.h.b16 %v3279
        %v3871 = vunpack.c.l.b16 %v3280
        %v3872 = vunpack.c.h.b16 %v3280
        %v3873 = vunpack.c.l.b16 %v3281
        %v3874 = vunpack.c.h.b16 %v3281
        %v3875 = vunpack.c.l.b16 %v3282
        %v3876 = vunpack.c.h.b16 %v3282
        %v3877 = vunpack.c.l.b16 %v3283
        %v3878 = vunpack.c.h.b16 %v3283
        %v3879 = vunpack.c.l.b16 %v3284
        %v3880 = vunpack.c.h.b16 %v3284
        %v3881 = vunpack.c.l.b16 %v3285
        %v3882 = vunpack.c.h.b16 %v3285
        %v3883 = vunpack.c.l.b16 %v3286
        %v3884 = vunpack.c.h.b16 %v3286
        %v3885 = vunpack.c.l.b16 %v3287
        %v3886 = vunpack.c.h.b16 %v3287
        %v3887 = vunpack.c.l.b16 %v3288
        %v3888 = vunpack.c.h.b16 %v3288
        %v3889 = vunpack.c.l.b16 %v3289
        %v3890 = vunpack.c.h.b16 %v3289
        %v3891 = vunpack.c.l.b16 %v3290
        %v3892 = vunpack.c.h.b16 %v3290
        %v3893 = vunpack.c.l.b16 %v3291
        %v3894 = vunpack.c.h.b16 %v3291
        %v3895 = vunpack.c.l.b16 %v3292
        %v3896 = vunpack.c.h.b16 %v3292
        %v3897 = vunpack.c.l.b16 %v3293
        %v3898 = vunpack.c.h.b16 %v3293
        %v3899 = vunpack.c.l.b16 %v3294
        %v3900 = vunpack.c.h.b16 %v3294
        %v3901 = vpack.c.b16 %v3653, %v3645
        %v3902 = vpack.c.b16 %v3654, %v3646
        %v3903 = vpack.c.b16 %v3655, %v3647
        %v3904 = vpack.c.b16 %v3656, %v3648
        %v3905 = vpack.c.b16 %v3657, %v3649
        %v3906 = vpack.c.b16 %v3658, %v3650
        %v3907 = vpack.c.b16 %v3659, %v3651
        %v3908 = vpack.c.b16 %v3660, %v3652
        %v3909 = vpack.c.b16 %v3669, %v3661
        %v3910 = vpack.c.b16 %v3670, %v3662
        %v3911 = vpack.c.b16 %v3671, %v3663
        %v3912 = vpack.c.b16 %v3672, %v3664
        %v3913 = vpack.c.b16 %v3673, %v3665
        %v3914 = vpack.c.b16 %v3674, %v3666
        %v3915 = vpack.c.b16 %v3675, %v3667
        %v3916 = vpack.c.b16 %v3676, %v3668
        %v3917 = vpack.c.b16 %v3685, %v3677
        %v3918 = vpack.c.b16 %v3686, %v3678
        %v3919 = vpack.c.b16 %v3687, %v3679
        %v3920 = vpack.c.b16 %v3688, %v3680
        %v3921 = vpack.c.b16 %v3689, %v3681
        %v3922 = vpack.c.b16 %v3690, %v3682
        %v3923 = vpack.c.b16 %v3691, %v3683
        %v3924 = vpack.c.b16 %v3692, %v3684
        %v3925 = vpack.c.b16 %v3701, %v3693
        %v3926 = vpack.c.b16 %v3702, %v3694
        %v3927 = vpack.c.b16 %v3703, %v3695
        %v3928 = vpack.c.b16 %v3704, %v3696
        %v3929 = vpack.c.b16 %v3705, %v3697
        %v3930 = vpack.c.b16 %v3706, %v3698
        %v3931 = vpack.c.b16 %v3707, %v3699
        %v3932 = vpack.c.b16 %v3708, %v3700
        %v3933 = vpack.c.b16 %v3717, %v3709
        %v3934 = vpack.c.b16 %v3718, %v3710
        %v3935 = vpack.c.b16 %v3719, %v3711
        %v3936 = vpack.c.b16 %v3720, %v3712
        %v3937 = vpack.c.b16 %v3721, %v3713
        %v3938 = vpack.c.b16 %v3722, %v3714
        %v3939 = vpack.c.b16 %v3723, %v3715
        %v3940 = vpack.c.b16 %v3724, %v3716
        %v3941 = vpack.c.b16 %v3733, %v3725
        %v3942 = vpack.c.b16 %v3734, %v3726
        %v3943 = vpack.c.b16 %v3735, %v3727
        %v3944 = vpack.c.b16 %v3736, %v3728
        %v3945 = vpack.c.b16 %v3737, %v3729
        %v3946 = vpack.c.b16 %v3738, %v3730
        %v3947 = vpack.c.b16 %v3739, %v3731
        %v3948 = vpack.c.b16 %v3740, %v3732
        %v3949 = vpack.c.b16 %v3749, %v3741
        %v3950 = vpack.c.b16 %v3750, %v3742
        %v3951 = vpack.c.b16 %v3751, %v3743
        %v3952 = vpack.c.b16 %v3752, %v3744
        %v3953 = vpack.c.b16 %v3753, %v3745
        %v3954 = vpack.c.b16 %v3754, %v3746
        %v3955 = vpack.c.b16 %v3755, %v3747
        %v3956 = vpack.c.b16 %v3756, %v3748
        %v3957 = vpack.c.b16 %v3765, %v3757
        %v3958 = vpack.c.b16 %v3766, %v3758
        %v3959 = vpack.c.b16 %v3767, %v3759
        %v3960 = vpack.c.b16 %v3768, %v3760
        %v3961 = vpack.c.b16 %v3769, %v3761
        %v3962 = vpack.c.b16 %v3770, %v3762
        %v3963 = vpack.c.b16 %v3771, %v3763
        %v3964 = vpack.c.b16 %v3772, %v3764
        %v3965 = vpack.c.b16 %v3781, %v3773
        %v3966 = vpack.c.b16 %v3782, %v3774
        %v3967 = vpack.c.b16 %v3783, %v3775
        %v3968 = vpack.c.b16 %v3784, %v3776
        %v3969 = vpack.c.b16 %v3785, %v3777
        %v3970 = vpack.c.b16 %v3786, %v3778
        %v3971 = vpack.c.b16 %v3787, %v3779
        %v3972 = vpack.c.b16 %v3788, %v3780
        %v3973 = vpack.c.b16 %v3797, %v3789
        %v3974 = vpack.c.b16 %v3798, %v3790
        %v3975 = vpack.c.b16 %v3799, %v3791
        %v3976 = vpack.c.b16 %v3800, %v3792
        %v3977 = vpack.c.b16 %v3801, %v3793
        %v3978 = vpack.c.b16 %v3802, %v3794
        %v3979 = vpack.c.b16 %v3803, %v3795
        %v3980 = vpack.c.b16 %v3804, %v3796
        %v3981 = vpack.c.b16 %v3813, %v3805
        %v3982 = vpack.c.b16 %v3814, %v3806
        %v3983 = vpack.c.b16 %v3815, %v3807
        %v3984 = vpack.c.b16 %v3816, %v3808
        %v3985 = vpack.c.b16 %v3817, %v3809
        %v3986 = vpack.c.b16 %v3818, %v3810
        %v3987 = vpack.c.b16 %v3819, %v3811
        %v3988 = vpack.c.b16 %v3820, %v3812
        %v3989 = vpack.c.b16 %v3829, %v3821
        %v3990 = vpack.c.b16 %v3830, %v3822
        %v3991 = vpack.c.b16 %v3831, %v3823
        %v3992 = vpack.c.b16 %v3832, %v3824
        %v3993 = vpack.c.b16 %v3833, %v3825
        %v3994 = vpack.c.b16 %v3834, %v3826
        %v3995 = vpack.c.b16 %v3835, %v3827
        %v3996 = vpack.c.b16 %v3836, %v3828
        %v3997 = vpack.c.b16 %v3845, %v3837
        %v3998 = vpack.c.b16 %v3846, %v3838
        %v3999 = vpack.c.b16 %v3847, %v3839
        %v4000 = vpack.c.b16 %v3848, %v3840
        %v4001 = vpack.c.b16 %v3849, %v3841
        %v4002 = vpack.c.b16 %v3850, %v3842
        %v4003 = vpack.c.b16 %v3851, %v3843
        %v4004 = vpack.c.b16 %v3852, %v3844
        %v4005 = vpack.c.b16 %v3861, %v3853
        %v4006 = vpack.c.b16 %v3862, %v3854
        %v4007 = vpack.c.b16 %v3863, %v3855
        %v4008 = vpack.c.b16 %v3864, %v3856
        %v4009 = vpack.c.b16 %v3865, %v3857
        %v4010 = vpack.c.b16 %v3866, %v3858
        %v4011 = vpack.c.b16 %v3867, %v3859
        %v4012 = vpack.c.b16 %v3868, %v3860
        %v4013 = vpack.c.b16 %v3877, %v3869
        %v4014 = vpack.c.b16 %v3878, %v3870
        %v4015 = vpack.c.b16 %v3879, %v3871
        %v4016 = vpack.c.b16 %v3880, %v3872
        %v4017 = vpack.c.b16 %v3881, %v3873
        %v4018 = vpack.c.b16 %v3882, %v3874
        %v4019 = vpack.c.b16 %v3883, %v3875
        %v4020 = vpack.c.b16 %v3884, %v3876
        %v4021 = vpack.c.b16 %v3893, %v3885
        %v4022 = vpack.c.b16 %v3894, %v3886
        %v4023 = vpack.c.b16 %v3895, %v3887
        %v4024 = vpack.c.b16 %v3896, %v3888
        %v4025 = vpack.c.b16 %v3897, %v3889
        %v4026 = vpack.c.b16 %v3898, %v3890
        %v4027 = vpack.c.b16 %v3899, %v3891
        %v4028 = vpack.c.b16 %v3900, %v3892
        %4157 = vmatpush.bf16.msra.mxu0 %v3957
        %4158 = vmatpush.bf16.msra.mxu0 %v3949
        %4159 = vmatpush.bf16.msra.mxu0 %v3941
        %4160 = vmatpush.bf16.msra.mxu0 %v3933
        %4161 = vmatpush.bf16.msra.mxu0 %v3925
        %4162 = vmatpush.bf16.msra.mxu0 %v3917
        %4163 = vmatpush.bf16.msra.mxu0 %v3909
        %4164 = vmatpush.bf16.msra.mxu0 %v3901
        %4165 = vmatmul.bf16.gmra.mxu0 %v3497
        %v4166 = vpop.f32.mrf.mxu0
        %v4167 = vadd.f32 %v3501, %v4166
        %v4168 = vpop.f32.mrf.mxu0
        %v4169 = vadd.f32 %v3501, %v4168
        %4170 = vdwg.mxu0
        %4171 = vmatpush.bf16.msra.mxu0 %v4021
        %4172 = vmatpush.bf16.msra.mxu0 %v4013
        %4173 = vmatpush.bf16.msra.mxu0 %v4005
        %4174 = vmatpush.bf16.msra.mxu0 %v3997
        %4175 = vmatpush.bf16.msra.mxu0 %v3989
        %4176 = vmatpush.bf16.msra.mxu0 %v3981
        %4177 = vmatpush.bf16.msra.mxu0 %v3973
        %4178 = vmatpush.bf16.msra.mxu0 %v3965
        %4179 = vmatmul.bf16.gmra.mxu0 %v3498
        %v4180 = vpop.f32.mrf.mxu0
        %v4181 = vadd.f32 %v4167, %v4180
        %v4182 = vpop.f32.mrf.mxu0
        %v4183 = vadd.f32 %v4169, %v4182
        %4184 = vdwg.mxu0
        %4185 = vmatpush.bf16.msra.mxu0 %v3958
        %4186 = vmatpush.bf16.msra.mxu0 %v3950
        %4187 = vmatpush.bf16.msra.mxu0 %v3942
        %4188 = vmatpush.bf16.msra.mxu0 %v3934
        %4189 = vmatpush.bf16.msra.mxu0 %v3926
        %4190 = vmatpush.bf16.msra.mxu0 %v3918
        %4191 = vmatpush.bf16.msra.mxu0 %v3910
        %4192 = vmatpush.bf16.msra.mxu0 %v3902
        %4193 = vmatmul.bf16.gmra.mxu0 %v3497
        %v4194 = vpop.f32.mrf.mxu0
        %v4195 = vadd.f32 %v3502, %v4194
        %v4196 = vpop.f32.mrf.mxu0
        %v4197 = vadd.f32 %v3502, %v4196
        %4198 = vdwg.mxu0
        %4199 = vmatpush.bf16.msra.mxu0 %v4022
        %4200 = vmatpush.bf16.msra.mxu0 %v4014
        %4201 = vmatpush.bf16.msra.mxu0 %v4006
        %4202 = vmatpush.bf16.msra.mxu0 %v3998
        %4203 = vmatpush.bf16.msra.mxu0 %v3990
        %4204 = vmatpush.bf16.msra.mxu0 %v3982
        %4205 = vmatpush.bf16.msra.mxu0 %v3974
        %4206 = vmatpush.bf16.msra.mxu0 %v3966
        %4207 = vmatmul.bf16.gmra.mxu0 %v3498
        %v4208 = vpop.f32.mrf.mxu0
        %v4209 = vadd.f32 %v4195, %v4208
        %v4210 = vpop.f32.mrf.mxu0
        %v4211 = vadd.f32 %v4197, %v4210
        %4212 = vdwg.mxu0
        %4213 = vmatpush.bf16.msra.mxu0 %v3959
        %4214 = vmatpush.bf16.msra.mxu0 %v3951
        %4215 = vmatpush.bf16.msra.mxu0 %v3943
        %4216 = vmatpush.bf16.msra.mxu0 %v3935
        %4217 = vmatpush.bf16.msra.mxu0 %v3927
        %4218 = vmatpush.bf16.msra.mxu0 %v3919
        %4219 = vmatpush.bf16.msra.mxu0 %v3911
        %4220 = vmatpush.bf16.msra.mxu0 %v3903
        %4221 = vmatmul.bf16.gmra.mxu0 %v3497
        %v4222 = vpop.f32.mrf.mxu0
        %v4223 = vadd.f32 %v3503, %v4222
        %v4224 = vpop.f32.mrf.mxu0
        %v4225 = vadd.f32 %v3503, %v4224
        %4226 = vdwg.mxu0
        %4227 = vmatpush.bf16.msra.mxu0 %v4023
        %4228 = vmatpush.bf16.msra.mxu0 %v4015
        %4229 = vmatpush.bf16.msra.mxu0 %v4007
        %4230 = vmatpush.bf16.msra.mxu0 %v3999
        %4231 = vmatpush.bf16.msra.mxu0 %v3991
        %4232 = vmatpush.bf16.msra.mxu0 %v3983
        %4233 = vmatpush.bf16.msra.mxu0 %v3975
        %4234 = vmatpush.bf16.msra.mxu0 %v3967
        %4235 = vmatmul.bf16.gmra.mxu0 %v3498
        %v4236 = vpop.f32.mrf.mxu0
        %v4237 = vadd.f32 %v4223, %v4236
        %v4238 = vpop.f32.mrf.mxu0
        %v4239 = vadd.f32 %v4225, %v4238
        %4240 = vdwg.mxu0
        %4241 = vmatpush.bf16.msra.mxu0 %v3960
        %4242 = vmatpush.bf16.msra.mxu0 %v3952
        %4243 = vmatpush.bf16.msra.mxu0 %v3944
        %4244 = vmatpush.bf16.msra.mxu0 %v3936
        %4245 = vmatpush.bf16.msra.mxu0 %v3928
        %4246 = vmatpush.bf16.msra.mxu0 %v3920
        %4247 = vmatpush.bf16.msra.mxu0 %v3912
        %4248 = vmatpush.bf16.msra.mxu0 %v3904
        %4249 = vmatmul.bf16.gmra.mxu0 %v3497
        %v4250 = vpop.f32.mrf.mxu0
        %v4251 = vadd.f32 %v3504, %v4250
        %v4252 = vpop.f32.mrf.mxu0
        %v4253 = vadd.f32 %v3504, %v4252
        %4254 = vdwg.mxu0
        %4255 = vmatpush.bf16.msra.mxu0 %v4024
        %4256 = vmatpush.bf16.msra.mxu0 %v4016
        %4257 = vmatpush.bf16.msra.mxu0 %v4008
        %4258 = vmatpush.bf16.msra.mxu0 %v4000
        %4259 = vmatpush.bf16.msra.mxu0 %v3992
        %4260 = vmatpush.bf16.msra.mxu0 %v3984
        %4261 = vmatpush.bf16.msra.mxu0 %v3976
        %4262 = vmatpush.bf16.msra.mxu0 %v3968
        %4263 = vmatmul.bf16.gmra.mxu0 %v3498
        %v4264 = vpop.f32.mrf.mxu0
        %v4265 = vadd.f32 %v4251, %v4264
        %v4266 = vpop.f32.mrf.mxu0
        %v4267 = vadd.f32 %v4253, %v4266
        %4268 = vdwg.mxu0
        %4269 = vmatpush.bf16.msra.mxu0 %v3961
        %4270 = vmatpush.bf16.msra.mxu0 %v3953
        %4271 = vmatpush.bf16.msra.mxu0 %v3945
        %4272 = vmatpush.bf16.msra.mxu0 %v3937
        %4273 = vmatpush.bf16.msra.mxu0 %v3929
        %4274 = vmatpush.bf16.msra.mxu0 %v3921
        %4275 = vmatpush.bf16.msra.mxu0 %v3913
        %4276 = vmatpush.bf16.msra.mxu0 %v3905
        %4277 = vmatmul.bf16.gmra.mxu0 %v3497
        %v4278 = vpop.f32.mrf.mxu0
        %v4279 = vadd.f32 %v3505, %v4278
        %v4280 = vpop.f32.mrf.mxu0
        %v4281 = vadd.f32 %v3505, %v4280
        %4282 = vdwg.mxu0
        %4283 = vmatpush.bf16.msra.mxu0 %v4025
        %4284 = vmatpush.bf16.msra.mxu0 %v4017
        %4285 = vmatpush.bf16.msra.mxu0 %v4009
        %4286 = vmatpush.bf16.msra.mxu0 %v4001
        %4287 = vmatpush.bf16.msra.mxu0 %v3993
        %4288 = vmatpush.bf16.msra.mxu0 %v3985
        %4289 = vmatpush.bf16.msra.mxu0 %v3977
        %4290 = vmatpush.bf16.msra.mxu0 %v3969
        %4291 = vmatmul.bf16.gmra.mxu0 %v3498
        %v4292 = vpop.f32.mrf.mxu0
        %v4293 = vadd.f32 %v4279, %v4292
        %v4294 = vpop.f32.mrf.mxu0
        %v4295 = vadd.f32 %v4281, %v4294
        %4296 = vdwg.mxu0
        %4297 = vmatpush.bf16.msra.mxu0 %v3962
        %4298 = vmatpush.bf16.msra.mxu0 %v3954
        %4299 = vmatpush.bf16.msra.mxu0 %v3946
        %4300 = vmatpush.bf16.msra.mxu0 %v3938
        %4301 = vmatpush.bf16.msra.mxu0 %v3930
        %4302 = vmatpush.bf16.msra.mxu0 %v3922
        %4303 = vmatpush.bf16.msra.mxu0 %v3914
        %4304 = vmatpush.bf16.msra.mxu0 %v3906
        %4305 = vmatmul.bf16.gmra.mxu0 %v3497
        %v4306 = vpop.f32.mrf.mxu0
        %v4307 = vadd.f32 %v3506, %v4306
        %v4308 = vpop.f32.mrf.mxu0
        %v4309 = vadd.f32 %v3506, %v4308
        %4310 = vdwg.mxu0
        %4311 = vmatpush.bf16.msra.mxu0 %v4026
        %4312 = vmatpush.bf16.msra.mxu0 %v4018
        %4313 = vmatpush.bf16.msra.mxu0 %v4010
        %4314 = vmatpush.bf16.msra.mxu0 %v4002
        %4315 = vmatpush.bf16.msra.mxu0 %v3994
        %4316 = vmatpush.bf16.msra.mxu0 %v3986
        %4317 = vmatpush.bf16.msra.mxu0 %v3978
        %4318 = vmatpush.bf16.msra.mxu0 %v3970
        %4319 = vmatmul.bf16.gmra.mxu0 %v3498
        %v4320 = vpop.f32.mrf.mxu0
        %v4321 = vadd.f32 %v4307, %v4320
        %v4322 = vpop.f32.mrf.mxu0
        %v4323 = vadd.f32 %v4309, %v4322
        %4324 = vdwg.mxu0
        %4325 = vmatpush.bf16.msra.mxu0 %v3963
        %4326 = vmatpush.bf16.msra.mxu0 %v3955
        %4327 = vmatpush.bf16.msra.mxu0 %v3947
        %4328 = vmatpush.bf16.msra.mxu0 %v3939
        %4329 = vmatpush.bf16.msra.mxu0 %v3931
        %4330 = vmatpush.bf16.msra.mxu0 %v3923
        %4331 = vmatpush.bf16.msra.mxu0 %v3915
        %4332 = vmatpush.bf16.msra.mxu0 %v3907
        %4333 = vmatmul.bf16.gmra.mxu0 %v3497
        %v4334 = vpop.f32.mrf.mxu0
        %v4335 = vadd.f32 %v3507, %v4334
        %v4336 = vpop.f32.mrf.mxu0
        %v4337 = vadd.f32 %v3507, %v4336
        %4338 = vdwg.mxu0
        %4339 = vmatpush.bf16.msra.mxu0 %v4027
        %4340 = vmatpush.bf16.msra.mxu0 %v4019
        %4341 = vmatpush.bf16.msra.mxu0 %v4011
        %4342 = vmatpush.bf16.msra.mxu0 %v4003
        %4343 = vmatpush.bf16.msra.mxu0 %v3995
        %4344 = vmatpush.bf16.msra.mxu0 %v3987
        %4345 = vmatpush.bf16.msra.mxu0 %v3979
        %4346 = vmatpush.bf16.msra.mxu0 %v3971
        %4347 = vmatmul.bf16.gmra.mxu0 %v3498
        %v4348 = vpop.f32.mrf.mxu0
        %v4349 = vadd.f32 %v4335, %v4348
        %v4350 = vpop.f32.mrf.mxu0
        %v4351 = vadd.f32 %v4337, %v4350
        %4352 = vdwg.mxu0
        %4353 = vmatpush.bf16.msra.mxu0 %v3964
        %4354 = vmatpush.bf16.msra.mxu0 %v3956
        %4355 = vmatpush.bf16.msra.mxu0 %v3948
        %4356 = vmatpush.bf16.msra.mxu0 %v3940
        %4357 = vmatpush.bf16.msra.mxu0 %v3932
        %4358 = vmatpush.bf16.msra.mxu0 %v3924
        %4359 = vmatpush.bf16.msra.mxu0 %v3916
        %4360 = vmatpush.bf16.msra.mxu0 %v3908
        %4361 = vmatmul.bf16.gmra.mxu0 %v3497
        %v4362 = vpop.f32.mrf.mxu0
        %v4363 = vadd.f32 %v3508, %v4362
        %v4364 = vpop.f32.mrf.mxu0
        %v4365 = vadd.f32 %v3508, %v4364
        %4366 = vdwg.mxu0
        %4367 = vmatpush.bf16.msra.mxu0 %v4028
        %4368 = vmatpush.bf16.msra.mxu0 %v4020
        %4369 = vmatpush.bf16.msra.mxu0 %v4012
        %4370 = vmatpush.bf16.msra.mxu0 %v4004
        %4371 = vmatpush.bf16.msra.mxu0 %v3996
        %4372 = vmatpush.bf16.msra.mxu0 %v3988
        %4373 = vmatpush.bf16.msra.mxu0 %v3980
        %4374 = vmatpush.bf16.msra.mxu0 %v3972
        %4375 = vmatmul.bf16.gmra.mxu0 %v3498
        %v4376 = vpop.f32.mrf.mxu0
        %v4377 = vadd.f32 %v4363, %v4376
        %v4378 = vpop.f32.mrf.mxu0
        %v4379 = vadd.f32 %v4365, %v4378
        %4380 = vdwg.mxu0
        %v4381 = vmul.f32 %v4181, 0.5
        %v4382 = vmul.f32 %v4209, 0.5
        %v4383 = vmul.f32 %v4237, 0.5
        %v4384 = vmul.f32 %v4265, 0.5
        %v4385 = vmul.f32 %v4293, 0.5
        %v4386 = vmul.f32 %v4321, 0.5
        %v4387 = vmul.f32 %v4349, 0.5
        %v4388 = vmul.f32 %v4377, 0.5
        %v4389 = vmul.f32 %v4183, 0.5
        %v4390 = vmul.f32 %v4211, 0.5
        %v4391 = vmul.f32 %v4239, 0.5
        %v4392 = vmul.f32 %v4267, 0.5
        %v4393 = vmul.f32 %v4295, 0.5
        %v4394 = vmul.f32 %v4323, 0.5
        %v4395 = vmul.f32 %v4351, 0.5
        %v4396 = vmul.f32 %v4379, 0.5
        %v4397 = vmul.f32 %v4181, 0.70710677
        %v4398 = vmul.f32 %v4209, 0.70710677
        %v4399 = vmul.f32 %v4237, 0.70710677
        %v4400 = vmul.f32 %v4265, 0.70710677
        %v4401 = vmul.f32 %v4293, 0.70710677
        %v4402 = vmul.f32 %v4321, 0.70710677
        %v4403 = vmul.f32 %v4349, 0.70710677
        %v4404 = vmul.f32 %v4377, 0.70710677
        %v4405 = vmul.f32 %v4183, 0.70710677
        %v4406 = vmul.f32 %v4211, 0.70710677
        %v4407 = vmul.f32 %v4239, 0.70710677
        %v4408 = vmul.f32 %v4267, 0.70710677
        %v4409 = vmul.f32 %v4295, 0.70710677
        %v4410 = vmul.f32 %v4323, 0.70710677
        %v4411 = vmul.f32 %v4351, 0.70710677
        %v4412 = vmul.f32 %v4379, 0.70710677
        %v4413 = vmul.f32 %v4397, %v4397
        %v4414 = vmin.f32 16.0, %v4413
        %v4415 = vmul.f32 %v4414, 2.1237322e-06
        %v4416 = vadd.f32 %v4415, 0.00028619796
        %v4417 = vmul.f32 %v4414, %v4416
        %v4418 = vadd.f32 %v4417, 0.0036580483
        %v4419 = vmul.f32 %v4414, %v4418
        %v4420 = vadd.f32 %v4419, 0.05243302
        %v4421 = vmul.f32 %v4414, %v4420
        %v4422 = vadd.f32 %v4421, 0.18741608
        %v4423 = vmul.f32 %v4414, %v4422
        %v4424 = vadd.f32 %v4423, 1.1283791
        %v4425 = vmul.f32 %v4397, %v4424
        %v4426 = vmul.f32 %v4414, 3.8918573e-05
        %v4427 = vadd.f32 %v4426, 0.001143296
        %v4428 = vmul.f32 %v4414, %v4427
        %v4429 = vadd.f32 %v4428, 0.014752088
        %v4430 = vmul.f32 %v4414, %v4429
        %v4431 = vadd.f32 %v4430, 0.112945676
        %v4432 = vmul.f32 %v4414, %v4431
        %v4433 = vadd.f32 %v4432, 0.4994258
        %v4434 = vmul.f32 %v4414, %v4433
        %v4435 = vadd.f32 %v4434, 1.0
        %v4436 = vrcp.pop %v4435
        %v4437 = vmul.f32 %v4435, %v4436
        %v4438 = vsub.f32 1.0, %v4437
        %v4439 = vmul.f32 %v4436, %v4438
        %v4440 = vadd.f32 %v4436, %v4439
        %vm4441 = vweird.f32 %v4435
        %vm4442 = vweird.f32 %v4436
        %vm4443 = vmor %vm4441, %vm4442
        %v4444 = vsel %vm4443, %v4436, %v4440
        %v4445 = vand.u32 2147483647, %v4435
        %vm4446 = vcmp.eq.f32.partialorder %v4445, 8.507059e+37
        %v4447 = vand.u32 %v4435, 2147483648
        %v4448 = vor.u32 1.1754944e-38, %v4447
        %v4449 = vsel %vm4446, %v4448, %v4444
        %v4450 = vmul.f32 %v4425, %v4449
        %v4451 = vmin.f32 %v4450, 1.0
        %v4452 = vmax.f32 %v4451, -1.0
        %v4453 = vmul.f32 %v4398, %v4398
        %v4454 = vmin.f32 16.0, %v4453
        %v4455 = vmul.f32 %v4454, 2.1237322e-06
        %v4456 = vadd.f32 %v4455, 0.00028619796
        %v4457 = vmul.f32 %v4454, %v4456
        %v4458 = vadd.f32 %v4457, 0.0036580483
        %v4459 = vmul.f32 %v4454, %v4458
        %v4460 = vadd.f32 %v4459, 0.05243302
        %v4461 = vmul.f32 %v4454, %v4460
        %v4462 = vadd.f32 %v4461, 0.18741608
        %v4463 = vmul.f32 %v4454, %v4462
        %v4464 = vadd.f32 %v4463, 1.1283791
        %v4465 = vmul.f32 %v4398, %v4464
        %v4466 = vmul.f32 %v4454, 3.8918573e-05
        %v4467 = vadd.f32 %v4466, 0.001143296
        %v4468 = vmul.f32 %v4454, %v4467
        %v4469 = vadd.f32 %v4468, 0.014752088
        %v4470 = vmul.f32 %v4454, %v4469
        %v4471 = vadd.f32 %v4470, 0.112945676
        %v4472 = vmul.f32 %v4454, %v4471
        %v4473 = vadd.f32 %v4472, 0.4994258
        %v4474 = vmul.f32 %v4454, %v4473
        %v4475 = vadd.f32 %v4474, 1.0
        %v4476 = vrcp.pop %v4475
        %v4477 = vmul.f32 %v4475, %v4476
        %v4478 = vsub.f32 1.0, %v4477
        %v4479 = vmul.f32 %v4476, %v4478
        %v4480 = vadd.f32 %v4476, %v4479
        %vm4481 = vweird.f32 %v4475
        %vm4482 = vweird.f32 %v4476
        %vm4483 = vmor %vm4481, %vm4482
        %v4484 = vsel %vm4483, %v4476, %v4480
        %v4485 = vand.u32 2147483647, %v4475
        %vm4486 = vcmp.eq.f32.partialorder %v4485, 8.507059e+37
        %v4487 = vand.u32 %v4475, 2147483648
        %v4488 = vor.u32 1.1754944e-38, %v4487
        %v4489 = vsel %vm4486, %v4488, %v4484
        %v4490 = vmul.f32 %v4465, %v4489
        %v4491 = vmin.f32 %v4490, 1.0
        %v4492 = vmax.f32 %v4491, -1.0
        %v4493 = vmul.f32 %v4399, %v4399
        %v4494 = vmin.f32 16.0, %v4493
        %v4495 = vmul.f32 %v4494, 2.1237322e-06
        %v4496 = vadd.f32 %v4495, 0.00028619796
        %v4497 = vmul.f32 %v4494, %v4496
        %v4498 = vadd.f32 %v4497, 0.0036580483
        %v4499 = vmul.f32 %v4494, %v4498
        %v4500 = vadd.f32 %v4499, 0.05243302
        %v4501 = vmul.f32 %v4494, %v4500
        %v4502 = vadd.f32 %v4501, 0.18741608
        %v4503 = vmul.f32 %v4494, %v4502
        %v4504 = vadd.f32 %v4503, 1.1283791
        %v4505 = vmul.f32 %v4399, %v4504
        %v4506 = vmul.f32 %v4494, 3.8918573e-05
        %v4507 = vadd.f32 %v4506, 0.001143296
        %v4508 = vmul.f32 %v4494, %v4507
        %v4509 = vadd.f32 %v4508, 0.014752088
        %v4510 = vmul.f32 %v4494, %v4509
        %v4511 = vadd.f32 %v4510, 0.112945676
        %v4512 = vmul.f32 %v4494, %v4511
        %v4513 = vadd.f32 %v4512, 0.4994258
        %v4514 = vmul.f32 %v4494, %v4513
        %v4515 = vadd.f32 %v4514, 1.0
        %v4516 = vrcp.pop %v4515
        %v4517 = vmul.f32 %v4515, %v4516
        %v4518 = vsub.f32 1.0, %v4517
        %v4519 = vmul.f32 %v4516, %v4518
        %v4520 = vadd.f32 %v4516, %v4519
        %vm4521 = vweird.f32 %v4515
        %vm4522 = vweird.f32 %v4516
        %vm4523 = vmor %vm4521, %vm4522
        %v4524 = vsel %vm4523, %v4516, %v4520
        %v4525 = vand.u32 2147483647, %v4515
        %vm4526 = vcmp.eq.f32.partialorder %v4525, 8.507059e+37
        %v4527 = vand.u32 %v4515, 2147483648
        %v4528 = vor.u32 1.1754944e-38, %v4527
        %v4529 = vsel %vm4526, %v4528, %v4524
        %v4530 = vmul.f32 %v4505, %v4529
        %v4531 = vmin.f32 %v4530, 1.0
        %v4532 = vmax.f32 %v4531, -1.0
        %v4533 = vmul.f32 %v4400, %v4400
        %v4534 = vmin.f32 16.0, %v4533
        %v4535 = vmul.f32 %v4534, 2.1237322e-06
        %v4536 = vadd.f32 %v4535, 0.00028619796
        %v4537 = vmul.f32 %v4534, %v4536
        %v4538 = vadd.f32 %v4537, 0.0036580483
        %v4539 = vmul.f32 %v4534, %v4538
        %v4540 = vadd.f32 %v4539, 0.05243302
        %v4541 = vmul.f32 %v4534, %v4540
        %v4542 = vadd.f32 %v4541, 0.18741608
        %v4543 = vmul.f32 %v4534, %v4542
        %v4544 = vadd.f32 %v4543, 1.1283791
        %v4545 = vmul.f32 %v4400, %v4544
        %v4546 = vmul.f32 %v4534, 3.8918573e-05
        %v4547 = vadd.f32 %v4546, 0.001143296
        %v4548 = vmul.f32 %v4534, %v4547
        %v4549 = vadd.f32 %v4548, 0.014752088
        %v4550 = vmul.f32 %v4534, %v4549
        %v4551 = vadd.f32 %v4550, 0.112945676
        %v4552 = vmul.f32 %v4534, %v4551
        %v4553 = vadd.f32 %v4552, 0.4994258
        %v4554 = vmul.f32 %v4534, %v4553
        %v4555 = vadd.f32 %v4554, 1.0
        %v4556 = vrcp.pop %v4555
        %v4557 = vmul.f32 %v4555, %v4556
        %v4558 = vsub.f32 1.0, %v4557
        %v4559 = vmul.f32 %v4556, %v4558
        %v4560 = vadd.f32 %v4556, %v4559
        %vm4561 = vweird.f32 %v4555
        %vm4562 = vweird.f32 %v4556
        %vm4563 = vmor %vm4561, %vm4562
        %v4564 = vsel %vm4563, %v4556, %v4560
        %v4565 = vand.u32 2147483647, %v4555
        %vm4566 = vcmp.eq.f32.partialorder %v4565, 8.507059e+37
        %v4567 = vand.u32 %v4555, 2147483648
        %v4568 = vor.u32 1.1754944e-38, %v4567
        %v4569 = vsel %vm4566, %v4568, %v4564
        %v4570 = vmul.f32 %v4545, %v4569
        %v4571 = vmin.f32 %v4570, 1.0
        %v4572 = vmax.f32 %v4571, -1.0
        %v4573 = vmul.f32 %v4401, %v4401
        %v4574 = vmin.f32 16.0, %v4573
        %v4575 = vmul.f32 %v4574, 2.1237322e-06
        %v4576 = vadd.f32 %v4575, 0.00028619796
        %v4577 = vmul.f32 %v4574, %v4576
        %v4578 = vadd.f32 %v4577, 0.0036580483
        %v4579 = vmul.f32 %v4574, %v4578
        %v4580 = vadd.f32 %v4579, 0.05243302
        %v4581 = vmul.f32 %v4574, %v4580
        %v4582 = vadd.f32 %v4581, 0.18741608
        %v4583 = vmul.f32 %v4574, %v4582
        %v4584 = vadd.f32 %v4583, 1.1283791
        %v4585 = vmul.f32 %v4401, %v4584
        %v4586 = vmul.f32 %v4574, 3.8918573e-05
        %v4587 = vadd.f32 %v4586, 0.001143296
        %v4588 = vmul.f32 %v4574, %v4587
        %v4589 = vadd.f32 %v4588, 0.014752088
        %v4590 = vmul.f32 %v4574, %v4589
        %v4591 = vadd.f32 %v4590, 0.112945676
        %v4592 = vmul.f32 %v4574, %v4591
        %v4593 = vadd.f32 %v4592, 0.4994258
        %v4594 = vmul.f32 %v4574, %v4593
        %v4595 = vadd.f32 %v4594, 1.0
        %v4596 = vrcp.pop %v4595
        %v4597 = vmul.f32 %v4595, %v4596
        %v4598 = vsub.f32 1.0, %v4597
        %v4599 = vmul.f32 %v4596, %v4598
        %v4600 = vadd.f32 %v4596, %v4599
        %vm4601 = vweird.f32 %v4595
        %vm4602 = vweird.f32 %v4596
        %vm4603 = vmor %vm4601, %vm4602
        %v4604 = vsel %vm4603, %v4596, %v4600
        %v4605 = vand.u32 2147483647, %v4595
        %vm4606 = vcmp.eq.f32.partialorder %v4605, 8.507059e+37
        %v4607 = vand.u32 %v4595, 2147483648
        %v4608 = vor.u32 1.1754944e-38, %v4607
        %v4609 = vsel %vm4606, %v4608, %v4604
        %v4610 = vmul.f32 %v4585, %v4609
        %v4611 = vmin.f32 %v4610, 1.0
        %v4612 = vmax.f32 %v4611, -1.0
        %v4613 = vmul.f32 %v4402, %v4402
        %v4614 = vmin.f32 16.0, %v4613
        %v4615 = vmul.f32 %v4614, 2.1237322e-06
        %v4616 = vadd.f32 %v4615, 0.00028619796
        %v4617 = vmul.f32 %v4614, %v4616
        %v4618 = vadd.f32 %v4617, 0.0036580483
        %v4619 = vmul.f32 %v4614, %v4618
        %v4620 = vadd.f32 %v4619, 0.05243302
        %v4621 = vmul.f32 %v4614, %v4620
        %v4622 = vadd.f32 %v4621, 0.18741608
        %v4623 = vmul.f32 %v4614, %v4622
        %v4624 = vadd.f32 %v4623, 1.1283791
        %v4625 = vmul.f32 %v4402, %v4624
        %v4626 = vmul.f32 %v4614, 3.8918573e-05
        %v4627 = vadd.f32 %v4626, 0.001143296
        %v4628 = vmul.f32 %v4614, %v4627
        %v4629 = vadd.f32 %v4628, 0.014752088
        %v4630 = vmul.f32 %v4614, %v4629
        %v4631 = vadd.f32 %v4630, 0.112945676
        %v4632 = vmul.f32 %v4614, %v4631
        %v4633 = vadd.f32 %v4632, 0.4994258
        %v4634 = vmul.f32 %v4614, %v4633
        %v4635 = vadd.f32 %v4634, 1.0
        %v4636 = vrcp.pop %v4635
        %v4637 = vmul.f32 %v4635, %v4636
        %v4638 = vsub.f32 1.0, %v4637
        %v4639 = vmul.f32 %v4636, %v4638
        %v4640 = vadd.f32 %v4636, %v4639
        %vm4641 = vweird.f32 %v4635
        %vm4642 = vweird.f32 %v4636
        %vm4643 = vmor %vm4641, %vm4642
        %v4644 = vsel %vm4643, %v4636, %v4640
        %v4645 = vand.u32 2147483647, %v4635
        %vm4646 = vcmp.eq.f32.partialorder %v4645, 8.507059e+37
        %v4647 = vand.u32 %v4635, 2147483648
        %v4648 = vor.u32 1.1754944e-38, %v4647
        %v4649 = vsel %vm4646, %v4648, %v4644
        %v4650 = vmul.f32 %v4625, %v4649
        %v4651 = vmin.f32 %v4650, 1.0
        %v4652 = vmax.f32 %v4651, -1.0
        %v4653 = vmul.f32 %v4403, %v4403
        %v4654 = vmin.f32 16.0, %v4653
        %v4655 = vmul.f32 %v4654, 2.1237322e-06
        %v4656 = vadd.f32 %v4655, 0.00028619796
        %v4657 = vmul.f32 %v4654, %v4656
        %v4658 = vadd.f32 %v4657, 0.0036580483
        %v4659 = vmul.f32 %v4654, %v4658
        %v4660 = vadd.f32 %v4659, 0.05243302
        %v4661 = vmul.f32 %v4654, %v4660
        %v4662 = vadd.f32 %v4661, 0.18741608
        %v4663 = vmul.f32 %v4654, %v4662
        %v4664 = vadd.f32 %v4663, 1.1283791
        %v4665 = vmul.f32 %v4403, %v4664
        %v4666 = vmul.f32 %v4654, 3.8918573e-05
        %v4667 = vadd.f32 %v4666, 0.001143296
        %v4668 = vmul.f32 %v4654, %v4667
        %v4669 = vadd.f32 %v4668, 0.014752088
        %v4670 = vmul.f32 %v4654, %v4669
        %v4671 = vadd.f32 %v4670, 0.112945676
        %v4672 = vmul.f32 %v4654, %v4671
        %v4673 = vadd.f32 %v4672, 0.4994258
        %v4674 = vmul.f32 %v4654, %v4673
        %v4675 = vadd.f32 %v4674, 1.0
        %v4676 = vrcp.pop %v4675
        %v4677 = vmul.f32 %v4675, %v4676
        %v4678 = vsub.f32 1.0, %v4677
        %v4679 = vmul.f32 %v4676, %v4678
        %v4680 = vadd.f32 %v4676, %v4679
        %vm4681 = vweird.f32 %v4675
        %vm4682 = vweird.f32 %v4676
        %vm4683 = vmor %vm4681, %vm4682
        %v4684 = vsel %vm4683, %v4676, %v4680
        %v4685 = vand.u32 2147483647, %v4675
        %vm4686 = vcmp.eq.f32.partialorder %v4685, 8.507059e+37
        %v4687 = vand.u32 %v4675, 2147483648
        %v4688 = vor.u32 1.1754944e-38, %v4687
        %v4689 = vsel %vm4686, %v4688, %v4684
        %v4690 = vmul.f32 %v4665, %v4689
        %v4691 = vmin.f32 %v4690, 1.0
        %v4692 = vmax.f32 %v4691, -1.0
        %v4693 = vmul.f32 %v4404, %v4404
        %v4694 = vmin.f32 16.0, %v4693
        %v4695 = vmul.f32 %v4694, 2.1237322e-06
        %v4696 = vadd.f32 %v4695, 0.00028619796
        %v4697 = vmul.f32 %v4694, %v4696
        %v4698 = vadd.f32 %v4697, 0.0036580483
        %v4699 = vmul.f32 %v4694, %v4698
        %v4700 = vadd.f32 %v4699, 0.05243302
        %v4701 = vmul.f32 %v4694, %v4700
        %v4702 = vadd.f32 %v4701, 0.18741608
        %v4703 = vmul.f32 %v4694, %v4702
        %v4704 = vadd.f32 %v4703, 1.1283791
        %v4705 = vmul.f32 %v4404, %v4704
        %v4706 = vmul.f32 %v4694, 3.8918573e-05
        %v4707 = vadd.f32 %v4706, 0.001143296
        %v4708 = vmul.f32 %v4694, %v4707
        %v4709 = vadd.f32 %v4708, 0.014752088
        %v4710 = vmul.f32 %v4694, %v4709
        %v4711 = vadd.f32 %v4710, 0.112945676
        %v4712 = vmul.f32 %v4694, %v4711
        %v4713 = vadd.f32 %v4712, 0.4994258
        %v4714 = vmul.f32 %v4694, %v4713
        %v4715 = vadd.f32 %v4714, 1.0
        %v4716 = vrcp.pop %v4715
        %v4717 = vmul.f32 %v4715, %v4716
        %v4718 = vsub.f32 1.0, %v4717
        %v4719 = vmul.f32 %v4716, %v4718
        %v4720 = vadd.f32 %v4716, %v4719
        %vm4721 = vweird.f32 %v4715
        %vm4722 = vweird.f32 %v4716
        %vm4723 = vmor %vm4721, %vm4722
        %v4724 = vsel %vm4723, %v4716, %v4720
        %v4725 = vand.u32 2147483647, %v4715
        %vm4726 = vcmp.eq.f32.partialorder %v4725, 8.507059e+37
        %v4727 = vand.u32 %v4715, 2147483648
        %v4728 = vor.u32 1.1754944e-38, %v4727
        %v4729 = vsel %vm4726, %v4728, %v4724
        %v4730 = vmul.f32 %v4705, %v4729
        %v4731 = vmin.f32 %v4730, 1.0
        %v4732 = vmax.f32 %v4731, -1.0
        %v4733 = vmul.f32 %v4405, %v4405
        %v4734 = vmin.f32 16.0, %v4733
        %v4735 = vmul.f32 %v4734, 2.1237322e-06
        %v4736 = vadd.f32 %v4735, 0.00028619796
        %v4737 = vmul.f32 %v4734, %v4736
        %v4738 = vadd.f32 %v4737, 0.0036580483
        %v4739 = vmul.f32 %v4734, %v4738
        %v4740 = vadd.f32 %v4739, 0.05243302
        %v4741 = vmul.f32 %v4734, %v4740
        %v4742 = vadd.f32 %v4741, 0.18741608
        %v4743 = vmul.f32 %v4734, %v4742
        %v4744 = vadd.f32 %v4743, 1.1283791
        %v4745 = vmul.f32 %v4405, %v4744
        %v4746 = vmul.f32 %v4734, 3.8918573e-05
        %v4747 = vadd.f32 %v4746, 0.001143296
        %v4748 = vmul.f32 %v4734, %v4747
        %v4749 = vadd.f32 %v4748, 0.014752088
        %v4750 = vmul.f32 %v4734, %v4749
        %v4751 = vadd.f32 %v4750, 0.112945676
        %v4752 = vmul.f32 %v4734, %v4751
        %v4753 = vadd.f32 %v4752, 0.4994258
        %v4754 = vmul.f32 %v4734, %v4753
        %v4755 = vadd.f32 %v4754, 1.0
        %v4756 = vrcp.pop %v4755
        %v4757 = vmul.f32 %v4755, %v4756
        %v4758 = vsub.f32 1.0, %v4757
        %v4759 = vmul.f32 %v4756, %v4758
        %v4760 = vadd.f32 %v4756, %v4759
        %vm4761 = vweird.f32 %v4755
        %vm4762 = vweird.f32 %v4756
        %vm4763 = vmor %vm4761, %vm4762
        %v4764 = vsel %vm4763, %v4756, %v4760
        %v4765 = vand.u32 2147483647, %v4755
        %vm4766 = vcmp.eq.f32.partialorder %v4765, 8.507059e+37
        %v4767 = vand.u32 %v4755, 2147483648
        %v4768 = vor.u32 1.1754944e-38, %v4767
        %v4769 = vsel %vm4766, %v4768, %v4764
        %v4770 = vmul.f32 %v4745, %v4769
        %v4771 = vmin.f32 %v4770, 1.0
        %v4772 = vmax.f32 %v4771, -1.0
        %v4773 = vmul.f32 %v4406, %v4406
        %v4774 = vmin.f32 16.0, %v4773
        %v4775 = vmul.f32 %v4774, 2.1237322e-06
        %v4776 = vadd.f32 %v4775, 0.00028619796
        %v4777 = vmul.f32 %v4774, %v4776
        %v4778 = vadd.f32 %v4777, 0.0036580483
        %v4779 = vmul.f32 %v4774, %v4778
        %v4780 = vadd.f32 %v4779, 0.05243302
        %v4781 = vmul.f32 %v4774, %v4780
        %v4782 = vadd.f32 %v4781, 0.18741608
        %v4783 = vmul.f32 %v4774, %v4782
        %v4784 = vadd.f32 %v4783, 1.1283791
        %v4785 = vmul.f32 %v4406, %v4784
        %v4786 = vmul.f32 %v4774, 3.8918573e-05
        %v4787 = vadd.f32 %v4786, 0.001143296
        %v4788 = vmul.f32 %v4774, %v4787
        %v4789 = vadd.f32 %v4788, 0.014752088
        %v4790 = vmul.f32 %v4774, %v4789
        %v4791 = vadd.f32 %v4790, 0.112945676
        %v4792 = vmul.f32 %v4774, %v4791
        %v4793 = vadd.f32 %v4792, 0.4994258
        %v4794 = vmul.f32 %v4774, %v4793
        %v4795 = vadd.f32 %v4794, 1.0
        %v4796 = vrcp.pop %v4795
        %v4797 = vmul.f32 %v4795, %v4796
        %v4798 = vsub.f32 1.0, %v4797
        %v4799 = vmul.f32 %v4796, %v4798
        %v4800 = vadd.f32 %v4796, %v4799
        %vm4801 = vweird.f32 %v4795
        %vm4802 = vweird.f32 %v4796
        %vm4803 = vmor %vm4801, %vm4802
        %v4804 = vsel %vm4803, %v4796, %v4800
        %v4805 = vand.u32 2147483647, %v4795
        %vm4806 = vcmp.eq.f32.partialorder %v4805, 8.507059e+37
        %v4807 = vand.u32 %v4795, 2147483648
        %v4808 = vor.u32 1.1754944e-38, %v4807
        %v4809 = vsel %vm4806, %v4808, %v4804
        %v4810 = vmul.f32 %v4785, %v4809
        %v4811 = vmin.f32 %v4810, 1.0
        %v4812 = vmax.f32 %v4811, -1.0
        %v4813 = vmul.f32 %v4407, %v4407
        %v4814 = vmin.f32 16.0, %v4813
        %v4815 = vmul.f32 %v4814, 2.1237322e-06
        %v4816 = vadd.f32 %v4815, 0.00028619796
        %v4817 = vmul.f32 %v4814, %v4816
        %v4818 = vadd.f32 %v4817, 0.0036580483
        %v4819 = vmul.f32 %v4814, %v4818
        %v4820 = vadd.f32 %v4819, 0.05243302
        %v4821 = vmul.f32 %v4814, %v4820
        %v4822 = vadd.f32 %v4821, 0.18741608
        %v4823 = vmul.f32 %v4814, %v4822
        %v4824 = vadd.f32 %v4823, 1.1283791
        %v4825 = vmul.f32 %v4407, %v4824
        %v4826 = vmul.f32 %v4814, 3.8918573e-05
        %v4827 = vadd.f32 %v4826, 0.001143296
        %v4828 = vmul.f32 %v4814, %v4827
        %v4829 = vadd.f32 %v4828, 0.014752088
        %v4830 = vmul.f32 %v4814, %v4829
        %v4831 = vadd.f32 %v4830, 0.112945676
        %v4832 = vmul.f32 %v4814, %v4831
        %v4833 = vadd.f32 %v4832, 0.4994258
        %v4834 = vmul.f32 %v4814, %v4833
        %v4835 = vadd.f32 %v4834, 1.0
        %v4836 = vrcp.pop %v4835
        %v4837 = vmul.f32 %v4835, %v4836
        %v4838 = vsub.f32 1.0, %v4837
        %v4839 = vmul.f32 %v4836, %v4838
        %v4840 = vadd.f32 %v4836, %v4839
        %vm4841 = vweird.f32 %v4835
        %vm4842 = vweird.f32 %v4836
        %vm4843 = vmor %vm4841, %vm4842
        %v4844 = vsel %vm4843, %v4836, %v4840
        %v4845 = vand.u32 2147483647, %v4835
        %vm4846 = vcmp.eq.f32.partialorder %v4845, 8.507059e+37
        %v4847 = vand.u32 %v4835, 2147483648
        %v4848 = vor.u32 1.1754944e-38, %v4847
        %v4849 = vsel %vm4846, %v4848, %v4844
        %v4850 = vmul.f32 %v4825, %v4849
        %v4851 = vmin.f32 %v4850, 1.0
        %v4852 = vmax.f32 %v4851, -1.0
        %v4853 = vmul.f32 %v4408, %v4408
        %v4854 = vmin.f32 16.0, %v4853
        %v4855 = vmul.f32 %v4854, 2.1237322e-06
        %v4856 = vadd.f32 %v4855, 0.00028619796
        %v4857 = vmul.f32 %v4854, %v4856
        %v4858 = vadd.f32 %v4857, 0.0036580483
        %v4859 = vmul.f32 %v4854, %v4858
        %v4860 = vadd.f32 %v4859, 0.05243302
        %v4861 = vmul.f32 %v4854, %v4860
        %v4862 = vadd.f32 %v4861, 0.18741608
        %v4863 = vmul.f32 %v4854, %v4862
        %v4864 = vadd.f32 %v4863, 1.1283791
        %v4865 = vmul.f32 %v4408, %v4864
        %v4866 = vmul.f32 %v4854, 3.8918573e-05
        %v4867 = vadd.f32 %v4866, 0.001143296
        %v4868 = vmul.f32 %v4854, %v4867
        %v4869 = vadd.f32 %v4868, 0.014752088
        %v4870 = vmul.f32 %v4854, %v4869
        %v4871 = vadd.f32 %v4870, 0.112945676
        %v4872 = vmul.f32 %v4854, %v4871
        %v4873 = vadd.f32 %v4872, 0.4994258
        %v4874 = vmul.f32 %v4854, %v4873
        %v4875 = vadd.f32 %v4874, 1.0
        %v4876 = vrcp.pop %v4875
        %v4877 = vmul.f32 %v4875, %v4876
        %v4878 = vsub.f32 1.0, %v4877
        %v4879 = vmul.f32 %v4876, %v4878
        %v4880 = vadd.f32 %v4876, %v4879
        %vm4881 = vweird.f32 %v4875
        %vm4882 = vweird.f32 %v4876
        %vm4883 = vmor %vm4881, %vm4882
        %v4884 = vsel %vm4883, %v4876, %v4880
        %v4885 = vand.u32 2147483647, %v4875
        %vm4886 = vcmp.eq.f32.partialorder %v4885, 8.507059e+37
        %v4887 = vand.u32 %v4875, 2147483648
        %v4888 = vor.u32 1.1754944e-38, %v4887
        %v4889 = vsel %vm4886, %v4888, %v4884
        %v4890 = vmul.f32 %v4865, %v4889
        %v4891 = vmin.f32 %v4890, 1.0
        %v4892 = vmax.f32 %v4891, -1.0
        %v4893 = vmul.f32 %v4409, %v4409
        %v4894 = vmin.f32 16.0, %v4893
        %v4895 = vmul.f32 %v4894, 2.1237322e-06
        %v4896 = vadd.f32 %v4895, 0.00028619796
        %v4897 = vmul.f32 %v4894, %v4896
        %v4898 = vadd.f32 %v4897, 0.0036580483
        %v4899 = vmul.f32 %v4894, %v4898
        %v4900 = vadd.f32 %v4899, 0.05243302
        %v4901 = vmul.f32 %v4894, %v4900
        %v4902 = vadd.f32 %v4901, 0.18741608
        %v4903 = vmul.f32 %v4894, %v4902
        %v4904 = vadd.f32 %v4903, 1.1283791
        %v4905 = vmul.f32 %v4409, %v4904
        %v4906 = vmul.f32 %v4894, 3.8918573e-05
        %v4907 = vadd.f32 %v4906, 0.001143296
        %v4908 = vmul.f32 %v4894, %v4907
        %v4909 = vadd.f32 %v4908, 0.014752088
        %v4910 = vmul.f32 %v4894, %v4909
        %v4911 = vadd.f32 %v4910, 0.112945676
        %v4912 = vmul.f32 %v4894, %v4911
        %v4913 = vadd.f32 %v4912, 0.4994258
        %v4914 = vmul.f32 %v4894, %v4913
        %v4915 = vadd.f32 %v4914, 1.0
        %v4916 = vrcp.pop %v4915
        %v4917 = vmul.f32 %v4915, %v4916
        %v4918 = vsub.f32 1.0, %v4917
        %v4919 = vmul.f32 %v4916, %v4918
        %v4920 = vadd.f32 %v4916, %v4919
        %vm4921 = vweird.f32 %v4915
        %vm4922 = vweird.f32 %v4916
        %vm4923 = vmor %vm4921, %vm4922
        %v4924 = vsel %vm4923, %v4916, %v4920
        %v4925 = vand.u32 2147483647, %v4915
        %vm4926 = vcmp.eq.f32.partialorder %v4925, 8.507059e+37
        %v4927 = vand.u32 %v4915, 2147483648
        %v4928 = vor.u32 1.1754944e-38, %v4927
        %v4929 = vsel %vm4926, %v4928, %v4924
        %v4930 = vmul.f32 %v4905, %v4929
        %v4931 = vmin.f32 %v4930, 1.0
        %v4932 = vmax.f32 %v4931, -1.0
        %v4933 = vmul.f32 %v4410, %v4410
        %v4934 = vmin.f32 16.0, %v4933
        %v4935 = vmul.f32 %v4934, 2.1237322e-06
        %v4936 = vadd.f32 %v4935, 0.00028619796
        %v4937 = vmul.f32 %v4934, %v4936
        %v4938 = vadd.f32 %v4937, 0.0036580483
        %v4939 = vmul.f32 %v4934, %v4938
        %v4940 = vadd.f32 %v4939, 0.05243302
        %v4941 = vmul.f32 %v4934, %v4940
        %v4942 = vadd.f32 %v4941, 0.18741608
        %v4943 = vmul.f32 %v4934, %v4942
        %v4944 = vadd.f32 %v4943, 1.1283791
        %v4945 = vmul.f32 %v4410, %v4944
        %v4946 = vmul.f32 %v4934, 3.8918573e-05
        %v4947 = vadd.f32 %v4946, 0.001143296
        %v4948 = vmul.f32 %v4934, %v4947
        %v4949 = vadd.f32 %v4948, 0.014752088
        %v4950 = vmul.f32 %v4934, %v4949
        %v4951 = vadd.f32 %v4950, 0.112945676
        %v4952 = vmul.f32 %v4934, %v4951
        %v4953 = vadd.f32 %v4952, 0.4994258
        %v4954 = vmul.f32 %v4934, %v4953
        %v4955 = vadd.f32 %v4954, 1.0
        %v4956 = vrcp.pop %v4955
        %v4957 = vmul.f32 %v4955, %v4956
        %v4958 = vsub.f32 1.0, %v4957
        %v4959 = vmul.f32 %v4956, %v4958
        %v4960 = vadd.f32 %v4956, %v4959
        %vm4961 = vweird.f32 %v4955
        %vm4962 = vweird.f32 %v4956
        %vm4963 = vmor %vm4961, %vm4962
        %v4964 = vsel %vm4963, %v4956, %v4960
        %v4965 = vand.u32 2147483647, %v4955
        %vm4966 = vcmp.eq.f32.partialorder %v4965, 8.507059e+37
        %v4967 = vand.u32 %v4955, 2147483648
        %v4968 = vor.u32 1.1754944e-38, %v4967
        %v4969 = vsel %vm4966, %v4968, %v4964
        %v4970 = vmul.f32 %v4945, %v4969
        %v4971 = vmin.f32 %v4970, 1.0
        %v4972 = vmax.f32 %v4971, -1.0
        %v4973 = vmul.f32 %v4411, %v4411
        %v4974 = vmin.f32 16.0, %v4973
        %v4975 = vmul.f32 %v4974, 2.1237322e-06
        %v4976 = vadd.f32 %v4975, 0.00028619796
        %v4977 = vmul.f32 %v4974, %v4976
        %v4978 = vadd.f32 %v4977, 0.0036580483
        %v4979 = vmul.f32 %v4974, %v4978
        %v4980 = vadd.f32 %v4979, 0.05243302
        %v4981 = vmul.f32 %v4974, %v4980
        %v4982 = vadd.f32 %v4981, 0.18741608
        %v4983 = vmul.f32 %v4974, %v4982
        %v4984 = vadd.f32 %v4983, 1.1283791
        %v4985 = vmul.f32 %v4411, %v4984
        %v4986 = vmul.f32 %v4974, 3.8918573e-05
        %v4987 = vadd.f32 %v4986, 0.001143296
        %v4988 = vmul.f32 %v4974, %v4987
        %v4989 = vadd.f32 %v4988, 0.014752088
        %v4990 = vmul.f32 %v4974, %v4989
        %v4991 = vadd.f32 %v4990, 0.112945676
        %v4992 = vmul.f32 %v4974, %v4991
        %v4993 = vadd.f32 %v4992, 0.4994258
        %v4994 = vmul.f32 %v4974, %v4993
        %v4995 = vadd.f32 %v4994, 1.0
        %v4996 = vrcp.pop %v4995
        %v4997 = vmul.f32 %v4995, %v4996
        %v4998 = vsub.f32 1.0, %v4997
        %v4999 = vmul.f32 %v4996, %v4998
        %v5000 = vadd.f32 %v4996, %v4999
        %vm5001 = vweird.f32 %v4995
        %vm5002 = vweird.f32 %v4996
        %vm5003 = vmor %vm5001, %vm5002
        %v5004 = vsel %vm5003, %v4996, %v5000
        %v5005 = vand.u32 2147483647, %v4995
        %vm5006 = vcmp.eq.f32.partialorder %v5005, 8.507059e+37
        %v5007 = vand.u32 %v4995, 2147483648
        %v5008 = vor.u32 1.1754944e-38, %v5007
        %v5009 = vsel %vm5006, %v5008, %v5004
        %v5010 = vmul.f32 %v4985, %v5009
        %v5011 = vmin.f32 %v5010, 1.0
        %v5012 = vmax.f32 %v5011, -1.0
        %v5013 = vmul.f32 %v4412, %v4412
        %v5014 = vmin.f32 16.0, %v5013
        %v5015 = vmul.f32 %v5014, 2.1237322e-06
        %v5016 = vadd.f32 %v5015, 0.00028619796
        %v5017 = vmul.f32 %v5014, %v5016
        %v5018 = vadd.f32 %v5017, 0.0036580483
        %v5019 = vmul.f32 %v5014, %v5018
        %v5020 = vadd.f32 %v5019, 0.05243302
        %v5021 = vmul.f32 %v5014, %v5020
        %v5022 = vadd.f32 %v5021, 0.18741608
        %v5023 = vmul.f32 %v5014, %v5022
        %v5024 = vadd.f32 %v5023, 1.1283791
        %v5025 = vmul.f32 %v4412, %v5024
        %v5026 = vmul.f32 %v5014, 3.8918573e-05
        %v5027 = vadd.f32 %v5026, 0.001143296
        %v5028 = vmul.f32 %v5014, %v5027
        %v5029 = vadd.f32 %v5028, 0.014752088
        %v5030 = vmul.f32 %v5014, %v5029
        %v5031 = vadd.f32 %v5030, 0.112945676
        %v5032 = vmul.f32 %v5014, %v5031
        %v5033 = vadd.f32 %v5032, 0.4994258
        %v5034 = vmul.f32 %v5014, %v5033
        %v5035 = vadd.f32 %v5034, 1.0
        %v5036 = vrcp.pop %v5035
        %v5037 = vmul.f32 %v5035, %v5036
        %v5038 = vsub.f32 1.0, %v5037
        %v5039 = vmul.f32 %v5036, %v5038
        %v5040 = vadd.f32 %v5036, %v5039
        %vm5041 = vweird.f32 %v5035
        %vm5042 = vweird.f32 %v5036
        %vm5043 = vmor %vm5041, %vm5042
        %v5044 = vsel %vm5043, %v5036, %v5040
        %v5045 = vand.u32 2147483647, %v5035
        %vm5046 = vcmp.eq.f32.partialorder %v5045, 8.507059e+37
        %v5047 = vand.u32 %v5035, 2147483648
        %v5048 = vor.u32 1.1754944e-38, %v5047
        %v5049 = vsel %vm5046, %v5048, %v5044
        %v5050 = vmul.f32 %v5025, %v5049
        %v5051 = vmin.f32 %v5050, 1.0
        %v5052 = vmax.f32 %v5051, -1.0
        %v5053 = vadd.f32 %v4452, 1.0
        %v5054 = vadd.f32 %v4492, 1.0
        %v5055 = vadd.f32 %v4532, 1.0
        %v5056 = vadd.f32 %v4572, 1.0
        %v5057 = vadd.f32 %v4612, 1.0
        %v5058 = vadd.f32 %v4652, 1.0
        %v5059 = vadd.f32 %v4692, 1.0
        %v5060 = vadd.f32 %v4732, 1.0
        %v5061 = vadd.f32 %v4772, 1.0
        %v5062 = vadd.f32 %v4812, 1.0
        %v5063 = vadd.f32 %v4852, 1.0
        %v5064 = vadd.f32 %v4892, 1.0
        %v5065 = vadd.f32 %v4932, 1.0
        %v5066 = vadd.f32 %v4972, 1.0
        %v5067 = vadd.f32 %v5012, 1.0
        %v5068 = vadd.f32 %v5052, 1.0
        %v5069 = vmul.f32 %v4381, %v5053
        %v5070 = vmul.f32 %v4382, %v5054
        %v5071 = vmul.f32 %v4383, %v5055
        %v5072 = vmul.f32 %v4384, %v5056
        %v5073 = vmul.f32 %v4385, %v5057
        %v5074 = vmul.f32 %v4386, %v5058
        %v5075 = vmul.f32 %v4387, %v5059
        %v5076 = vmul.f32 %v4388, %v5060
        %v5077 = vmul.f32 %v4389, %v5061
        %v5078 = vmul.f32 %v4390, %v5062
        %v5079 = vmul.f32 %v4391, %v5063
        %v5080 = vmul.f32 %v4392, %v5064
        %v5081 = vmul.f32 %v4393, %v5065
        %v5082 = vmul.f32 %v4394, %v5066
        %v5083 = vmul.f32 %v4395, %v5067
        %v5084 = vmul.f32 %v4396, %v5068
        %v5085 = vpack.c.bf16 %v5077, %v5069
        %v5086 = vpack.c.bf16 %v5078, %v5070
        %v5087 = vpack.c.bf16 %v5079, %v5071
        %v5088 = vpack.c.bf16 %v5080, %v5072
        %v5089 = vpack.c.bf16 %v5081, %v5073
        %v5090 = vpack.c.bf16 %v5082, %v5074
        %v5091 = vpack.c.bf16 %v5083, %v5075
        %v5092 = vpack.c.bf16 %v5084, %v5076
        %v5094 = vperm.slane %v937, 0
        %v5095 = vperm.slane %v937, 1
        %v5226 = vunpack.c.l.b16 %v3295
        %v5227 = vunpack.c.h.b16 %v3295
        %v5228 = vunpack.c.l.b16 %v3296
        %v5229 = vunpack.c.h.b16 %v3296
        %v5230 = vunpack.c.l.b16 %v3297
        %v5231 = vunpack.c.h.b16 %v3297
        %v5232 = vunpack.c.l.b16 %v3298
        %v5233 = vunpack.c.h.b16 %v3298
        %v5234 = vunpack.c.l.b16 %v3299
        %v5235 = vunpack.c.h.b16 %v3299
        %v5236 = vunpack.c.l.b16 %v3300
        %v5237 = vunpack.c.h.b16 %v3300
        %v5238 = vunpack.c.l.b16 %v3301
        %v5239 = vunpack.c.h.b16 %v3301
        %v5240 = vunpack.c.l.b16 %v3302
        %v5241 = vunpack.c.h.b16 %v3302
        %v5242 = vunpack.c.l.b16 %v3303
        %v5243 = vunpack.c.h.b16 %v3303
        %v5244 = vunpack.c.l.b16 %v3304
        %v5245 = vunpack.c.h.b16 %v3304
        %v5246 = vunpack.c.l.b16 %v3305
        %v5247 = vunpack.c.h.b16 %v3305
        %v5248 = vunpack.c.l.b16 %v3306
        %v5249 = vunpack.c.h.b16 %v3306
        %v5250 = vunpack.c.l.b16 %v3307
        %v5251 = vunpack.c.h.b16 %v3307
        %v5252 = vunpack.c.l.b16 %v3308
        %v5253 = vunpack.c.h.b16 %v3308
        %v5254 = vunpack.c.l.b16 %v3309
        %v5255 = vunpack.c.h.b16 %v3309
        %v5256 = vunpack.c.l.b16 %v3310
        %v5257 = vunpack.c.h.b16 %v3310
        %v5258 = vunpack.c.l.b16 %v3311
        %v5259 = vunpack.c.h.b16 %v3311
        %v5260 = vunpack.c.l.b16 %v3312
        %v5261 = vunpack.c.h.b16 %v3312
        %v5262 = vunpack.c.l.b16 %v3313
        %v5263 = vunpack.c.h.b16 %v3313
        %v5264 = vunpack.c.l.b16 %v3314
        %v5265 = vunpack.c.h.b16 %v3314
        %v5266 = vunpack.c.l.b16 %v3315
        %v5267 = vunpack.c.h.b16 %v3315
        %v5268 = vunpack.c.l.b16 %v3316
        %v5269 = vunpack.c.h.b16 %v3316
        %v5270 = vunpack.c.l.b16 %v3317
        %v5271 = vunpack.c.h.b16 %v3317
        %v5272 = vunpack.c.l.b16 %v3318
        %v5273 = vunpack.c.h.b16 %v3318
        %v5274 = vunpack.c.l.b16 %v3319
        %v5275 = vunpack.c.h.b16 %v3319
        %v5276 = vunpack.c.l.b16 %v3320
        %v5277 = vunpack.c.h.b16 %v3320
        %v5278 = vunpack.c.l.b16 %v3321
        %v5279 = vunpack.c.h.b16 %v3321
        %v5280 = vunpack.c.l.b16 %v3322
        %v5281 = vunpack.c.h.b16 %v3322
        %v5282 = vunpack.c.l.b16 %v3323
        %v5283 = vunpack.c.h.b16 %v3323
        %v5284 = vunpack.c.l.b16 %v3324
        %v5285 = vunpack.c.h.b16 %v3324
        %v5286 = vunpack.c.l.b16 %v3325
        %v5287 = vunpack.c.h.b16 %v3325
        %v5288 = vunpack.c.l.b16 %v3326
        %v5289 = vunpack.c.h.b16 %v3326
        %v5290 = vunpack.c.l.b16 %v3327
        %v5291 = vunpack.c.h.b16 %v3327
        %v5292 = vunpack.c.l.b16 %v3328
        %v5293 = vunpack.c.h.b16 %v3328
        %v5294 = vunpack.c.l.b16 %v3329
        %v5295 = vunpack.c.h.b16 %v3329
        %v5296 = vunpack.c.l.b16 %v3330
        %v5297 = vunpack.c.h.b16 %v3330
        %v5298 = vunpack.c.l.b16 %v3331
        %v5299 = vunpack.c.h.b16 %v3331
        %v5300 = vunpack.c.l.b16 %v3332
        %v5301 = vunpack.c.h.b16 %v3332
        %v5302 = vunpack.c.l.b16 %v3333
        %v5303 = vunpack.c.h.b16 %v3333
        %v5304 = vunpack.c.l.b16 %v3334
        %v5305 = vunpack.c.h.b16 %v3334
        %v5306 = vunpack.c.l.b16 %v3335
        %v5307 = vunpack.c.h.b16 %v3335
        %v5308 = vunpack.c.l.b16 %v3336
        %v5309 = vunpack.c.h.b16 %v3336
        %v5310 = vunpack.c.l.b16 %v3337
        %v5311 = vunpack.c.h.b16 %v3337
        %v5312 = vunpack.c.l.b16 %v3338
        %v5313 = vunpack.c.h.b16 %v3338
        %v5314 = vunpack.c.l.b16 %v3339
        %v5315 = vunpack.c.h.b16 %v3339
        %v5316 = vunpack.c.l.b16 %v3340
        %v5317 = vunpack.c.h.b16 %v3340
        %v5318 = vunpack.c.l.b16 %v3341
        %v5319 = vunpack.c.h.b16 %v3341
        %v5320 = vunpack.c.l.b16 %v3342
        %v5321 = vunpack.c.h.b16 %v3342
        %v5322 = vunpack.c.l.b16 %v3343
        %v5323 = vunpack.c.h.b16 %v3343
        %v5324 = vunpack.c.l.b16 %v3344
        %v5325 = vunpack.c.h.b16 %v3344
        %v5326 = vunpack.c.l.b16 %v3345
        %v5327 = vunpack.c.h.b16 %v3345
        %v5328 = vunpack.c.l.b16 %v3346
        %v5329 = vunpack.c.h.b16 %v3346
        %v5330 = vunpack.c.l.b16 %v3347
        %v5331 = vunpack.c.h.b16 %v3347
        %v5332 = vunpack.c.l.b16 %v3348
        %v5333 = vunpack.c.h.b16 %v3348
        %v5334 = vunpack.c.l.b16 %v3349
        %v5335 = vunpack.c.h.b16 %v3349
        %v5336 = vunpack.c.l.b16 %v3350
        %v5337 = vunpack.c.h.b16 %v3350
        %v5338 = vunpack.c.l.b16 %v3351
        %v5339 = vunpack.c.h.b16 %v3351
        %v5340 = vunpack.c.l.b16 %v3352
        %v5341 = vunpack.c.h.b16 %v3352
        %v5342 = vunpack.c.l.b16 %v3353
        %v5343 = vunpack.c.h.b16 %v3353
        %v5344 = vunpack.c.l.b16 %v3354
        %v5345 = vunpack.c.h.b16 %v3354
        %v5346 = vunpack.c.l.b16 %v3355
        %v5347 = vunpack.c.h.b16 %v3355
        %v5348 = vunpack.c.l.b16 %v3356
        %v5349 = vunpack.c.h.b16 %v3356
        %v5350 = vunpack.c.l.b16 %v3357
        %v5351 = vunpack.c.h.b16 %v3357
        %v5352 = vunpack.c.l.b16 %v3358
        %v5353 = vunpack.c.h.b16 %v3358
        %v5354 = vunpack.c.l.b16 %v3359
        %v5355 = vunpack.c.h.b16 %v3359
        %v5356 = vunpack.c.l.b16 %v3360
        %v5357 = vunpack.c.h.b16 %v3360
        %v5358 = vunpack.c.l.b16 %v3361
        %v5359 = vunpack.c.h.b16 %v3361
        %v5360 = vunpack.c.l.b16 %v3362
        %v5361 = vunpack.c.h.b16 %v3362
        %v5362 = vunpack.c.l.b16 %v3363
        %v5363 = vunpack.c.h.b16 %v3363
        %v5364 = vunpack.c.l.b16 %v3364
        %v5365 = vunpack.c.h.b16 %v3364
        %v5366 = vunpack.c.l.b16 %v3365
        %v5367 = vunpack.c.h.b16 %v3365
        %v5368 = vunpack.c.l.b16 %v3366
        %v5369 = vunpack.c.h.b16 %v3366
        %v5370 = vunpack.c.l.b16 %v3367
        %v5371 = vunpack.c.h.b16 %v3367
        %v5372 = vunpack.c.l.b16 %v3368
        %v5373 = vunpack.c.h.b16 %v3368
        %v5374 = vunpack.c.l.b16 %v3369
        %v5375 = vunpack.c.h.b16 %v3369
        %v5376 = vunpack.c.l.b16 %v3370
        %v5377 = vunpack.c.h.b16 %v3370
        %v5378 = vunpack.c.l.b16 %v3371
        %v5379 = vunpack.c.h.b16 %v3371
        %v5380 = vunpack.c.l.b16 %v3372
        %v5381 = vunpack.c.h.b16 %v3372
        %v5382 = vunpack.c.l.b16 %v3373
        %v5383 = vunpack.c.h.b16 %v3373
        %v5384 = vunpack.c.l.b16 %v3374
        %v5385 = vunpack.c.h.b16 %v3374
        %v5386 = vunpack.c.l.b16 %v3375
        %v5387 = vunpack.c.h.b16 %v3375
        %v5388 = vunpack.c.l.b16 %v3376
        %v5389 = vunpack.c.h.b16 %v3376
        %v5390 = vunpack.c.l.b16 %v3377
        %v5391 = vunpack.c.h.b16 %v3377
        %v5392 = vunpack.c.l.b16 %v3378
        %v5393 = vunpack.c.h.b16 %v3378
        %v5394 = vunpack.c.l.b16 %v3379
        %v5395 = vunpack.c.h.b16 %v3379
        %v5396 = vunpack.c.l.b16 %v3380
        %v5397 = vunpack.c.h.b16 %v3380
        %v5398 = vunpack.c.l.b16 %v3381
        %v5399 = vunpack.c.h.b16 %v3381
        %v5400 = vunpack.c.l.b16 %v3382
        %v5401 = vunpack.c.h.b16 %v3382
        %v5402 = vunpack.c.l.b16 %v3383
        %v5403 = vunpack.c.h.b16 %v3383
        %v5404 = vunpack.c.l.b16 %v3384
        %v5405 = vunpack.c.h.b16 %v3384
        %v5406 = vunpack.c.l.b16 %v3385
        %v5407 = vunpack.c.h.b16 %v3385
        %v5408 = vunpack.c.l.b16 %v3386
        %v5409 = vunpack.c.h.b16 %v3386
        %v5410 = vunpack.c.l.b16 %v3387
        %v5411 = vunpack.c.h.b16 %v3387
        %v5412 = vunpack.c.l.b16 %v3388
        %v5413 = vunpack.c.h.b16 %v3388
        %v5414 = vunpack.c.l.b16 %v3389
        %v5415 = vunpack.c.h.b16 %v3389
        %v5416 = vunpack.c.l.b16 %v3390
        %v5417 = vunpack.c.h.b16 %v3390
        %v5418 = vunpack.c.l.b16 %v3391
        %v5419 = vunpack.c.h.b16 %v3391
        %v5420 = vunpack.c.l.b16 %v3392
        %v5421 = vunpack.c.h.b16 %v3392
        %v5422 = vunpack.c.l.b16 %v3393
        %v5423 = vunpack.c.h.b16 %v3393
        %v5424 = vunpack.c.l.b16 %v3394
        %v5425 = vunpack.c.h.b16 %v3394
        %v5426 = vunpack.c.l.b16 %v3395
        %v5427 = vunpack.c.h.b16 %v3395
        %v5428 = vunpack.c.l.b16 %v3396
        %v5429 = vunpack.c.h.b16 %v3396
        %v5430 = vunpack.c.l.b16 %v3397
        %v5431 = vunpack.c.h.b16 %v3397
        %v5432 = vunpack.c.l.b16 %v3398
        %v5433 = vunpack.c.h.b16 %v3398
        %v5434 = vunpack.c.l.b16 %v3399
        %v5435 = vunpack.c.h.b16 %v3399
        %v5436 = vunpack.c.l.b16 %v3400
        %v5437 = vunpack.c.h.b16 %v3400
        %v5438 = vunpack.c.l.b16 %v3401
        %v5439 = vunpack.c.h.b16 %v3401
        %v5440 = vunpack.c.l.b16 %v3402
        %v5441 = vunpack.c.h.b16 %v3402
        %v5442 = vunpack.c.l.b16 %v3403
        %v5443 = vunpack.c.h.b16 %v3403
        %v5444 = vunpack.c.l.b16 %v3404
        %v5445 = vunpack.c.h.b16 %v3404
        %v5446 = vunpack.c.l.b16 %v3405
        %v5447 = vunpack.c.h.b16 %v3405
        %v5448 = vunpack.c.l.b16 %v3406
        %v5449 = vunpack.c.h.b16 %v3406
        %v5450 = vunpack.c.l.b16 %v3407
        %v5451 = vunpack.c.h.b16 %v3407
        %v5452 = vunpack.c.l.b16 %v3408
        %v5453 = vunpack.c.h.b16 %v3408
        %v5454 = vunpack.c.l.b16 %v3409
        %v5455 = vunpack.c.h.b16 %v3409
        %v5456 = vunpack.c.l.b16 %v3410
        %v5457 = vunpack.c.h.b16 %v3410
        %v5458 = vunpack.c.l.b16 %v3411
        %v5459 = vunpack.c.h.b16 %v3411
        %v5460 = vunpack.c.l.b16 %v3412
        %v5461 = vunpack.c.h.b16 %v3412
        %v5462 = vunpack.c.l.b16 %v3413
        %v5463 = vunpack.c.h.b16 %v3413
        %v5464 = vunpack.c.l.b16 %v3414
        %v5465 = vunpack.c.h.b16 %v3414
        %v5466 = vunpack.c.l.b16 %v3415
        %v5467 = vunpack.c.h.b16 %v3415
        %v5468 = vunpack.c.l.b16 %v3416
        %v5469 = vunpack.c.h.b16 %v3416
        %v5470 = vunpack.c.l.b16 %v3417
        %v5471 = vunpack.c.h.b16 %v3417
        %v5472 = vunpack.c.l.b16 %v3418
        %v5473 = vunpack.c.h.b16 %v3418
        %v5474 = vunpack.c.l.b16 %v3419
        %v5475 = vunpack.c.h.b16 %v3419
        %v5476 = vunpack.c.l.b16 %v3420
        %v5477 = vunpack.c.h.b16 %v3420
        %v5478 = vunpack.c.l.b16 %v3421
        %v5479 = vunpack.c.h.b16 %v3421
        %v5480 = vunpack.c.l.b16 %v3422
        %v5481 = vunpack.c.h.b16 %v3422
        %v5482 = vpack.c.b16 %v5228, %v5226
        %v5483 = vpack.c.b16 %v5229, %v5227
        %v5484 = vpack.c.b16 %v5232, %v5230
        %v5485 = vpack.c.b16 %v5233, %v5231
        %v5486 = vpack.c.b16 %v5236, %v5234
        %v5487 = vpack.c.b16 %v5237, %v5235
        %v5488 = vpack.c.b16 %v5240, %v5238
        %v5489 = vpack.c.b16 %v5241, %v5239
        %v5490 = vpack.c.b16 %v5244, %v5242
        %v5491 = vpack.c.b16 %v5245, %v5243
        %v5492 = vpack.c.b16 %v5248, %v5246
        %v5493 = vpack.c.b16 %v5249, %v5247
        %v5494 = vpack.c.b16 %v5252, %v5250
        %v5495 = vpack.c.b16 %v5253, %v5251
        %v5496 = vpack.c.b16 %v5256, %v5254
        %v5497 = vpack.c.b16 %v5257, %v5255
        %v5498 = vpack.c.b16 %v5260, %v5258
        %v5499 = vpack.c.b16 %v5261, %v5259
        %v5500 = vpack.c.b16 %v5264, %v5262
        %v5501 = vpack.c.b16 %v5265, %v5263
        %v5502 = vpack.c.b16 %v5268, %v5266
        %v5503 = vpack.c.b16 %v5269, %v5267
        %v5504 = vpack.c.b16 %v5272, %v5270
        %v5505 = vpack.c.b16 %v5273, %v5271
        %v5506 = vpack.c.b16 %v5276, %v5274
        %v5507 = vpack.c.b16 %v5277, %v5275
        %v5508 = vpack.c.b16 %v5280, %v5278
        %v5509 = vpack.c.b16 %v5281, %v5279
        %v5510 = vpack.c.b16 %v5284, %v5282
        %v5511 = vpack.c.b16 %v5285, %v5283
        %v5512 = vpack.c.b16 %v5288, %v5286
        %v5513 = vpack.c.b16 %v5289, %v5287
        %v5514 = vpack.c.b16 %v5292, %v5290
        %v5515 = vpack.c.b16 %v5293, %v5291
        %v5516 = vpack.c.b16 %v5296, %v5294
        %v5517 = vpack.c.b16 %v5297, %v5295
        %v5518 = vpack.c.b16 %v5300, %v5298
        %v5519 = vpack.c.b16 %v5301, %v5299
        %v5520 = vpack.c.b16 %v5304, %v5302
        %v5521 = vpack.c.b16 %v5305, %v5303
        %v5522 = vpack.c.b16 %v5308, %v5306
        %v5523 = vpack.c.b16 %v5309, %v5307
        %v5524 = vpack.c.b16 %v5312, %v5310
        %v5525 = vpack.c.b16 %v5313, %v5311
        %v5526 = vpack.c.b16 %v5316, %v5314
        %v5527 = vpack.c.b16 %v5317, %v5315
        %v5528 = vpack.c.b16 %v5320, %v5318
        %v5529 = vpack.c.b16 %v5321, %v5319
        %v5530 = vpack.c.b16 %v5324, %v5322
        %v5531 = vpack.c.b16 %v5325, %v5323
        %v5532 = vpack.c.b16 %v5328, %v5326
        %v5533 = vpack.c.b16 %v5329, %v5327
        %v5534 = vpack.c.b16 %v5332, %v5330
        %v5535 = vpack.c.b16 %v5333, %v5331
        %v5536 = vpack.c.b16 %v5336, %v5334
        %v5537 = vpack.c.b16 %v5337, %v5335
        %v5538 = vpack.c.b16 %v5340, %v5338
        %v5539 = vpack.c.b16 %v5341, %v5339
        %v5540 = vpack.c.b16 %v5344, %v5342
        %v5541 = vpack.c.b16 %v5345, %v5343
        %v5542 = vpack.c.b16 %v5348, %v5346
        %v5543 = vpack.c.b16 %v5349, %v5347
        %v5544 = vpack.c.b16 %v5352, %v5350
        %v5545 = vpack.c.b16 %v5353, %v5351
        %v5546 = vpack.c.b16 %v5356, %v5354
        %v5547 = vpack.c.b16 %v5357, %v5355
        %v5548 = vpack.c.b16 %v5360, %v5358
        %v5549 = vpack.c.b16 %v5361, %v5359
        %v5550 = vpack.c.b16 %v5364, %v5362
        %v5551 = vpack.c.b16 %v5365, %v5363
        %v5552 = vpack.c.b16 %v5368, %v5366
        %v5553 = vpack.c.b16 %v5369, %v5367
        %v5554 = vpack.c.b16 %v5372, %v5370
        %v5555 = vpack.c.b16 %v5373, %v5371
        %v5556 = vpack.c.b16 %v5376, %v5374
        %v5557 = vpack.c.b16 %v5377, %v5375
        %v5558 = vpack.c.b16 %v5380, %v5378
        %v5559 = vpack.c.b16 %v5381, %v5379
        %v5560 = vpack.c.b16 %v5384, %v5382
        %v5561 = vpack.c.b16 %v5385, %v5383
        %v5562 = vpack.c.b16 %v5388, %v5386
        %v5563 = vpack.c.b16 %v5389, %v5387
        %v5564 = vpack.c.b16 %v5392, %v5390
        %v5565 = vpack.c.b16 %v5393, %v5391
        %v5566 = vpack.c.b16 %v5396, %v5394
        %v5567 = vpack.c.b16 %v5397, %v5395
        %v5568 = vpack.c.b16 %v5400, %v5398
        %v5569 = vpack.c.b16 %v5401, %v5399
        %v5570 = vpack.c.b16 %v5404, %v5402
        %v5571 = vpack.c.b16 %v5405, %v5403
        %v5572 = vpack.c.b16 %v5408, %v5406
        %v5573 = vpack.c.b16 %v5409, %v5407
        %v5574 = vpack.c.b16 %v5412, %v5410
        %v5575 = vpack.c.b16 %v5413, %v5411
        %v5576 = vpack.c.b16 %v5416, %v5414
        %v5577 = vpack.c.b16 %v5417, %v5415
        %v5578 = vpack.c.b16 %v5420, %v5418
        %v5579 = vpack.c.b16 %v5421, %v5419
        %v5580 = vpack.c.b16 %v5424, %v5422
        %v5581 = vpack.c.b16 %v5425, %v5423
        %v5582 = vpack.c.b16 %v5428, %v5426
        %v5583 = vpack.c.b16 %v5429, %v5427
        %v5584 = vpack.c.b16 %v5432, %v5430
        %v5585 = vpack.c.b16 %v5433, %v5431
        %v5586 = vpack.c.b16 %v5436, %v5434
        %v5587 = vpack.c.b16 %v5437, %v5435
        %v5588 = vpack.c.b16 %v5440, %v5438
        %v5589 = vpack.c.b16 %v5441, %v5439
        %v5590 = vpack.c.b16 %v5444, %v5442
        %v5591 = vpack.c.b16 %v5445, %v5443
        %v5592 = vpack.c.b16 %v5448, %v5446
        %v5593 = vpack.c.b16 %v5449, %v5447
        %v5594 = vpack.c.b16 %v5452, %v5450
        %v5595 = vpack.c.b16 %v5453, %v5451
        %v5596 = vpack.c.b16 %v5456, %v5454
        %v5597 = vpack.c.b16 %v5457, %v5455
        %v5598 = vpack.c.b16 %v5460, %v5458
        %v5599 = vpack.c.b16 %v5461, %v5459
        %v5600 = vpack.c.b16 %v5464, %v5462
        %v5601 = vpack.c.b16 %v5465, %v5463
        %v5602 = vpack.c.b16 %v5468, %v5466
        %v5603 = vpack.c.b16 %v5469, %v5467
        %v5604 = vpack.c.b16 %v5472, %v5470
        %v5605 = vpack.c.b16 %v5473, %v5471
        %v5606 = vpack.c.b16 %v5476, %v5474
        %v5607 = vpack.c.b16 %v5477, %v5475
        %v5608 = vpack.c.b16 %v5480, %v5478
        %v5609 = vpack.c.b16 %v5481, %v5479
        %5738 = vmatpush.bf16.msra.mxu0 %v5496
        %5739 = vmatpush.bf16.msra.mxu0 %v5494
        %5740 = vmatpush.bf16.msra.mxu0 %v5492
        %5741 = vmatpush.bf16.msra.mxu0 %v5490
        %5742 = vmatpush.bf16.msra.mxu0 %v5488
        %5743 = vmatpush.bf16.msra.mxu0 %v5486
        %5744 = vmatpush.bf16.msra.mxu0 %v5484
        %5745 = vmatpush.bf16.msra.mxu0 %v5482
        %5746 = vmatmul.bf16.gmra.mxu0 %v5085
        %v5747 = vpop.f32.mrf.mxu0
        %v5748 = vadd.f32 %v5094, %v5747
        %v5749 = vpop.f32.mrf.mxu0
        %v5750 = vadd.f32 %v5094, %v5749
        %5751 = vdwg.mxu0
        %5752 = vmatpush.bf16.msra.mxu0 %v5512
        %5753 = vmatpush.bf16.msra.mxu0 %v5510
        %5754 = vmatpush.bf16.msra.mxu0 %v5508
        %5755 = vmatpush.bf16.msra.mxu0 %v5506
        %5756 = vmatpush.bf16.msra.mxu0 %v5504
        %5757 = vmatpush.bf16.msra.mxu0 %v5502
        %5758 = vmatpush.bf16.msra.mxu0 %v5500
        %5759 = vmatpush.bf16.msra.mxu0 %v5498
        %5760 = vmatmul.bf16.gmra.mxu0 %v5086
        %v5761 = vpop.f32.mrf.mxu0
        %v5762 = vadd.f32 %v5748, %v5761
        %v5763 = vpop.f32.mrf.mxu0
        %v5764 = vadd.f32 %v5750, %v5763
        %5765 = vdwg.mxu0
        %5766 = vmatpush.bf16.msra.mxu0 %v5528
        %5767 = vmatpush.bf16.msra.mxu0 %v5526
        %5768 = vmatpush.bf16.msra.mxu0 %v5524
        %5769 = vmatpush.bf16.msra.mxu0 %v5522
        %5770 = vmatpush.bf16.msra.mxu0 %v5520
        %5771 = vmatpush.bf16.msra.mxu0 %v5518
        %5772 = vmatpush.bf16.msra.mxu0 %v5516
        %5773 = vmatpush.bf16.msra.mxu0 %v5514
        %5774 = vmatmul.bf16.gmra.mxu0 %v5087
        %v5775 = vpop.f32.mrf.mxu0
        %v5776 = vadd.f32 %v5762, %v5775
        %v5777 = vpop.f32.mrf.mxu0
        %v5778 = vadd.f32 %v5764, %v5777
        %5779 = vdwg.mxu0
        %5780 = vmatpush.bf16.msra.mxu0 %v5544
        %5781 = vmatpush.bf16.msra.mxu0 %v5542
        %5782 = vmatpush.bf16.msra.mxu0 %v5540
        %5783 = vmatpush.bf16.msra.mxu0 %v5538
        %5784 = vmatpush.bf16.msra.mxu0 %v5536
        %5785 = vmatpush.bf16.msra.mxu0 %v5534
        %5786 = vmatpush.bf16.msra.mxu0 %v5532
        %5787 = vmatpush.bf16.msra.mxu0 %v5530
        %5788 = vmatmul.bf16.gmra.mxu0 %v5088
        %v5789 = vpop.f32.mrf.mxu0
        %v5790 = vadd.f32 %v5776, %v5789
        %v5791 = vpop.f32.mrf.mxu0
        %v5792 = vadd.f32 %v5778, %v5791
        %5793 = vdwg.mxu0
        %5794 = vmatpush.bf16.msra.mxu0 %v5560
        %5795 = vmatpush.bf16.msra.mxu0 %v5558
        %5796 = vmatpush.bf16.msra.mxu0 %v5556
        %5797 = vmatpush.bf16.msra.mxu0 %v5554
        %5798 = vmatpush.bf16.msra.mxu0 %v5552
        %5799 = vmatpush.bf16.msra.mxu0 %v5550
        %5800 = vmatpush.bf16.msra.mxu0 %v5548
        %5801 = vmatpush.bf16.msra.mxu0 %v5546
        %5802 = vmatmul.bf16.gmra.mxu0 %v5089
        %v5803 = vpop.f32.mrf.mxu0
        %v5804 = vadd.f32 %v5790, %v5803
        %v5805 = vpop.f32.mrf.mxu0
        %v5806 = vadd.f32 %v5792, %v5805
        %5807 = vdwg.mxu0
        %5808 = vmatpush.bf16.msra.mxu0 %v5576
        %5809 = vmatpush.bf16.msra.mxu0 %v5574
        %5810 = vmatpush.bf16.msra.mxu0 %v5572
        %5811 = vmatpush.bf16.msra.mxu0 %v5570
        %5812 = vmatpush.bf16.msra.mxu0 %v5568
        %5813 = vmatpush.bf16.msra.mxu0 %v5566
        %5814 = vmatpush.bf16.msra.mxu0 %v5564
        %5815 = vmatpush.bf16.msra.mxu0 %v5562
        %5816 = vmatmul.bf16.gmra.mxu0 %v5090
        %v5817 = vpop.f32.mrf.mxu0
        %v5818 = vadd.f32 %v5804, %v5817
        %v5819 = vpop.f32.mrf.mxu0
        %v5820 = vadd.f32 %v5806, %v5819
        %5821 = vdwg.mxu0
        %5822 = vmatpush.bf16.msra.mxu0 %v5592
        %5823 = vmatpush.bf16.msra.mxu0 %v5590
        %5824 = vmatpush.bf16.msra.mxu0 %v5588
        %5825 = vmatpush.bf16.msra.mxu0 %v5586
        %5826 = vmatpush.bf16.msra.mxu0 %v5584
        %5827 = vmatpush.bf16.msra.mxu0 %v5582
        %5828 = vmatpush.bf16.msra.mxu0 %v5580
        %5829 = vmatpush.bf16.msra.mxu0 %v5578
        %5830 = vmatmul.bf16.gmra.mxu0 %v5091
        %v5831 = vpop.f32.mrf.mxu0
        %v5832 = vadd.f32 %v5818, %v5831
        %v5833 = vpop.f32.mrf.mxu0
        %v5834 = vadd.f32 %v5820, %v5833
        %5835 = vdwg.mxu0
        %5836 = vmatpush.bf16.msra.mxu0 %v5608
        %5837 = vmatpush.bf16.msra.mxu0 %v5606
        %5838 = vmatpush.bf16.msra.mxu0 %v5604
        %5839 = vmatpush.bf16.msra.mxu0 %v5602
        %5840 = vmatpush.bf16.msra.mxu0 %v5600
        %5841 = vmatpush.bf16.msra.mxu0 %v5598
        %5842 = vmatpush.bf16.msra.mxu0 %v5596
        %5843 = vmatpush.bf16.msra.mxu0 %v5594
        %5844 = vmatmul.bf16.gmra.mxu0 %v5092
        %v5845 = vpop.f32.mrf.mxu0
        %v5846 = vadd.f32 %v5832, %v5845
        %v5847 = vpop.f32.mrf.mxu0
        %v5848 = vadd.f32 %v5834, %v5847
        %5849 = vdwg.mxu0
        %5850 = vmatpush.bf16.msra.mxu0 %v5497
        %5851 = vmatpush.bf16.msra.mxu0 %v5495
        %5852 = vmatpush.bf16.msra.mxu0 %v5493
        %5853 = vmatpush.bf16.msra.mxu0 %v5491
        %5854 = vmatpush.bf16.msra.mxu0 %v5489
        %5855 = vmatpush.bf16.msra.mxu0 %v5487
        %5856 = vmatpush.bf16.msra.mxu0 %v5485
        %5857 = vmatpush.bf16.msra.mxu0 %v5483
        %5858 = vmatmul.bf16.gmra.mxu0 %v5085
        %v5859 = vpop.f32.mrf.mxu0
        %v5860 = vadd.f32 %v5095, %v5859
        %v5861 = vpop.f32.mrf.mxu0
        %v5862 = vadd.f32 %v5095, %v5861
        %5863 = vdwg.mxu0
        %5864 = vmatpush.bf16.msra.mxu0 %v5513
        %5865 = vmatpush.bf16.msra.mxu0 %v5511
        %5866 = vmatpush.bf16.msra.mxu0 %v5509
        %5867 = vmatpush.bf16.msra.mxu0 %v5507
        %5868 = vmatpush.bf16.msra.mxu0 %v5505
        %5869 = vmatpush.bf16.msra.mxu0 %v5503
        %5870 = vmatpush.bf16.msra.mxu0 %v5501
        %5871 = vmatpush.bf16.msra.mxu0 %v5499
        %5872 = vmatmul.bf16.gmra.mxu0 %v5086
        %v5873 = vpop.f32.mrf.mxu0
        %v5874 = vadd.f32 %v5860, %v5873
        %v5875 = vpop.f32.mrf.mxu0
        %v5876 = vadd.f32 %v5862, %v5875
        %5877 = vdwg.mxu0
        %5878 = vmatpush.bf16.msra.mxu0 %v5529
        %5879 = vmatpush.bf16.msra.mxu0 %v5527
        %5880 = vmatpush.bf16.msra.mxu0 %v5525
        %5881 = vmatpush.bf16.msra.mxu0 %v5523
        %5882 = vmatpush.bf16.msra.mxu0 %v5521
        %5883 = vmatpush.bf16.msra.mxu0 %v5519
        %5884 = vmatpush.bf16.msra.mxu0 %v5517
        %5885 = vmatpush.bf16.msra.mxu0 %v5515
        %5886 = vmatmul.bf16.gmra.mxu0 %v5087
        %v5887 = vpop.f32.mrf.mxu0
        %v5888 = vadd.f32 %v5874, %v5887
        %v5889 = vpop.f32.mrf.mxu0
        %v5890 = vadd.f32 %v5876, %v5889
        %5891 = vdwg.mxu0
        %5892 = vmatpush.bf16.msra.mxu0 %v5545
        %5893 = vmatpush.bf16.msra.mxu0 %v5543
        %5894 = vmatpush.bf16.msra.mxu0 %v5541
        %5895 = vmatpush.bf16.msra.mxu0 %v5539
        %5896 = vmatpush.bf16.msra.mxu0 %v5537
        %5897 = vmatpush.bf16.msra.mxu0 %v5535
        %5898 = vmatpush.bf16.msra.mxu0 %v5533
        %5899 = vmatpush.bf16.msra.mxu0 %v5531
        %5900 = vmatmul.bf16.gmra.mxu0 %v5088
        %v5901 = vpop.f32.mrf.mxu0
        %v5902 = vadd.f32 %v5888, %v5901
        %v5903 = vpop.f32.mrf.mxu0
        %v5904 = vadd.f32 %v5890, %v5903
        %5905 = vdwg.mxu0
        %5906 = vmatpush.bf16.msra.mxu0 %v5561
        %5907 = vmatpush.bf16.msra.mxu0 %v5559
        %5908 = vmatpush.bf16.msra.mxu0 %v5557
        %5909 = vmatpush.bf16.msra.mxu0 %v5555
        %5910 = vmatpush.bf16.msra.mxu0 %v5553
        %5911 = vmatpush.bf16.msra.mxu0 %v5551
        %5912 = vmatpush.bf16.msra.mxu0 %v5549
        %5913 = vmatpush.bf16.msra.mxu0 %v5547
        %5914 = vmatmul.bf16.gmra.mxu0 %v5089
        %v5915 = vpop.f32.mrf.mxu0
        %v5916 = vadd.f32 %v5902, %v5915
        %v5917 = vpop.f32.mrf.mxu0
        %v5918 = vadd.f32 %v5904, %v5917
        %5919 = vdwg.mxu0
        %5920 = vmatpush.bf16.msra.mxu0 %v5577
        %5921 = vmatpush.bf16.msra.mxu0 %v5575
        %5922 = vmatpush.bf16.msra.mxu0 %v5573
        %5923 = vmatpush.bf16.msra.mxu0 %v5571
        %5924 = vmatpush.bf16.msra.mxu0 %v5569
        %5925 = vmatpush.bf16.msra.mxu0 %v5567
        %5926 = vmatpush.bf16.msra.mxu0 %v5565
        %5927 = vmatpush.bf16.msra.mxu0 %v5563
        %5928 = vmatmul.bf16.gmra.mxu0 %v5090
        %v5929 = vpop.f32.mrf.mxu0
        %v5930 = vadd.f32 %v5916, %v5929
        %v5931 = vpop.f32.mrf.mxu0
        %v5932 = vadd.f32 %v5918, %v5931
        %5933 = vdwg.mxu0
        %5934 = vmatpush.bf16.msra.mxu0 %v5593
        %5935 = vmatpush.bf16.msra.mxu0 %v5591
        %5936 = vmatpush.bf16.msra.mxu0 %v5589
        %5937 = vmatpush.bf16.msra.mxu0 %v5587
        %5938 = vmatpush.bf16.msra.mxu0 %v5585
        %5939 = vmatpush.bf16.msra.mxu0 %v5583
        %5940 = vmatpush.bf16.msra.mxu0 %v5581
        %5941 = vmatpush.bf16.msra.mxu0 %v5579
        %5942 = vmatmul.bf16.gmra.mxu0 %v5091
        %v5943 = vpop.f32.mrf.mxu0
        %v5944 = vadd.f32 %v5930, %v5943
        %v5945 = vpop.f32.mrf.mxu0
        %v5946 = vadd.f32 %v5932, %v5945
        %5947 = vdwg.mxu0
        %5948 = vmatpush.bf16.msra.mxu0 %v5609
        %5949 = vmatpush.bf16.msra.mxu0 %v5607
        %5950 = vmatpush.bf16.msra.mxu0 %v5605
        %5951 = vmatpush.bf16.msra.mxu0 %v5603
        %5952 = vmatpush.bf16.msra.mxu0 %v5601
        %5953 = vmatpush.bf16.msra.mxu0 %v5599
        %5954 = vmatpush.bf16.msra.mxu0 %v5597
        %5955 = vmatpush.bf16.msra.mxu0 %v5595
        %5956 = vmatmul.bf16.gmra.mxu0 %v5092
        %v5957 = vpop.f32.mrf.mxu0
        %v5958 = vadd.f32 %v5944, %v5957
        %v5959 = vpop.f32.mrf.mxu0
        %v5960 = vadd.f32 %v5946, %v5959
        %5961 = vdwg.mxu0
        %v5962 = vadd.f32 %v3163, %v5846
        %v5963 = vadd.f32 %v3164, %v5958
        %v5964 = vadd.f32 %v3165, %v5848
        %v5965 = vadd.f32 %v3166, %v5960
        %5966 = vst [vmem:[#allocation2] sm:$0xff] %v5962
        %5967 = vst [vmem:[#allocation2 + $0x8] sm:$0xff] %v5963
        %5968 = vst [vmem:[#allocation2 + $0x10] sm:$0xff] %v5964
        %5969 = vst [vmem:[#allocation2 + $0x18] sm:$0xff] %v5965
        %p5970 = scmp.eq.s32.totalorder %s36, 1
        // Predicated region
        $region105: #{tpu_custom_call.1} parent=59 // pred_check
          %p5971 = pneg %p5970
        $region106: #{tpu_custom_call.1} parent=59 // pred_check_branch
          %5973 = sbr.rel (%p5971) target = $region108
        $region107: #{tpu_custom_call.1} parent=59 // pred_region
          %s5974 = scalar_lea.vmem [#allocation8], 16
          %v5975 = vld [vmem:[%s5974] ss:$8 sm:$0x3]
          %s5976 = scalar_lea.vmem [#allocation8], 17
          %v5977 = vld [vmem:[%s5976] ss:$8 sm:$0x3]
          %v5980 = vrot.slane %v5964, 7
          %v5981 = vrot.slane %v5965, 7
          %vm5984 = vcmask 1040384
          %v5985 = vsel %vm5984, %v5962, %v5980
          %v5986 = vsel %vm5984, %v5963, %v5981
          %vm5987 = vcmask 1041408
          %v5988 = vsel %vm5987, %v5985, 0.0
          %v5989 = vsel %vm5987, %v5986, 0.0
          %v5990 = vadd.f32 %v5988, %v5989
          %5991 = vadd.xlane.f32.xlu0 %v5990
          %v5992 = vpop.xlane.xlu0 %5991
          %v5993 = vmul.f32 %v5992, %v1050
          %v5994 = vmul.f32 %v5985, %v5985
          %v5995 = vmul.f32 %v5986, %v5986
          %v5996 = vsel %vm5987, %v5994, 0.0
          %v5997 = vsel %vm5987, %v5995, 0.0
          %v5998 = vadd.f32 %v5996, %v5997
          %5999 = vadd.xlane.f32.xlu0 %v5998
          %v6000 = vpop.xlane.xlu0 %5999
          %v6001 = vmul.f32 %v6000, %v1050
          %v6002 = vmul.f32 %v5993, %v5993
          %v6003 = vsub.f32 %v6001, %v6002
          %v6004 = vmax.f32 %v6003, 0.0
          %v6005 = vsub.f32 %v5985, %v5993
          %v6006 = vsub.f32 %v5986, %v5993
          %v6007 = vadd.f32 %v6004, 1e-12
          %v6008 = vrsqrt.pop %v6007
          %v6009 = vmul.f32 %v6008, %v6007
          %v6010 = vmul.f32 %v6009, %v6008
          %v6011 = vmul.f32 0.5, %v6010
          %v6012 = vsub.f32 1.5, %v6011
          %v6013 = vmul.f32 %v6008, %v6012
          %vm6014 = vweird.f32 %v6007
          %vm6015 = vweird.f32 %v6008
          %vm6016 = vmor %vm6014, %vm6015
          %v6017 = vsel %vm6016, %v6008, %v6013
          %v6018 = vmul.f32 %v6005, %v6017
          %v6019 = vmul.f32 %v6006, %v6017
          %v6021 = vperm.slane %v5975, 0
          %v6022 = vperm.slane %v5975, 1
          %v6025 = vmul.f32 %v6018, %v6021
          %v6026 = vmul.f32 %v6019, %v6022
          %v6028 = vperm.slane %v5977, 0
          %v6029 = vperm.slane %v5977, 1
          %v6032 = vadd.f32 %v6025, %v6028
          %v6033 = vadd.f32 %v6026, %v6029
          %v6036 = vrot.slane %v6033, 6
          %v6037 = vsel %vm5987, %v6032, %v6036
          %6039 = vst [vmem:[#allocation20] sm:$0xf] %v6037
        $region108: #{tpu_custom_call.1} parent=59 // pred_fallthru
          _
        // Predicated region
        $region109: #{tpu_custom_call.1} parent=59 // pred_check
          %p6040 = pneg %p294
        $region110: #{tpu_custom_call.1} parent=59 // pred_check_branch
          %6042 = sbr.rel (%p6040) target = $region112
        $region111: #{tpu_custom_call.1} parent=59 // pred_region
          %6044 = vsyncadd [#allocation5], 0
          %s6046 = sshll.u32 [#allocation20], 4
          %s6047 = int_to_ptr.vmem [resolvable:$true] %s6046
          %s6048 = sshll.u32 %s10, 4
          %s6049 = int_to_ptr.hbm [resolvable:$true] %s6048
          %6051 = dma.vmem_to_hbm [thread:$0]  %s6047, 64, %s6049, [#allocation5]
        $region112: #{tpu_custom_call.1} parent=59 // pred_fallthru
          _
        // Predicated region
        $region113: #{tpu_custom_call.1} parent=59 // pred_check
          %p6052 = pneg %p294
        $region114: #{tpu_custom_call.1} parent=59 // pred_check_branch
          %6054 = sbr.rel (%p6052) target = $region116
        $region115: #{tpu_custom_call.1} parent=59 // pred_region
          %6056 = dma.done [#allocation5], 64
        $region116: #{tpu_custom_call.1} parent=59 // pred_fallthru
          _
      $region60: #{tpu_custom_call.1} parent=5 // pred_fallthru
        _
      %p6057 = scmp.le.s32.totalorder 2, %s31
      // Predicated region
      $region117: #{tpu_custom_call.1} parent=5 // pred_check
        %p6058 = pneg %p6057
      $region118: #{tpu_custom_call.1} parent=5 // pred_check_branch
        %6060 = sbr.rel (%p6058) target = $region120
      $region119: #{tpu_custom_call.1} parent=5 // pred_region
        %s6061 = ssub.s32 %s31, 2
      $region120: #{tpu_custom_call.1} parent=5 // pred_fallthru
        _
    $region6: #{tpu_custom_call.1} parent=1 // loop_footer
      %s35 = sadd.s32 1, %s31
    $region7: #{tpu_custom_call.1} parent=1 // loop_footer_branch
      %30 = sbr.rel target = $region3
    $region8: #{tpu_custom_call.1} parent=1 // loop_exit
      _
    %6062 = vsyncpa [#allocation4], 1
    %s6063 = scalar_lea.sflag [#allocation4], 1
    %6064 = vsyncpa %s6063, 1
    %6065 = vsyncpa [#allocation7], 1
    %6066 = vsyncpa [#allocation10], 1
    %s6067 = scalar_lea.sflag [#allocation10], 1
    %6068 = vsyncpa %s6067, 1
    %6069 = vsyncpa [#allocation13], 1
    %s6070 = scalar_lea.sflag [#allocation13], 1
    %6071 = vsyncpa %s6070, 1
    %6072 = vsyncpa [#allocation16], 1
    %s6073 = scalar_lea.sflag [#allocation16], 1
    %6074 = vsyncpa %s6073, 1
    %6075 = vsyncpa [#allocation19], 1
    %s6076 = scalar_lea.sflag [#allocation19], 1
    %6077 = vsyncpa %s6076, 1
    %6078 = vsyncpa [#allocation5], 1
    %s6079 = scalar_lea.sflag [#allocation5], 1
    %6080 = vsyncpa %s6079, 1

</llo_original>
